<compile_context>
chip_gen: v6e
topology: v6e:2x2x1
jax: 0.10.0
libtpu: 0.0.40
codegen_flags: <defaults>
</compile_context>

<pallas_src>
import math
import jax
import jax.numpy as jnp
from jax.experimental import pallas as pl
from jax.experimental.pallas import tpu as pltpu


# ------------------------------ fused kernel ----------------------------------
def _make_fused_kernel(num_layers, hidden_size, output_size):
    H = hidden_size
    L = num_layers
    O = output_size

    def kernel(*refs):
        # refs = [x, (w_ih_0, w_hh_0, b_0), ..., (w_ih_{L-1}, w_hh_{L-1}, b_{L-1}),
        #         fc_w_t, fc_b, out]
        x_ref = refs[0]
        layer_refs = refs[1:1 + 3 * L]
        fcw_ref, fcb_ref, out_ref = refs[1 + 3 * L:]

        x_all = x_ref[...]                       # (B, T, D) — tiny, loaded once
        B, T, D = x_all.shape

        # Hoist all weight/bias loads out of the time loop.
        w_ihs = [layer_refs[3 * l + 0][...] for l in range(L)]     # (D_l, 4H)
        w_hhs = [layer_refs[3 * l + 1][...] for l in range(L)]     # (H, 4H)
        biases = [layer_refs[3 * l + 2][...] for l in range(L)]    # (1, 4H)

        # Layer-0 x-projection for ALL time steps in one MXU matmul, bias folded
        # in here once (off the serial recurrence chain).
        x_proj0 = (jnp.dot(x_all.reshape(B * T, D), w_ihs[0],
                           preferred_element_type=jnp.float32)
                   + biases[0]).reshape(B, T, 4 * H)

        def cell(gates, c_prev):
            # Single EUP pass over the full 4H width.  i/f/o columns of the
            # weights/bias were pre-scaled by 0.5 in the wrapper, so
            # sigmoid(z) == 0.5 * tanh(z/2) + 0.5 on those slices; the g gate
            # columns are unscaled and use tanh directly.
            t_act = jnp.tanh(gates)
            i_g = 0.5 * t_act[:, 0 * H:1 * H] + 0.5
            f_g = 0.5 * t_act[:, 1 * H:2 * H] + 0.5
            g_g = t_act[:, 2 * H:3 * H]
            o_g = 0.5 * t_act[:, 3 * H:4 * H] + 0.5
            c_new = f_g * c_prev + i_g * g_g
            h_new = o_g * jnp.tanh(c_new)
            return h_new, c_new

        zero = jnp.zeros((B, H), jnp.float32)
        hs = [zero] * L
        cs = [zero] * L

        # T is a small trace-time constant: unroll the recurrence statically so
        # every slice is static and the whole chain is visible to the scheduler.
        # (If T/H grow: switch to lax.fori_loop(unroll=2..4) and read weight
        #  refs at the use site to bound live ranges.)
        for t in range(T):
            # Layer 0: only the recurrent matmul is on the critical path.
            gates0 = x_proj0[:, t, :] + jnp.dot(
                hs[0], w_hhs[0], preferred_element_type=jnp.float32)
            hs[0], cs[0] = cell(gates0, cs[0])
            inp = hs[0]
            # Layers >= 1: two aligned dots (no lane concat), bias broadcast is
            # free on the VPU.
            for l in range(1, L):
                gates = (jnp.dot(inp, w_ihs[l], preferred_element_type=jnp.float32)
                         + jnp.dot(hs[l], w_hhs[l], preferred_element_type=jnp.float32)
                         + biases[l])
                hs[l], cs[l] = cell(gates, cs[l])
                inp = hs[l]

        # Fused epilogue: ReLU(last-layer hidden at t = T-1) -> FC.
        h_relu = jnp.maximum(hs[-1], 0.0)                  # (B, H)
        fcw = fcw_ref[...]                                 # (O, H) pre-transposed
        fcb = fcb_ref[...]                                 # (1, O)
        if O == 1:
            # N=1 matmul would be pure MXU push/pop latency; use VPU mul + XLU
            # lane reduction instead.
            out_ref[...] = jnp.sum(h_relu * fcw, axis=1, keepdims=True) + fcb
        else:
            out_ref[...] = jax.lax.dot_general(
                h_relu, fcw, (((1,), (1,)), ((), ())),
                preferred_element_type=jnp.float32) + fcb

    return kernel


# ------------------------------ full forward ----------------------------------
def bitcoin_predictor_forward(x_btd, params):
    """x_btd: (B, T, D) batch_first, exactly like the PyTorch module."""
    B, T, D = x_btd.shape
    lstm = params["lstm"]                        # [(w_ih, w_hh, bias), ...]
    L = len(lstm)
    H = lstm[0][1].shape[0]                      # w_hh: (H, 4H)
    O = params["fc_w"].shape[1]

    # Pre-scale ONLY the i/f/o gate column blocks (and bias entries) by 0.5 so
    # the kernel can recover sigmoid from a single tanh pass; the g block is
    # left untouched.  This is a one-time transform of tiny weight tensors.
    scale = jnp.concatenate([
        jnp.full((H,), 0.5, jnp.float32),        # i
        jnp.full((H,), 0.5, jnp.float32),        # f
        jnp.ones((H,), jnp.float32),             # g (unscaled!)
        jnp.full((H,), 0.5, jnp.float32),        # o
    ])

    operands = [x_btd]
    for (w_ih, w_hh, bias) in lstm:
        operands.append(w_ih * scale[None, :])   # (D_l, 4H)
        operands.append(w_hh * scale[None, :])   # (H, 4H)
        operands.append(bias * scale[None, :])   # (1, 4H)
    operands.append(params["fc_w"].T)            # (O, H)
    operands.append(params["fc_b"])              # (1, O)

    kernel = _make_fused_kernel(L, H, O)
    # Whole-array-in-VMEM is fine at these sizes (~tens of KiB).  If H is scaled
    # up, set pltpu.CompilerParams(vmem_limit_bytes=...) and tile the 4H gate
    # dimension; if B is scaled up on v7x, add a batch grid axis with
    # dimension_semantics=("parallel",) to use both TensorCores.
    vmem = pl.BlockSpec(memory_space=pltpu.MemorySpace.VMEM)
    return pl.pallas_call(
        kernel,
        out_shape=jax.ShapeDtypeStruct((B, O), jnp.float32),
        in_specs=[vmem] * len(operands),
        out_specs=vmem,
    )(*operands)


# ------------------------------ parameter init --------------------------------
def init_params(key, input_size, hidden_size, num_layers, output_size):
    """Deterministic init matching PyTorch shapes (uniform ±1/sqrt(H))."""
    k = 1.0 / math.sqrt(hidden_size)
    lstm_params = []
    for layer in range(num_layers):
        d_in = input_size if layer == 0 else hidden_size
        key, k1, k2, k3, k4 = jax.random.split(key, 5)
        # PyTorch: weight_ih (4H, d_in), weight_hh (4H, H). Stored transposed.
        w_ih = jax.random.uniform(k1, (d_in, 4 * hidden_size), jnp.float32, -k, k)
        w_hh = jax.random.uniform(k2, (hidden_size, 4 * hidden_size), jnp.float32, -k, k)
        b_ih = jax.random.uniform(k3, (4 * hidden_size,), jnp.float32, -k, k)
        b_hh = jax.random.uniform(k4, (4 * hidden_size,), jnp.float32, -k, k)
        bias = (b_ih + b_hh).reshape(1, 4 * hidden_size)
        lstm_params.append((w_ih, w_hh, bias))
    key, k5, k6 = jax.random.split(key, 3)
    kf = 1.0 / math.sqrt(hidden_size)
    fc_w = jax.random.uniform(k5, (hidden_size, output_size), jnp.float32, -kf, kf)
    fc_b = jax.random.uniform(k6, (1, output_size), jnp.float32, -kf, kf)
    return {"lstm": lstm_params, "fc_w": fc_w, "fc_b": fc_b}


# ------------------------------ pure-JAX reference -----------------------------
def _reference_forward(x_btd, params):
    B, T, _ = x_btd.shape
    H = params["lstm"][0][1].shape[0]
    h_seq = x_btd
    for (w_ih, w_hh, bias) in params["lstm"]:
        h = jnp.zeros((B, H), jnp.float32)
        c = jnp.zeros((B, H), jnp.float32)
        outs = []
        for t in range(T):
            gates = h_seq[:, t, :] @ w_ih + h @ w_hh + bias
            i_g = jax.nn.sigmoid(gates[:, 0 * H:1 * H])
            f_g = jax.nn.sigmoid(gates[:, 1 * H:2 * H])
            g_g = jnp.tanh(gates[:, 2 * H:3 * H])
            o_g = jax.nn.sigmoid(gates[:, 3 * H:4 * H])
            c = f_g * c + i_g * g_g
            h = o_g * jnp.tanh(c)
            outs.append(h)
        h_seq = jnp.stack(outs, axis=1)
    last = jnp.maximum(h_seq[:, -1, :], 0.0)
    return last @ params["fc_w"] + params["fc_b"]


if __name__ == "__main__":
    # Small shapes consistent with the module's forward:
    B, T = 2, 8
    input_size, hidden_size, num_layers, output_size = 4, 32, 2, 1

    key = jax.random.PRNGKey(0)
    key, xkey = jax.random.split(key)
    x = jax.random.normal(xkey, (B, T, input_size), jnp.float32)

    params = init_params(key, input_size, hidden_size, num_layers, output_size)

    out = bitcoin_predictor_forward(x, params)
    out = jax.block_until_ready(out)

    ref = _reference_forward(x, params)
    assert out.shape == (B, output_size)
    assert jnp.allclose(out, ref, atol=1e-4, rtol=1e-4), (out, ref)

    print("KERNEL_OK")
</pallas_src>

<mosaic_0001>
module attributes {stable_mosaic.version = 11 : i64} {
  func.func @kernel(%arg0: memref<2x8x4xf32, #tpu.memory_space<vmem>>, %arg1: memref<4x128xf32, #tpu.memory_space<vmem>>, %arg2: memref<32x128xf32, #tpu.memory_space<vmem>>, %arg3: memref<1x128xf32, #tpu.memory_space<vmem>>, %arg4: memref<32x128xf32, #tpu.memory_space<vmem>>, %arg5: memref<32x128xf32, #tpu.memory_space<vmem>>, %arg6: memref<1x128xf32, #tpu.memory_space<vmem>>, %arg7: memref<1x32xf32, #tpu.memory_space<vmem>>, %arg8: memref<1x1xf32, #tpu.memory_space<vmem>>, %arg9: memref<2x1xf32, #tpu.memory_space<vmem>>) attributes {dimension_semantics = [], scalar_prefetch = 0 : i64, scratch_operands = 0 : i64, tpu.core_type = #tpu.core_type<tc>} {
    %c0 = arith.constant 0 : index
    %c0_0 = arith.constant 0 : index
    %c0_1 = arith.constant 0 : index
    %0 = vector.load %arg0[%c0, %c0_0, %c0_1] : memref<2x8x4xf32, #tpu.memory_space<vmem>>, vector<2x8x4xf32>
    %c0_2 = arith.constant 0 : index
    %c0_3 = arith.constant 0 : index
    %1 = vector.load %arg1[%c0_2, %c0_3] : memref<4x128xf32, #tpu.memory_space<vmem>>, vector<4x128xf32>
    %c0_4 = arith.constant 0 : index
    %c0_5 = arith.constant 0 : index
    %2 = vector.load %arg4[%c0_4, %c0_5] : memref<32x128xf32, #tpu.memory_space<vmem>>, vector<32x128xf32>
    %c0_6 = arith.constant 0 : index
    %c0_7 = arith.constant 0 : index
    %3 = vector.load %arg2[%c0_6, %c0_7] : memref<32x128xf32, #tpu.memory_space<vmem>>, vector<32x128xf32>
    %c0_8 = arith.constant 0 : index
    %c0_9 = arith.constant 0 : index
    %4 = vector.load %arg5[%c0_8, %c0_9] : memref<32x128xf32, #tpu.memory_space<vmem>>, vector<32x128xf32>
    %c0_10 = arith.constant 0 : index
    %c0_11 = arith.constant 0 : index
    %5 = vector.load %arg3[%c0_10, %c0_11] : memref<1x128xf32, #tpu.memory_space<vmem>>, vector<1x128xf32>
    %c0_12 = arith.constant 0 : index
    %c0_13 = arith.constant 0 : index
    %6 = vector.load %arg6[%c0_12, %c0_13] : memref<1x128xf32, #tpu.memory_space<vmem>>, vector<1x128xf32>
    %7 = vector.shape_cast %0 : vector<2x8x4xf32> to vector<16x4xf32>
    %cst = arith.constant dense<0.000000e+00> : vector<16x128xf32>
    %8 = tpu.matmul %7, %1, %cst {dimension_numbers = #tpu.dot_dimension_numbers<[1], [0], [0], [1], [0, 0, 1, 1], [], []>} : vector<16x4xf32>, vector<4x128xf32>, vector<16x128xf32> -> vector<16x128xf32>
    %9 = vector.broadcast %5 : vector<1x128xf32> to vector<16x128xf32>
    %10 = arith.addf %8, %9 : vector<16x128xf32>
    %11 = vector.shape_cast %10 : vector<16x128xf32> to vector<2x8x128xf32>
    %cst_14 = arith.constant 0.000000e+00 : f32
    %12 = vector.broadcast %cst_14 : f32 to vector<2x32xf32>
    %13 = vector.extract_strided_slice %11 {offsets = [0, 0, 0], sizes = [2, 1, 128], strides = [1, 1, 1]} : vector<2x8x128xf32> to vector<2x1x128xf32>
    %14 = vector.shape_cast %13 : vector<2x1x128xf32> to vector<2x128xf32>
    %cst_15 = arith.constant dense<0.000000e+00> : vector<2x128xf32>
    %15 = tpu.matmul %12, %3, %cst_15 {dimension_numbers = #tpu.dot_dimension_numbers<[1], [0], [0], [1], [0, 0, 1, 1], [], []>} : vector<2x32xf32>, vector<32x128xf32>, vector<2x128xf32> -> vector<2x128xf32>
    %16 = arith.addf %14, %15 : vector<2x128xf32>
    %17 = math.tanh %16 : vector<2x128xf32>
    %18 = vector.extract_strided_slice %17 {offsets = [0, 0], sizes = [2, 32], strides = [1, 1]} : vector<2x128xf32> to vector<2x32xf32>
    %cst_16 = arith.constant 5.000000e-01 : f32
    %19 = vector.broadcast %cst_16 : f32 to vector<2x32xf32>
    %20 = arith.mulf %19, %18 : vector<2x32xf32>
    %cst_17 = arith.constant 5.000000e-01 : f32
    %21 = vector.broadcast %cst_17 : f32 to vector<2x32xf32>
    %22 = arith.addf %20, %21 : vector<2x32xf32>
    %23 = vector.extract_strided_slice %17 {offsets = [0, 32], sizes = [2, 32], strides = [1, 1]} : vector<2x128xf32> to vector<2x32xf32>
    %cst_18 = arith.constant 5.000000e-01 : f32
    %24 = vector.broadcast %cst_18 : f32 to vector<2x32xf32>
    %25 = arith.mulf %24, %23 : vector<2x32xf32>
    %cst_19 = arith.constant 5.000000e-01 : f32
    %26 = vector.broadcast %cst_19 : f32 to vector<2x32xf32>
    %27 = arith.addf %25, %26 : vector<2x32xf32>
    %28 = vector.extract_strided_slice %17 {offsets = [0, 64], sizes = [2, 32], strides = [1, 1]} : vector<2x128xf32> to vector<2x32xf32>
    %29 = vector.extract_strided_slice %17 {offsets = [0, 96], sizes = [2, 32], strides = [1, 1]} : vector<2x128xf32> to vector<2x32xf32>
    %cst_20 = arith.constant 5.000000e-01 : f32
    %30 = vector.broadcast %cst_20 : f32 to vector<2x32xf32>
    %31 = arith.mulf %30, %29 : vector<2x32xf32>
    %cst_21 = arith.constant 5.000000e-01 : f32
    %32 = vector.broadcast %cst_21 : f32 to vector<2x32xf32>
    %33 = arith.addf %31, %32 : vector<2x32xf32>
    %34 = arith.mulf %27, %12 : vector<2x32xf32>
    %35 = arith.mulf %22, %28 : vector<2x32xf32>
    %36 = arith.addf %34, %35 : vector<2x32xf32>
    %37 = math.tanh %36 : vector<2x32xf32>
    %38 = arith.mulf %33, %37 : vector<2x32xf32>
    %cst_22 = arith.constant dense<0.000000e+00> : vector<2x128xf32>
    %39 = tpu.matmul %38, %2, %cst_22 {dimension_numbers = #tpu.dot_dimension_numbers<[1], [0], [0], [1], [0, 0, 1, 1], [], []>} : vector<2x32xf32>, vector<32x128xf32>, vector<2x128xf32> -> vector<2x128xf32>
    %cst_23 = arith.constant dense<0.000000e+00> : vector<2x128xf32>
    %40 = tpu.matmul %12, %4, %cst_23 {dimension_numbers = #tpu.dot_dimension_numbers<[1], [0], [0], [1], [0, 0, 1, 1], [], []>} : vector<2x32xf32>, vector<32x128xf32>, vector<2x128xf32> -> vector<2x128xf32>
    %41 = arith.addf %39, %40 : vector<2x128xf32>
    %42 = vector.broadcast %6 : vector<1x128xf32> to vector<2x128xf32>
    %43 = arith.addf %41, %42 : vector<2x128xf32>
    %44 = math.tanh %43 : vector<2x128xf32>
    %45 = vector.extract_strided_slice %44 {offsets = [0, 0], sizes = [2, 32], strides = [1, 1]} : vector<2x128xf32> to vector<2x32xf32>
    %cst_24 = arith.constant 5.000000e-01 : f32
    %46 = vector.broadcast %cst_24 : f32 to vector<2x32xf32>
    %47 = arith.mulf %46, %45 : vector<2x32xf32>
    %cst_25 = arith.constant 5.000000e-01 : f32
    %48 = vector.broadcast %cst_25 : f32 to vector<2x32xf32>
    %49 = arith.addf %47, %48 : vector<2x32xf32>
    %50 = vector.extract_strided_slice %44 {offsets = [0, 32], sizes = [2, 32], strides = [1, 1]} : vector<2x128xf32> to vector<2x32xf32>
    %cst_26 = arith.constant 5.000000e-01 : f32
    %51 = vector.broadcast %cst_26 : f32 to vector<2x32xf32>
    %52 = arith.mulf %51, %50 : vector<2x32xf32>
    %cst_27 = arith.constant 5.000000e-01 : f32
    %53 = vector.broadcast %cst_27 : f32 to vector<2x32xf32>
    %54 = arith.addf %52, %53 : vector<2x32xf32>
    %55 = vector.extract_strided_slice %44 {offsets = [0, 64], sizes = [2, 32], strides = [1, 1]} : vector<2x128xf32> to vector<2x32xf32>
    %56 = vector.extract_strided_slice %44 {offsets = [0, 96], sizes = [2, 32], strides = [1, 1]} : vector<2x128xf32> to vector<2x32xf32>
    %cst_28 = arith.constant 5.000000e-01 : f32
    %57 = vector.broadcast %cst_28 : f32 to vector<2x32xf32>
    %58 = arith.mulf %57, %56 : vector<2x32xf32>
    %cst_29 = arith.constant 5.000000e-01 : f32
    %59 = vector.broadcast %cst_29 : f32 to vector<2x32xf32>
    %60 = arith.addf %58, %59 : vector<2x32xf32>
    %61 = arith.mulf %54, %12 : vector<2x32xf32>
    %62 = arith.mulf %49, %55 : vector<2x32xf32>
    %63 = arith.addf %61, %62 : vector<2x32xf32>
    %64 = math.tanh %63 : vector<2x32xf32>
    %65 = arith.mulf %60, %64 : vector<2x32xf32>
    %66 = vector.extract_strided_slice %11 {offsets = [0, 1, 0], sizes = [2, 1, 128], strides = [1, 1, 1]} : vector<2x8x128xf32> to vector<2x1x128xf32>
    %67 = vector.shape_cast %66 : vector<2x1x128xf32> to vector<2x128xf32>
    %cst_30 = arith.constant dense<0.000000e+00> : vector<2x128xf32>
    %68 = tpu.matmul %38, %3, %cst_30 {dimension_numbers = #tpu.dot_dimension_numbers<[1], [0], [0], [1], [0, 0, 1, 1], [], []>} : vector<2x32xf32>, vector<32x128xf32>, vector<2x128xf32> -> vector<2x128xf32>
    %69 = arith.addf %67, %68 : vector<2x128xf32>
    %70 = math.tanh %69 : vector<2x128xf32>
    %71 = vector.extract_strided_slice %70 {offsets = [0, 0], sizes = [2, 32], strides = [1, 1]} : vector<2x128xf32> to vector<2x32xf32>
    %cst_31 = arith.constant 5.000000e-01 : f32
    %72 = vector.broadcast %cst_31 : f32 to vector<2x32xf32>
    %73 = arith.mulf %72, %71 : vector<2x32xf32>
    %cst_32 = arith.constant 5.000000e-01 : f32
    %74 = vector.broadcast %cst_32 : f32 to vector<2x32xf32>
    %75 = arith.addf %73, %74 : vector<2x32xf32>
    %76 = vector.extract_strided_slice %70 {offsets = [0, 32], sizes = [2, 32], strides = [1, 1]} : vector<2x128xf32> to vector<2x32xf32>
    %cst_33 = arith.constant 5.000000e-01 : f32
    %77 = vector.broadcast %cst_33 : f32 to vector<2x32xf32>
    %78 = arith.mulf %77, %76 : vector<2x32xf32>
    %cst_34 = arith.constant 5.000000e-01 : f32
    %79 = vector.broadcast %cst_34 : f32 to vector<2x32xf32>
    %80 = arith.addf %78, %79 : vector<2x32xf32>
    %81 = vector.extract_strided_slice %70 {offsets = [0, 64], sizes = [2, 32], strides = [1, 1]} : vector<2x128xf32> to vector<2x32xf32>
    %82 = vector.extract_strided_slice %70 {offsets = [0, 96], sizes = [2, 32], strides = [1, 1]} : vector<2x128xf32> to vector<2x32xf32>
    %cst_35 = arith.constant 5.000000e-01 : f32
    %83 = vector.broadcast %cst_35 : f32 to vector<2x32xf32>
    %84 = arith.mulf %83, %82 : vector<2x32xf32>
    %cst_36 = arith.constant 5.000000e-01 : f32
    %85 = vector.broadcast %cst_36 : f32 to vector<2x32xf32>
    %86 = arith.addf %84, %85 : vector<2x32xf32>
    %87 = arith.mulf %80, %36 : vector<2x32xf32>
    %88 = arith.mulf %75, %81 : vector<2x32xf32>
    %89 = arith.addf %87, %88 : vector<2x32xf32>
    %90 = math.tanh %89 : vector<2x32xf32>
    %91 = arith.mulf %86, %90 : vector<2x32xf32>
    %cst_37 = arith.constant dense<0.000000e+00> : vector<2x128xf32>
    %92 = tpu.matmul %91, %2, %cst_37 {dimension_numbers = #tpu.dot_dimension_numbers<[1], [0], [0], [1], [0, 0, 1, 1], [], []>} : vector<2x32xf32>, vector<32x128xf32>, vector<2x128xf32> -> vector<2x128xf32>
    %cst_38 = arith.constant dense<0.000000e+00> : vector<2x128xf32>
    %93 = tpu.matmul %65, %4, %cst_38 {dimension_numbers = #tpu.dot_dimension_numbers<[1], [0], [0], [1], [0, 0, 1, 1], [], []>} : vector<2x32xf32>, vector<32x128xf32>, vector<2x128xf32> -> vector<2x128xf32>
    %94 = arith.addf %92, %93 : vector<2x128xf32>
    %95 = vector.broadcast %6 : vector<1x128xf32> to vector<2x128xf32>
    %96 = arith.addf %94, %95 : vector<2x128xf32>
    %97 = math.tanh %96 : vector<2x128xf32>
    %98 = vector.extract_strided_slice %97 {offsets = [0, 0], sizes = [2, 32], strides = [1, 1]} : vector<2x128xf32> to vector<2x32xf32>
    %cst_39 = arith.constant 5.000000e-01 : f32
    %99 = vector.broadcast %cst_39 : f32 to vector<2x32xf32>
    %100 = arith.mulf %99, %98 : vector<2x32xf32>
    %cst_40 = arith.constant 5.000000e-01 : f32
    %101 = vector.broadcast %cst_40 : f32 to vector<2x32xf32>
    %102 = arith.addf %100, %101 : vector<2x32xf32>
    %103 = vector.extract_strided_slice %97 {offsets = [0, 32], sizes = [2, 32], strides = [1, 1]} : vector<2x128xf32> to vector<2x32xf32>
    %cst_41 = arith.constant 5.000000e-01 : f32
    %104 = vector.broadcast %cst_41 : f32 to vector<2x32xf32>
    %105 = arith.mulf %104, %103 : vector<2x32xf32>
    %cst_42 = arith.constant 5.000000e-01 : f32
    %106 = vector.broadcast %cst_42 : f32 to vector<2x32xf32>
    %107 = arith.addf %105, %106 : vector<2x32xf32>
    %108 = vector.extract_strided_slice %97 {offsets = [0, 64], sizes = [2, 32], strides = [1, 1]} : vector<2x128xf32> to vector<2x32xf32>
    %109 = vector.extract_strided_slice %97 {offsets = [0, 96], sizes = [2, 32], strides = [1, 1]} : vector<2x128xf32> to vector<2x32xf32>
    %cst_43 = arith.constant 5.000000e-01 : f32
    %110 = vector.broadcast %cst_43 : f32 to vector<2x32xf32>
    %111 = arith.mulf %110, %109 : vector<2x32xf32>
    %cst_44 = arith.constant 5.000000e-01 : f32
    %112 = vector.broadcast %cst_44 : f32 to vector<2x32xf32>
    %113 = arith.addf %111, %112 : vector<2x32xf32>
    %114 = arith.mulf %107, %63 : vector<2x32xf32>
    %115 = arith.mulf %102, %108 : vector<2x32xf32>
    %116 = arith.addf %114, %115 : vector<2x32xf32>
    %117 = math.tanh %116 : vector<2x32xf32>
    %118 = arith.mulf %113, %117 : vector<2x32xf32>
    %119 = vector.extract_strided_slice %11 {offsets = [0, 2, 0], sizes = [2, 1, 128], strides = [1, 1, 1]} : vector<2x8x128xf32> to vector<2x1x128xf32>
    %120 = vector.shape_cast %119 : vector<2x1x128xf32> to vector<2x128xf32>
    %cst_45 = arith.constant dense<0.000000e+00> : vector<2x128xf32>
    %121 = tpu.matmul %91, %3, %cst_45 {dimension_numbers = #tpu.dot_dimension_numbers<[1], [0], [0], [1], [0, 0, 1, 1], [], []>} : vector<2x32xf32>, vector<32x128xf32>, vector<2x128xf32> -> vector<2x128xf32>
    %122 = arith.addf %120, %121 : vector<2x128xf32>
    %123 = math.tanh %122 : vector<2x128xf32>
    %124 = vector.extract_strided_slice %123 {offsets = [0, 0], sizes = [2, 32], strides = [1, 1]} : vector<2x128xf32> to vector<2x32xf32>
    %cst_46 = arith.constant 5.000000e-01 : f32
    %125 = vector.broadcast %cst_46 : f32 to vector<2x32xf32>
    %126 = arith.mulf %125, %124 : vector<2x32xf32>
    %cst_47 = arith.constant 5.000000e-01 : f32
    %127 = vector.broadcast %cst_47 : f32 to vector<2x32xf32>
    %128 = arith.addf %126, %127 : vector<2x32xf32>
    %129 = vector.extract_strided_slice %123 {offsets = [0, 32], sizes = [2, 32], strides = [1, 1]} : vector<2x128xf32> to vector<2x32xf32>
    %cst_48 = arith.constant 5.000000e-01 : f32
    %130 = vector.broadcast %cst_48 : f32 to vector<2x32xf32>
    %131 = arith.mulf %130, %129 : vector<2x32xf32>
    %cst_49 = arith.constant 5.000000e-01 : f32
    %132 = vector.broadcast %cst_49 : f32 to vector<2x32xf32>
    %133 = arith.addf %131, %132 : vector<2x32xf32>
    %134 = vector.extract_strided_slice %123 {offsets = [0, 64], sizes = [2, 32], strides = [1, 1]} : vector<2x128xf32> to vector<2x32xf32>
    %135 = vector.extract_strided_slice %123 {offsets = [0, 96], sizes = [2, 32], strides = [1, 1]} : vector<2x128xf32> to vector<2x32xf32>
    %cst_50 = arith.constant 5.000000e-01 : f32
    %136 = vector.broadcast %cst_50 : f32 to vector<2x32xf32>
    %137 = arith.mulf %136, %135 : vector<2x32xf32>
    %cst_51 = arith.constant 5.000000e-01 : f32
    %138 = vector.broadcast %cst_51 : f32 to vector<2x32xf32>
    %139 = arith.addf %137, %138 : vector<2x32xf32>
    %140 = arith.mulf %133, %89 : vector<2x32xf32>
    %141 = arith.mulf %128, %134 : vector<2x32xf32>
    %142 = arith.addf %140, %141 : vector<2x32xf32>
    %143 = math.tanh %142 : vector<2x32xf32>
    %144 = arith.mulf %139, %143 : vector<2x32xf32>
    %cst_52 = arith.constant dense<0.000000e+00> : vector<2x128xf32>
    %145 = tpu.matmul %144, %2, %cst_52 {dimension_numbers = #tpu.dot_dimension_numbers<[1], [0], [0], [1], [0, 0, 1, 1], [], []>} : vector<2x32xf32>, vector<32x128xf32>, vector<2x128xf32> -> vector<2x128xf32>
    %cst_53 = arith.constant dense<0.000000e+00> : vector<2x128xf32>
    %146 = tpu.matmul %118, %4, %cst_53 {dimension_numbers = #tpu.dot_dimension_numbers<[1], [0], [0], [1], [0, 0, 1, 1], [], []>} : vector<2x32xf32>, vector<32x128xf32>, vector<2x128xf32> -> vector<2x128xf32>
    %147 = arith.addf %145, %146 : vector<2x128xf32>
    %148 = vector.broadcast %6 : vector<1x128xf32> to vector<2x128xf32>
    %149 = arith.addf %147, %148 : vector<2x128xf32>
    %150 = math.tanh %149 : vector<2x128xf32>
    %151 = vector.extract_strided_slice %150 {offsets = [0, 0], sizes = [2, 32], strides = [1, 1]} : vector<2x128xf32> to vector<2x32xf32>
    %cst_54 = arith.constant 5.000000e-01 : f32
    %152 = vector.broadcast %cst_54 : f32 to vector<2x32xf32>
    %153 = arith.mulf %152, %151 : vector<2x32xf32>
    %cst_55 = arith.constant 5.000000e-01 : f32
    %154 = vector.broadcast %cst_55 : f32 to vector<2x32xf32>
    %155 = arith.addf %153, %154 : vector<2x32xf32>
    %156 = vector.extract_strided_slice %150 {offsets = [0, 32], sizes = [2, 32], strides = [1, 1]} : vector<2x128xf32> to vector<2x32xf32>
    %cst_56 = arith.constant 5.000000e-01 : f32
    %157 = vector.broadcast %cst_56 : f32 to vector<2x32xf32>
    %158 = arith.mulf %157, %156 : vector<2x32xf32>
    %cst_57 = arith.constant 5.000000e-01 : f32
    %159 = vector.broadcast %cst_57 : f32 to vector<2x32xf32>
    %160 = arith.addf %158, %159 : vector<2x32xf32>
    %161 = vector.extract_strided_slice %150 {offsets = [0, 64], sizes = [2, 32], strides = [1, 1]} : vector<2x128xf32> to vector<2x32xf32>
    %162 = vector.extract_strided_slice %150 {offsets = [0, 96], sizes = [2, 32], strides = [1, 1]} : vector<2x128xf32> to vector<2x32xf32>
    %cst_58 = arith.constant 5.000000e-01 : f32
    %163 = vector.broadcast %cst_58 : f32 to vector<2x32xf32>
    %164 = arith.mulf %163, %162 : vector<2x32xf32>
    %cst_59 = arith.constant 5.000000e-01 : f32
    %165 = vector.broadcast %cst_59 : f32 to vector<2x32xf32>
    %166 = arith.addf %164, %165 : vector<2x32xf32>
    %167 = arith.mulf %160, %116 : vector<2x32xf32>
    %168 = arith.mulf %155, %161 : vector<2x32xf32>
    %169 = arith.addf %167, %168 : vector<2x32xf32>
    %170 = math.tanh %169 : vector<2x32xf32>
    %171 = arith.mulf %166, %170 : vector<2x32xf32>
    %172 = vector.extract_strided_slice %11 {offsets = [0, 3, 0], sizes = [2, 1, 128], strides = [1, 1, 1]} : vector<2x8x128xf32> to vector<2x1x128xf32>
    %173 = vector.shape_cast %172 : vector<2x1x128xf32> to vector<2x128xf32>
    %cst_60 = arith.constant dense<0.000000e+00> : vector<2x128xf32>
    %174 = tpu.matmul %144, %3, %cst_60 {dimension_numbers = #tpu.dot_dimension_numbers<[1], [0], [0], [1], [0, 0, 1, 1], [], []>} : vector<2x32xf32>, vector<32x128xf32>, vector<2x128xf32> -> vector<2x128xf32>
    %175 = arith.addf %173, %174 : vector<2x128xf32>
    %176 = math.tanh %175 : vector<2x128xf32>
    %177 = vector.extract_strided_slice %176 {offsets = [0, 0], sizes = [2, 32], strides = [1, 1]} : vector<2x128xf32> to vector<2x32xf32>
    %cst_61 = arith.constant 5.000000e-01 : f32
    %178 = vector.broadcast %cst_61 : f32 to vector<2x32xf32>
    %179 = arith.mulf %178, %177 : vector<2x32xf32>
    %cst_62 = arith.constant 5.000000e-01 : f32
    %180 = vector.broadcast %cst_62 : f32 to vector<2x32xf32>
    %181 = arith.addf %179, %180 : vector<2x32xf32>
    %182 = vector.extract_strided_slice %176 {offsets = [0, 32], sizes = [2, 32], strides = [1, 1]} : vector<2x128xf32> to vector<2x32xf32>
    %cst_63 = arith.constant 5.000000e-01 : f32
    %183 = vector.broadcast %cst_63 : f32 to vector<2x32xf32>
    %184 = arith.mulf %183, %182 : vector<2x32xf32>
    %cst_64 = arith.constant 5.000000e-01 : f32
    %185 = vector.broadcast %cst_64 : f32 to vector<2x32xf32>
    %186 = arith.addf %184, %185 : vector<2x32xf32>
    %187 = vector.extract_strided_slice %176 {offsets = [0, 64], sizes = [2, 32], strides = [1, 1]} : vector<2x128xf32> to vector<2x32xf32>
    %188 = vector.extract_strided_slice %176 {offsets = [0, 96], sizes = [2, 32], strides = [1, 1]} : vector<2x128xf32> to vector<2x32xf32>
    %cst_65 = arith.constant 5.000000e-01 : f32
    %189 = vector.broadcast %cst_65 : f32 to vector<2x32xf32>
    %190 = arith.mulf %189, %188 : vector<2x32xf32>
    %cst_66 = arith.constant 5.000000e-01 : f32
    %191 = vector.broadcast %cst_66 : f32 to vector<2x32xf32>
    %192 = arith.addf %190, %191 : vector<2x32xf32>
    %193 = arith.mulf %186, %142 : vector<2x32xf32>
    %194 = arith.mulf %181, %187 : vector<2x32xf32>
    %195 = arith.addf %193, %194 : vector<2x32xf32>
    %196 = math.tanh %195 : vector<2x32xf32>
    %197 = arith.mulf %192, %196 : vector<2x32xf32>
    %cst_67 = arith.constant dense<0.000000e+00> : vector<2x128xf32>
    %198 = tpu.matmul %197, %2, %cst_67 {dimension_numbers = #tpu.dot_dimension_numbers<[1], [0], [0], [1], [0, 0, 1, 1], [], []>} : vector<2x32xf32>, vector<32x128xf32>, vector<2x128xf32> -> vector<2x128xf32>
    %cst_68 = arith.constant dense<0.000000e+00> : vector<2x128xf32>
    %199 = tpu.matmul %171, %4, %cst_68 {dimension_numbers = #tpu.dot_dimension_numbers<[1], [0], [0], [1], [0, 0, 1, 1], [], []>} : vector<2x32xf32>, vector<32x128xf32>, vector<2x128xf32> -> vector<2x128xf32>
    %200 = arith.addf %198, %199 : vector<2x128xf32>
    %201 = vector.broadcast %6 : vector<1x128xf32> to vector<2x128xf32>
    %202 = arith.addf %200, %201 : vector<2x128xf32>
    %203 = math.tanh %202 : vector<2x128xf32>
    %204 = vector.extract_strided_slice %203 {offsets = [0, 0], sizes = [2, 32], strides = [1, 1]} : vector<2x128xf32> to vector<2x32xf32>
    %cst_69 = arith.constant 5.000000e-01 : f32
    %205 = vector.broadcast %cst_69 : f32 to vector<2x32xf32>
    %206 = arith.mulf %205, %204 : vector<2x32xf32>
    %cst_70 = arith.constant 5.000000e-01 : f32
    %207 = vector.broadcast %cst_70 : f32 to vector<2x32xf32>
    %208 = arith.addf %206, %207 : vector<2x32xf32>
    %209 = vector.extract_strided_slice %203 {offsets = [0, 32], sizes = [2, 32], strides = [1, 1]} : vector<2x128xf32> to vector<2x32xf32>
    %cst_71 = arith.constant 5.000000e-01 : f32
    %210 = vector.broadcast %cst_71 : f32 to vector<2x32xf32>
    %211 = arith.mulf %210, %209 : vector<2x32xf32>
    %cst_72 = arith.constant 5.000000e-01 : f32
    %212 = vector.broadcast %cst_72 : f32 to vector<2x32xf32>
    %213 = arith.addf %211, %212 : vector<2x32xf32>
    %214 = vector.extract_strided_slice %203 {offsets = [0, 64], sizes = [2, 32], strides = [1, 1]} : vector<2x128xf32> to vector<2x32xf32>
    %215 = vector.extract_strided_slice %203 {offsets = [0, 96], sizes = [2, 32], strides = [1, 1]} : vector<2x128xf32> to vector<2x32xf32>
    %cst_73 = arith.constant 5.000000e-01 : f32
    %216 = vector.broadcast %cst_73 : f32 to vector<2x32xf32>
    %217 = arith.mulf %216, %215 : vector<2x32xf32>
    %cst_74 = arith.constant 5.000000e-01 : f32
    %218 = vector.broadcast %cst_74 : f32 to vector<2x32xf32>
    %219 = arith.addf %217, %218 : vector<2x32xf32>
    %220 = arith.mulf %213, %169 : vector<2x32xf32>
    %221 = arith.mulf %208, %214 : vector<2x32xf32>
    %222 = arith.addf %220, %221 : vector<2x32xf32>
    %223 = math.tanh %222 : vector<2x32xf32>
    %224 = arith.mulf %219, %223 : vector<2x32xf32>
    %225 = vector.extract_strided_slice %11 {offsets = [0, 4, 0], sizes = [2, 1, 128], strides = [1, 1, 1]} : vector<2x8x128xf32> to vector<2x1x128xf32>
    %226 = vector.shape_cast %225 : vector<2x1x128xf32> to vector<2x128xf32>
    %cst_75 = arith.constant dense<0.000000e+00> : vector<2x128xf32>
    %227 = tpu.matmul %197, %3, %cst_75 {dimension_numbers = #tpu.dot_dimension_numbers<[1], [0], [0], [1], [0, 0, 1, 1], [], []>} : vector<2x32xf32>, vector<32x128xf32>, vector<2x128xf32> -> vector<2x128xf32>
    %228 = arith.addf %226, %227 : vector<2x128xf32>
    %229 = math.tanh %228 : vector<2x128xf32>
    %230 = vector.extract_strided_slice %229 {offsets = [0, 0], sizes = [2, 32], strides = [1, 1]} : vector<2x128xf32> to vector<2x32xf32>
    %cst_76 = arith.constant 5.000000e-01 : f32
    %231 = vector.broadcast %cst_76 : f32 to vector<2x32xf32>
    %232 = arith.mulf %231, %230 : vector<2x32xf32>
    %cst_77 = arith.constant 5.000000e-01 : f32
    %233 = vector.broadcast %cst_77 : f32 to vector<2x32xf32>
    %234 = arith.addf %232, %233 : vector<2x32xf32>
    %235 = vector.extract_strided_slice %229 {offsets = [0, 32], sizes = [2, 32], strides = [1, 1]} : vector<2x128xf32> to vector<2x32xf32>
    %cst_78 = arith.constant 5.000000e-01 : f32
    %236 = vector.broadcast %cst_78 : f32 to vector<2x32xf32>
    %237 = arith.mulf %236, %235 : vector<2x32xf32>
    %cst_79 = arith.constant 5.000000e-01 : f32
    %238 = vector.broadcast %cst_79 : f32 to vector<2x32xf32>
    %239 = arith.addf %237, %238 : vector<2x32xf32>
    %240 = vector.extract_strided_slice %229 {offsets = [0, 64], sizes = [2, 32], strides = [1, 1]} : vector<2x128xf32> to vector<2x32xf32>
    %241 = vector.extract_strided_slice %229 {offsets = [0, 96], sizes = [2, 32], strides = [1, 1]} : vector<2x128xf32> to vector<2x32xf32>
    %cst_80 = arith.constant 5.000000e-01 : f32
    %242 = vector.broadcast %cst_80 : f32 to vector<2x32xf32>
    %243 = arith.mulf %242, %241 : vector<2x32xf32>
    %cst_81 = arith.constant 5.000000e-01 : f32
    %244 = vector.broadcast %cst_81 : f32 to vector<2x32xf32>
    %245 = arith.addf %243, %244 : vector<2x32xf32>
    %246 = arith.mulf %239, %195 : vector<2x32xf32>
    %247 = arith.mulf %234, %240 : vector<2x32xf32>
    %248 = arith.addf %246, %247 : vector<2x32xf32>
    %249 = math.tanh %248 : vector<2x32xf32>
    %250 = arith.mulf %245, %249 : vector<2x32xf32>
    %cst_82 = arith.constant dense<0.000000e+00> : vector<2x128xf32>
    %251 = tpu.matmul %250, %2, %cst_82 {dimension_numbers = #tpu.dot_dimension_numbers<[1], [0], [0], [1], [0, 0, 1, 1], [], []>} : vector<2x32xf32>, vector<32x128xf32>, vector<2x128xf32> -> vector<2x128xf32>
    %cst_83 = arith.constant dense<0.000000e+00> : vector<2x128xf32>
    %252 = tpu.matmul %224, %4, %cst_83 {dimension_numbers = #tpu.dot_dimension_numbers<[1], [0], [0], [1], [0, 0, 1, 1], [], []>} : vector<2x32xf32>, vector<32x128xf32>, vector<2x128xf32> -> vector<2x128xf32>
    %253 = arith.addf %251, %252 : vector<2x128xf32>
    %254 = vector.broadcast %6 : vector<1x128xf32> to vector<2x128xf32>
    %255 = arith.addf %253, %254 : vector<2x128xf32>
    %256 = math.tanh %255 : vector<2x128xf32>
    %257 = vector.extract_strided_slice %256 {offsets = [0, 0], sizes = [2, 32], strides = [1, 1]} : vector<2x128xf32> to vector<2x32xf32>
    %cst_84 = arith.constant 5.000000e-01 : f32
    %258 = vector.broadcast %cst_84 : f32 to vector<2x32xf32>
    %259 = arith.mulf %258, %257 : vector<2x32xf32>
    %cst_85 = arith.constant 5.000000e-01 : f32
    %260 = vector.broadcast %cst_85 : f32 to vector<2x32xf32>
    %261 = arith.addf %259, %260 : vector<2x32xf32>
    %262 = vector.extract_strided_slice %256 {offsets = [0, 32], sizes = [2, 32], strides = [1, 1]} : vector<2x128xf32> to vector<2x32xf32>
    %cst_86 = arith.constant 5.000000e-01 : f32
    %263 = vector.broadcast %cst_86 : f32 to vector<2x32xf32>
    %264 = arith.mulf %263, %262 : vector<2x32xf32>
    %cst_87 = arith.constant 5.000000e-01 : f32
    %265 = vector.broadcast %cst_87 : f32 to vector<2x32xf32>
    %266 = arith.addf %264, %265 : vector<2x32xf32>
    %267 = vector.extract_strided_slice %256 {offsets = [0, 64], sizes = [2, 32], strides = [1, 1]} : vector<2x128xf32> to vector<2x32xf32>
    %268 = vector.extract_strided_slice %256 {offsets = [0, 96], sizes = [2, 32], strides = [1, 1]} : vector<2x128xf32> to vector<2x32xf32>
    %cst_88 = arith.constant 5.000000e-01 : f32
    %269 = vector.broadcast %cst_88 : f32 to vector<2x32xf32>
    %270 = arith.mulf %269, %268 : vector<2x32xf32>
    %cst_89 = arith.constant 5.000000e-01 : f32
    %271 = vector.broadcast %cst_89 : f32 to vector<2x32xf32>
    %272 = arith.addf %270, %271 : vector<2x32xf32>
    %273 = arith.mulf %266, %222 : vector<2x32xf32>
    %274 = arith.mulf %261, %267 : vector<2x32xf32>
    %275 = arith.addf %273, %274 : vector<2x32xf32>
    %276 = math.tanh %275 : vector<2x32xf32>
    %277 = arith.mulf %272, %276 : vector<2x32xf32>
    %278 = vector.extract_strided_slice %11 {offsets = [0, 5, 0], sizes = [2, 1, 128], strides = [1, 1, 1]} : vector<2x8x128xf32> to vector<2x1x128xf32>
    %279 = vector.shape_cast %278 : vector<2x1x128xf32> to vector<2x128xf32>
    %cst_90 = arith.constant dense<0.000000e+00> : vector<2x128xf32>
    %280 = tpu.matmul %250, %3, %cst_90 {dimension_numbers = #tpu.dot_dimension_numbers<[1], [0], [0], [1], [0, 0, 1, 1], [], []>} : vector<2x32xf32>, vector<32x128xf32>, vector<2x128xf32> -> vector<2x128xf32>
    %281 = arith.addf %279, %280 : vector<2x128xf32>
    %282 = math.tanh %281 : vector<2x128xf32>
    %283 = vector.extract_strided_slice %282 {offsets = [0, 0], sizes = [2, 32], strides = [1, 1]} : vector<2x128xf32> to vector<2x32xf32>
    %cst_91 = arith.constant 5.000000e-01 : f32
    %284 = vector.broadcast %cst_91 : f32 to vector<2x32xf32>
    %285 = arith.mulf %284, %283 : vector<2x32xf32>
    %cst_92 = arith.constant 5.000000e-01 : f32
    %286 = vector.broadcast %cst_92 : f32 to vector<2x32xf32>
    %287 = arith.addf %285, %286 : vector<2x32xf32>
    %288 = vector.extract_strided_slice %282 {offsets = [0, 32], sizes = [2, 32], strides = [1, 1]} : vector<2x128xf32> to vector<2x32xf32>
    %cst_93 = arith.constant 5.000000e-01 : f32
    %289 = vector.broadcast %cst_93 : f32 to vector<2x32xf32>
    %290 = arith.mulf %289, %288 : vector<2x32xf32>
    %cst_94 = arith.constant 5.000000e-01 : f32
    %291 = vector.broadcast %cst_94 : f32 to vector<2x32xf32>
    %292 = arith.addf %290, %291 : vector<2x32xf32>
    %293 = vector.extract_strided_slice %282 {offsets = [0, 64], sizes = [2, 32], strides = [1, 1]} : vector<2x128xf32> to vector<2x32xf32>
    %294 = vector.extract_strided_slice %282 {offsets = [0, 96], sizes = [2, 32], strides = [1, 1]} : vector<2x128xf32> to vector<2x32xf32>
    %cst_95 = arith.constant 5.000000e-01 : f32
    %295 = vector.broadcast %cst_95 : f32 to vector<2x32xf32>
    %296 = arith.mulf %295, %294 : vector<2x32xf32>
    %cst_96 = arith.constant 5.000000e-01 : f32
    %297 = vector.broadcast %cst_96 : f32 to vector<2x32xf32>
    %298 = arith.addf %296, %297 : vector<2x32xf32>
    %299 = arith.mulf %292, %248 : vector<2x32xf32>
    %300 = arith.mulf %287, %293 : vector<2x32xf32>
    %301 = arith.addf %299, %300 : vector<2x32xf32>
    %302 = math.tanh %301 : vector<2x32xf32>
    %303 = arith.mulf %298, %302 : vector<2x32xf32>
    %cst_97 = arith.constant dense<0.000000e+00> : vector<2x128xf32>
    %304 = tpu.matmul %303, %2, %cst_97 {dimension_numbers = #tpu.dot_dimension_numbers<[1], [0], [0], [1], [0, 0, 1, 1], [], []>} : vector<2x32xf32>, vector<32x128xf32>, vector<2x128xf32> -> vector<2x128xf32>
    %cst_98 = arith.constant dense<0.000000e+00> : vector<2x128xf32>
    %305 = tpu.matmul %277, %4, %cst_98 {dimension_numbers = #tpu.dot_dimension_numbers<[1], [0], [0], [1], [0, 0, 1, 1], [], []>} : vector<2x32xf32>, vector<32x128xf32>, vector<2x128xf32> -> vector<2x128xf32>
    %306 = arith.addf %304, %305 : vector<2x128xf32>
    %307 = vector.broadcast %6 : vector<1x128xf32> to vector<2x128xf32>
    %308 = arith.addf %306, %307 : vector<2x128xf32>
    %309 = math.tanh %308 : vector<2x128xf32>
    %310 = vector.extract_strided_slice %309 {offsets = [0, 0], sizes = [2, 32], strides = [1, 1]} : vector<2x128xf32> to vector<2x32xf32>
    %cst_99 = arith.constant 5.000000e-01 : f32
    %311 = vector.broadcast %cst_99 : f32 to vector<2x32xf32>
    %312 = arith.mulf %311, %310 : vector<2x32xf32>
    %cst_100 = arith.constant 5.000000e-01 : f32
    %313 = vector.broadcast %cst_100 : f32 to vector<2x32xf32>
    %314 = arith.addf %312, %313 : vector<2x32xf32>
    %315 = vector.extract_strided_slice %309 {offsets = [0, 32], sizes = [2, 32], strides = [1, 1]} : vector<2x128xf32> to vector<2x32xf32>
    %cst_101 = arith.constant 5.000000e-01 : f32
    %316 = vector.broadcast %cst_101 : f32 to vector<2x32xf32>
    %317 = arith.mulf %316, %315 : vector<2x32xf32>
    %cst_102 = arith.constant 5.000000e-01 : f32
    %318 = vector.broadcast %cst_102 : f32 to vector<2x32xf32>
    %319 = arith.addf %317, %318 : vector<2x32xf32>
    %320 = vector.extract_strided_slice %309 {offsets = [0, 64], sizes = [2, 32], strides = [1, 1]} : vector<2x128xf32> to vector<2x32xf32>
    %321 = vector.extract_strided_slice %309 {offsets = [0, 96], sizes = [2, 32], strides = [1, 1]} : vector<2x128xf32> to vector<2x32xf32>
    %cst_103 = arith.constant 5.000000e-01 : f32
    %322 = vector.broadcast %cst_103 : f32 to vector<2x32xf32>
    %323 = arith.mulf %322, %321 : vector<2x32xf32>
    %cst_104 = arith.constant 5.000000e-01 : f32
    %324 = vector.broadcast %cst_104 : f32 to vector<2x32xf32>
    %325 = arith.addf %323, %324 : vector<2x32xf32>
    %326 = arith.mulf %319, %275 : vector<2x32xf32>
    %327 = arith.mulf %314, %320 : vector<2x32xf32>
    %328 = arith.addf %326, %327 : vector<2x32xf32>
    %329 = math.tanh %328 : vector<2x32xf32>
    %330 = arith.mulf %325, %329 : vector<2x32xf32>
    %331 = vector.extract_strided_slice %11 {offsets = [0, 6, 0], sizes = [2, 1, 128], strides = [1, 1, 1]} : vector<2x8x128xf32> to vector<2x1x128xf32>
    %332 = vector.shape_cast %331 : vector<2x1x128xf32> to vector<2x128xf32>
    %cst_105 = arith.constant dense<0.000000e+00> : vector<2x128xf32>
    %333 = tpu.matmul %303, %3, %cst_105 {dimension_numbers = #tpu.dot_dimension_numbers<[1], [0], [0], [1], [0, 0, 1, 1], [], []>} : vector<2x32xf32>, vector<32x128xf32>, vector<2x128xf32> -> vector<2x128xf32>
    %334 = arith.addf %332, %333 : vector<2x128xf32>
    %335 = math.tanh %334 : vector<2x128xf32>
    %336 = vector.extract_strided_slice %335 {offsets = [0, 0], sizes = [2, 32], strides = [1, 1]} : vector<2x128xf32> to vector<2x32xf32>
    %cst_106 = arith.constant 5.000000e-01 : f32
    %337 = vector.broadcast %cst_106 : f32 to vector<2x32xf32>
    %338 = arith.mulf %337, %336 : vector<2x32xf32>
    %cst_107 = arith.constant 5.000000e-01 : f32
    %339 = vector.broadcast %cst_107 : f32 to vector<2x32xf32>
    %340 = arith.addf %338, %339 : vector<2x32xf32>
    %341 = vector.extract_strided_slice %335 {offsets = [0, 32], sizes = [2, 32], strides = [1, 1]} : vector<2x128xf32> to vector<2x32xf32>
    %cst_108 = arith.constant 5.000000e-01 : f32
    %342 = vector.broadcast %cst_108 : f32 to vector<2x32xf32>
    %343 = arith.mulf %342, %341 : vector<2x32xf32>
    %cst_109 = arith.constant 5.000000e-01 : f32
    %344 = vector.broadcast %cst_109 : f32 to vector<2x32xf32>
    %345 = arith.addf %343, %344 : vector<2x32xf32>
    %346 = vector.extract_strided_slice %335 {offsets = [0, 64], sizes = [2, 32], strides = [1, 1]} : vector<2x128xf32> to vector<2x32xf32>
    %347 = vector.extract_strided_slice %335 {offsets = [0, 96], sizes = [2, 32], strides = [1, 1]} : vector<2x128xf32> to vector<2x32xf32>
    %cst_110 = arith.constant 5.000000e-01 : f32
    %348 = vector.broadcast %cst_110 : f32 to vector<2x32xf32>
    %349 = arith.mulf %348, %347 : vector<2x32xf32>
    %cst_111 = arith.constant 5.000000e-01 : f32
    %350 = vector.broadcast %cst_111 : f32 to vector<2x32xf32>
    %351 = arith.addf %349, %350 : vector<2x32xf32>
    %352 = arith.mulf %345, %301 : vector<2x32xf32>
    %353 = arith.mulf %340, %346 : vector<2x32xf32>
    %354 = arith.addf %352, %353 : vector<2x32xf32>
    %355 = math.tanh %354 : vector<2x32xf32>
    %356 = arith.mulf %351, %355 : vector<2x32xf32>
    %cst_112 = arith.constant dense<0.000000e+00> : vector<2x128xf32>
    %357 = tpu.matmul %356, %2, %cst_112 {dimension_numbers = #tpu.dot_dimension_numbers<[1], [0], [0], [1], [0, 0, 1, 1], [], []>} : vector<2x32xf32>, vector<32x128xf32>, vector<2x128xf32> -> vector<2x128xf32>
    %cst_113 = arith.constant dense<0.000000e+00> : vector<2x128xf32>
    %358 = tpu.matmul %330, %4, %cst_113 {dimension_numbers = #tpu.dot_dimension_numbers<[1], [0], [0], [1], [0, 0, 1, 1], [], []>} : vector<2x32xf32>, vector<32x128xf32>, vector<2x128xf32> -> vector<2x128xf32>
    %359 = arith.addf %357, %358 : vector<2x128xf32>
    %360 = vector.broadcast %6 : vector<1x128xf32> to vector<2x128xf32>
    %361 = arith.addf %359, %360 : vector<2x128xf32>
    %362 = math.tanh %361 : vector<2x128xf32>
    %363 = vector.extract_strided_slice %362 {offsets = [0, 0], sizes = [2, 32], strides = [1, 1]} : vector<2x128xf32> to vector<2x32xf32>
    %cst_114 = arith.constant 5.000000e-01 : f32
    %364 = vector.broadcast %cst_114 : f32 to vector<2x32xf32>
    %365 = arith.mulf %364, %363 : vector<2x32xf32>
    %cst_115 = arith.constant 5.000000e-01 : f32
    %366 = vector.broadcast %cst_115 : f32 to vector<2x32xf32>
    %367 = arith.addf %365, %366 : vector<2x32xf32>
    %368 = vector.extract_strided_slice %362 {offsets = [0, 32], sizes = [2, 32], strides = [1, 1]} : vector<2x128xf32> to vector<2x32xf32>
    %cst_116 = arith.constant 5.000000e-01 : f32
    %369 = vector.broadcast %cst_116 : f32 to vector<2x32xf32>
    %370 = arith.mulf %369, %368 : vector<2x32xf32>
    %cst_117 = arith.constant 5.000000e-01 : f32
    %371 = vector.broadcast %cst_117 : f32 to vector<2x32xf32>
    %372 = arith.addf %370, %371 : vector<2x32xf32>
    %373 = vector.extract_strided_slice %362 {offsets = [0, 64], sizes = [2, 32], strides = [1, 1]} : vector<2x128xf32> to vector<2x32xf32>
    %374 = vector.extract_strided_slice %362 {offsets = [0, 96], sizes = [2, 32], strides = [1, 1]} : vector<2x128xf32> to vector<2x32xf32>
    %cst_118 = arith.constant 5.000000e-01 : f32
    %375 = vector.broadcast %cst_118 : f32 to vector<2x32xf32>
    %376 = arith.mulf %375, %374 : vector<2x32xf32>
    %cst_119 = arith.constant 5.000000e-01 : f32
    %377 = vector.broadcast %cst_119 : f32 to vector<2x32xf32>
    %378 = arith.addf %376, %377 : vector<2x32xf32>
    %379 = arith.mulf %372, %328 : vector<2x32xf32>
    %380 = arith.mulf %367, %373 : vector<2x32xf32>
    %381 = arith.addf %379, %380 : vector<2x32xf32>
    %382 = math.tanh %381 : vector<2x32xf32>
    %383 = arith.mulf %378, %382 : vector<2x32xf32>
    %384 = vector.extract_strided_slice %11 {offsets = [0, 7, 0], sizes = [2, 1, 128], strides = [1, 1, 1]} : vector<2x8x128xf32> to vector<2x1x128xf32>
    %385 = vector.shape_cast %384 : vector<2x1x128xf32> to vector<2x128xf32>
    %cst_120 = arith.constant dense<0.000000e+00> : vector<2x128xf32>
    %386 = tpu.matmul %356, %3, %cst_120 {dimension_numbers = #tpu.dot_dimension_numbers<[1], [0], [0], [1], [0, 0, 1, 1], [], []>} : vector<2x32xf32>, vector<32x128xf32>, vector<2x128xf32> -> vector<2x128xf32>
    %387 = arith.addf %385, %386 : vector<2x128xf32>
    %388 = math.tanh %387 : vector<2x128xf32>
    %389 = vector.extract_strided_slice %388 {offsets = [0, 0], sizes = [2, 32], strides = [1, 1]} : vector<2x128xf32> to vector<2x32xf32>
    %cst_121 = arith.constant 5.000000e-01 : f32
    %390 = vector.broadcast %cst_121 : f32 to vector<2x32xf32>
    %391 = arith.mulf %390, %389 : vector<2x32xf32>
    %cst_122 = arith.constant 5.000000e-01 : f32
    %392 = vector.broadcast %cst_122 : f32 to vector<2x32xf32>
    %393 = arith.addf %391, %392 : vector<2x32xf32>
    %394 = vector.extract_strided_slice %388 {offsets = [0, 32], sizes = [2, 32], strides = [1, 1]} : vector<2x128xf32> to vector<2x32xf32>
    %cst_123 = arith.constant 5.000000e-01 : f32
    %395 = vector.broadcast %cst_123 : f32 to vector<2x32xf32>
    %396 = arith.mulf %395, %394 : vector<2x32xf32>
    %cst_124 = arith.constant 5.000000e-01 : f32
    %397 = vector.broadcast %cst_124 : f32 to vector<2x32xf32>
    %398 = arith.addf %396, %397 : vector<2x32xf32>
    %399 = vector.extract_strided_slice %388 {offsets = [0, 64], sizes = [2, 32], strides = [1, 1]} : vector<2x128xf32> to vector<2x32xf32>
    %400 = vector.extract_strided_slice %388 {offsets = [0, 96], sizes = [2, 32], strides = [1, 1]} : vector<2x128xf32> to vector<2x32xf32>
    %cst_125 = arith.constant 5.000000e-01 : f32
    %401 = vector.broadcast %cst_125 : f32 to vector<2x32xf32>
    %402 = arith.mulf %401, %400 : vector<2x32xf32>
    %cst_126 = arith.constant 5.000000e-01 : f32
    %403 = vector.broadcast %cst_126 : f32 to vector<2x32xf32>
    %404 = arith.addf %402, %403 : vector<2x32xf32>
    %405 = arith.mulf %398, %354 : vector<2x32xf32>
    %406 = arith.mulf %393, %399 : vector<2x32xf32>
    %407 = arith.addf %405, %406 : vector<2x32xf32>
    %408 = math.tanh %407 : vector<2x32xf32>
    %409 = arith.mulf %404, %408 : vector<2x32xf32>
    %cst_127 = arith.constant dense<0.000000e+00> : vector<2x128xf32>
    %410 = tpu.matmul %409, %2, %cst_127 {dimension_numbers = #tpu.dot_dimension_numbers<[1], [0], [0], [1], [0, 0, 1, 1], [], []>} : vector<2x32xf32>, vector<32x128xf32>, vector<2x128xf32> -> vector<2x128xf32>
    %cst_128 = arith.constant dense<0.000000e+00> : vector<2x128xf32>
    %411 = tpu.matmul %383, %4, %cst_128 {dimension_numbers = #tpu.dot_dimension_numbers<[1], [0], [0], [1], [0, 0, 1, 1], [], []>} : vector<2x32xf32>, vector<32x128xf32>, vector<2x128xf32> -> vector<2x128xf32>
    %412 = arith.addf %410, %411 : vector<2x128xf32>
    %413 = vector.broadcast %6 : vector<1x128xf32> to vector<2x128xf32>
    %414 = arith.addf %412, %413 : vector<2x128xf32>
    %415 = math.tanh %414 : vector<2x128xf32>
    %416 = vector.extract_strided_slice %415 {offsets = [0, 0], sizes = [2, 32], strides = [1, 1]} : vector<2x128xf32> to vector<2x32xf32>
    %cst_129 = arith.constant 5.000000e-01 : f32
    %417 = vector.broadcast %cst_129 : f32 to vector<2x32xf32>
    %418 = arith.mulf %417, %416 : vector<2x32xf32>
    %cst_130 = arith.constant 5.000000e-01 : f32
    %419 = vector.broadcast %cst_130 : f32 to vector<2x32xf32>
    %420 = arith.addf %418, %419 : vector<2x32xf32>
    %421 = vector.extract_strided_slice %415 {offsets = [0, 32], sizes = [2, 32], strides = [1, 1]} : vector<2x128xf32> to vector<2x32xf32>
    %cst_131 = arith.constant 5.000000e-01 : f32
    %422 = vector.broadcast %cst_131 : f32 to vector<2x32xf32>
    %423 = arith.mulf %422, %421 : vector<2x32xf32>
    %cst_132 = arith.constant 5.000000e-01 : f32
    %424 = vector.broadcast %cst_132 : f32 to vector<2x32xf32>
    %425 = arith.addf %423, %424 : vector<2x32xf32>
    %426 = vector.extract_strided_slice %415 {offsets = [0, 64], sizes = [2, 32], strides = [1, 1]} : vector<2x128xf32> to vector<2x32xf32>
    %427 = vector.extract_strided_slice %415 {offsets = [0, 96], sizes = [2, 32], strides = [1, 1]} : vector<2x128xf32> to vector<2x32xf32>
    %cst_133 = arith.constant 5.000000e-01 : f32
    %428 = vector.broadcast %cst_133 : f32 to vector<2x32xf32>
    %429 = arith.mulf %428, %427 : vector<2x32xf32>
    %cst_134 = arith.constant 5.000000e-01 : f32
    %430 = vector.broadcast %cst_134 : f32 to vector<2x32xf32>
    %431 = arith.addf %429, %430 : vector<2x32xf32>
    %432 = arith.mulf %425, %381 : vector<2x32xf32>
    %433 = arith.mulf %420, %426 : vector<2x32xf32>
    %434 = arith.addf %432, %433 : vector<2x32xf32>
    %435 = math.tanh %434 : vector<2x32xf32>
    %436 = arith.mulf %431, %435 : vector<2x32xf32>
    %cst_135 = arith.constant 0.000000e+00 : f32
    %437 = vector.broadcast %cst_135 : f32 to vector<2x32xf32>
    %438 = arith.maximumf %436, %437 : vector<2x32xf32>
    %c0_136 = arith.constant 0 : index
    %c0_137 = arith.constant 0 : index
    %439 = vector.load %arg7[%c0_136, %c0_137] : memref<1x32xf32, #tpu.memory_space<vmem>>, vector<1x32xf32>
    %c0_138 = arith.constant 0 : index
    %c0_139 = arith.constant 0 : index
    %440 = vector.load %arg8[%c0_138, %c0_139] : memref<1x1xf32, #tpu.memory_space<vmem>>, vector<1x1xf32>
    %441 = vector.broadcast %439 : vector<1x32xf32> to vector<2x32xf32>
    %442 = arith.mulf %438, %441 : vector<2x32xf32>
    %cst_140 = arith.constant dense<0.000000e+00> : vector<2xf32>
    %443 = vector.multi_reduction <add>, %442, %cst_140 [1] : vector<2x32xf32> to vector<2xf32>
    %444 = vector.shape_cast %443 : vector<2xf32> to vector<2x1xf32>
    %445 = vector.broadcast %440 : vector<1x1xf32> to vector<2x1xf32>
    %446 = arith.addf %444, %445 : vector<2x1xf32>
    %c0_141 = arith.constant 0 : index
    %c0_142 = arith.constant 0 : index
    %447 = vector.load %arg9[%c0_141, %c0_142] : memref<2x1xf32, #tpu.memory_space<vmem>>, vector<2x1xf32>
    tpu.vector_store %arg9[%c0_141, %c0_142], %446 {strides = array<i32>} : memref<2x1xf32, #tpu.memory_space<vmem>>, vector<2x1xf32>,
    return
  }
}

</mosaic_0001>

<llo_original>
// kernel: tpu_custom_call.1
$region0: #{tpu_custom_call.1}
  #allocation0 [shape = 'u32[]', space=smem, size = 0x4, offset = 0x4, fixed_abs, tag = 'smem constant byte address 0x4 - core index']
  #allocation1 [shape = 'u32[144,128]{1,0:T(1,128)}', space=vmem, size = 0x12000, scoped, tag = 'internal scratch']
  #allocation2 [shape = 'f32[1,1]{1,0:T(1,128)S(1)}', space=vmem, size = 0x200, scoped, tag = 'scoped memory for tpu_custom_call.1']
  %s0 = inlined_call_operand.vmem [shape: f32[2,8,4], index: 0, kind: input, shape index: {}]
  %s1 = inlined_call_operand.hbm [shape: f32[4,128], index: 1, kind: input, shape index: {}]
  %s2 = inlined_call_operand.hbm [shape: f32[32,128], index: 2, kind: input, shape index: {}]
  %s3 = inlined_call_operand.vmem [shape: f32[1,128], index: 3, kind: input, shape index: {}]
  %s4 = inlined_call_operand.vmem [shape: f32[32,128], index: 4, kind: input, shape index: {}]
  %s5 = inlined_call_operand.hbm [shape: f32[32,128], index: 5, kind: input, shape index: {}]
  %s6 = inlined_call_operand.vmem [shape: f32[1,128], index: 6, kind: input, shape index: {}]
  %s7 = inlined_call_operand.vmem [shape: f32[1,32], index: 7, kind: input, shape index: {}]
  %s8 = inlined_call_operand.<no memory space> [shape: f32[1,1], index: 8, kind: input, shape index: {}]
  %s9 = inlined_call_operand.vmem [shape: f32[2,1], index: 9, kind: output, shape index: {}]
  %s10 = sld [smem:[#allocation0]]
  $region58: #{tpu_custom_call.1} parent=0
    _
  %s12 = ssub.s32 1, %s10
  %s13 = scalar_select 0, %s12, %s10
  %v14 = vstv %s8
  %15 = vst [vmem:[#allocation2] sm:$0x1] %v14
  $region1: #{tpu_custom_call.1} parent=0
    #allocation3 [shape = 'u8[2048]{0}', space=vmem, size = 0x800, scoped, tag = 'input window, operand 1, single buffered']
    #allocation4 [shape = 's32[1]{0}', space=sflag, size = 0x4, scoped, tag = 'scoped memory for tpu_custom_call.1']
    #allocation5 [shape = 'u8[16384]{0}', space=vmem, size = 0x4000, scoped, tag = 'input window, operand 2, single buffered']
    #allocation6 [shape = 's32[1]{0}', space=sflag, size = 0x4, scoped, tag = 'scoped memory for tpu_custom_call.1']
    #allocation7 [shape = 'u8[16384]{0}', space=vmem, size = 0x4000, scoped, tag = 'input window, operand 5, single buffered']
    %16 = vsyncpa [#allocation4], 0
    %17 = vsyncpa [#allocation6], 0
    // Predicated region
    $region2: #{tpu_custom_call.1} parent=1 // pred_check
      _
    $region3: #{tpu_custom_call.1} parent=1 // pred_check_branch
      %19 = sbr.rel (0) target = $region5
    $region4: #{tpu_custom_call.1} parent=1 // pred_region
      _
    $region5: #{tpu_custom_call.1} parent=1 // pred_fallthru
      _
    // Predicated region
    $region6: #{tpu_custom_call.1} parent=1 // pred_check
      _
    $region7: #{tpu_custom_call.1} parent=1 // pred_check_branch
      %21 = sbr.rel (0) target = $region9
    $region8: #{tpu_custom_call.1} parent=1 // pred_region
      %s23 = ssub.s32 64, 64
      %24 = vsyncadd [#allocation4], %s23
      %s26 = sshll.u32 [#allocation3], 4
      %s27 = int_to_ptr.vmem [resolvable:$true] %s26
      %29 = dma.hbm_to_vmem [thread:$0]  %s1, 64, %s27, [#allocation4]
    $region9: #{tpu_custom_call.1} parent=1 // pred_fallthru
      _
    // Predicated region
    $region10: #{tpu_custom_call.1} parent=1 // pred_check
      _
    $region11: #{tpu_custom_call.1} parent=1 // pred_check_branch
      %31 = sbr.rel (0) target = $region13
    $region12: #{tpu_custom_call.1} parent=1 // pred_region
      %s33 = ssub.s32 512, 512
      %34 = vsyncadd [#allocation6], %s33
      %s35 = sshll.u32 [#allocation5], 4
      %s36 = int_to_ptr.vmem [resolvable:$true] %s35
      %41 = dma.hbm_to_vmem [thread:$0]  %s2, 512, %s36, [#allocation6], 128, 128, 8
    $region13: #{tpu_custom_call.1} parent=1 // pred_fallthru
      _
    // Predicated region
    $region14: #{tpu_custom_call.1} parent=1 // pred_check
      _
    $region15: #{tpu_custom_call.1} parent=1 // pred_check_branch
      %43 = sbr.rel (0) target = $region17
    $region16: #{tpu_custom_call.1} parent=1 // pred_region
      _
    $region17: #{tpu_custom_call.1} parent=1 // pred_fallthru
      _
    // Predicated region
    $region18: #{tpu_custom_call.1} parent=1 // pred_check
      _
    $region19: #{tpu_custom_call.1} parent=1 // pred_check_branch
      %45 = sbr.rel (0) target = $region21
    $region20: #{tpu_custom_call.1} parent=1 // pred_region
      _
    $region21: #{tpu_custom_call.1} parent=1 // pred_fallthru
      _
    // Predicated region
    $region22: #{tpu_custom_call.1} parent=1 // pred_check
      _
    $region23: #{tpu_custom_call.1} parent=1 // pred_check_branch
      %47 = sbr.rel (0) target = $region25
    $region24: #{tpu_custom_call.1} parent=1 // pred_region
      %s49 = ssub.s32 512, 512
      %50 = vsyncadd [#allocation6], %s49
      %s51 = sshll.u32 [#allocation7], 4
      %s52 = int_to_ptr.vmem [resolvable:$true] %s51
      %57 = dma.hbm_to_vmem [thread:$0]  %s5, 512, %s52, [#allocation6], 128, 128, 8
    $region25: #{tpu_custom_call.1} parent=1 // pred_fallthru
      _
    // Predicated region
    $region26: #{tpu_custom_call.1} parent=1 // pred_check
      _
    $region27: #{tpu_custom_call.1} parent=1 // pred_check_branch
      %59 = sbr.rel (0) target = $region29
    $region28: #{tpu_custom_call.1} parent=1 // pred_region
      _
    $region29: #{tpu_custom_call.1} parent=1 // pred_fallthru
      _
    // Predicated region
    $region30: #{tpu_custom_call.1} parent=1 // pred_check
      _
    $region31: #{tpu_custom_call.1} parent=1 // pred_check_branch
      %61 = sbr.rel (0) target = $region33
    $region32: #{tpu_custom_call.1} parent=1 // pred_region
      _
    $region33: #{tpu_custom_call.1} parent=1 // pred_fallthru
      _
    // Predicated region
    $region34: #{tpu_custom_call.1} parent=1 // pred_check
      _
    $region35: #{tpu_custom_call.1} parent=1 // pred_check_branch
      %63 = sbr.rel (0) target = $region37
    $region36: #{tpu_custom_call.1} parent=1 // pred_region
      _
    $region37: #{tpu_custom_call.1} parent=1 // pred_fallthru
      _
    // Predicated region
    $region38: #{tpu_custom_call.1} parent=1 // pred_check
      _
    $region39: #{tpu_custom_call.1} parent=1 // pred_check_branch
      %65 = sbr.rel (0) target = $region41
    $region40: #{tpu_custom_call.1} parent=1 // pred_region
      %66 = dma.done [#allocation4], 64
    $region41: #{tpu_custom_call.1} parent=1 // pred_fallthru
      _
    // Predicated region
    $region42: #{tpu_custom_call.1} parent=1 // pred_check
      _
    $region43: #{tpu_custom_call.1} parent=1 // pred_check_branch
      %68 = sbr.rel (0) target = $region45
    $region44: #{tpu_custom_call.1} parent=1 // pred_region
      %69 = dma.done [#allocation6], 512
    $region45: #{tpu_custom_call.1} parent=1 // pred_fallthru
      _
    // Predicated region
    $region46: #{tpu_custom_call.1} parent=1 // pred_check
      _
    $region47: #{tpu_custom_call.1} parent=1 // pred_check_branch
      %71 = sbr.rel (0) target = $region49
    $region48: #{tpu_custom_call.1} parent=1 // pred_region
      %72 = dma.done [#allocation6], 512
    $region49: #{tpu_custom_call.1} parent=1 // pred_fallthru
      _
    %v73 = vld [vmem:[%s0] sm:$0xff]
    %v74 = vld [vmem:[%s0 + $0x8] sm:$0xff]
    %v75 = vld [vmem:[#allocation3] sm:$0xf]
    %v76 = vld [vmem:[%s4] sm:$0xff]
    %v77 = vld [vmem:[%s4 + $0x8] sm:$0xff]
    %v78 = vld [vmem:[%s4 + $0x10] sm:$0xff]
    %v79 = vld [vmem:[%s4 + $0x18] sm:$0xff]
    %v80 = vld [vmem:[#allocation5] sm:$0xff]
    %v81 = vld [vmem:[#allocation5 + $0x8] sm:$0xff]
    %v82 = vld [vmem:[#allocation5 + $0x10] sm:$0xff]
    %v83 = vld [vmem:[#allocation5 + $0x18] sm:$0xff]
    %v84 = vld [vmem:[#allocation7] sm:$0xff]
    %v85 = vld [vmem:[#allocation7 + $0x8] sm:$0xff]
    %v86 = vld [vmem:[#allocation7 + $0x10] sm:$0xff]
    %v87 = vld [vmem:[#allocation7 + $0x18] sm:$0xff]
    %v88 = vld [vmem:[%s3] sm:$0x1]
    %v89 = vld [vmem:[%s6] sm:$0x1]
    %v91 = vlaneseq
    %v92 = vshrl.u32 %v91, 7
    %v93 = vsub.s32 0, %v92
    %v94 = vrot.slane %v88, %v93
    %vm96 = vcmask 31744
    %v98 = vsel %vm96, %v73, 0
    %v101 = vsel %vm96, %v74, 0
    %vm103 = vcmask 1043456
    %v105 = vsel %vm103, %v75, 0
    %107 = vmatprep.subr.mxu0 0.0
    %108 = vmatpush1.msra.mxu0 0.0
    %109 = vmatprep.subr.mxu0 0.0
    %110 = vmatpush1.msra.mxu0 0.0
    %111 = vmatprep.subr.mxu0 0.0
    %112 = vmatpush1.msra.mxu0 0.0
    %113 = vmatprep.subr.mxu0 0.0
    %114 = vmatpush1.msra.mxu0 0.0
    %115 = vmatprep.subr.mxu0 0.0
    %116 = vmatpush1.msra.mxu0 0.0
    %117 = vmatprep.subr.mxu0 0.0
    %118 = vmatpush1.msra.mxu0 0.0
    %119 = vmatprep.subr.mxu0 0.0
    %120 = vmatpush1.msra.mxu0 0.0
    %121 = vmatprep.subr.mxu0 0.0
    %122 = vmatpush1.msra.mxu0 0.0
    %123 = vmatprep.subr.mxu0 0.0
    %124 = vmatpush1.msra.mxu0 0.0
    %125 = vmatprep.subr.mxu0 0.0
    %126 = vmatpush1.msra.mxu0 0.0
    %127 = vmatprep.subr.mxu0 0.0
    %128 = vmatpush1.msra.mxu0 0.0
    %129 = vmatprep.subr.mxu0 0.0
    %130 = vmatpush1.msra.mxu0 0.0
    %131 = vmatprep.subr.mxu0 0.0
    %132 = vmatpush1.msra.mxu0 0.0
    %133 = vmatprep.subr.mxu0 0.0
    %134 = vmatpush1.msra.mxu0 0.0
    %135 = vmatprep.subr.mxu0 0.0
    %136 = vmatpush1.msra.mxu0 0.0
    %137 = vmatprep.subr.mxu0 0.0
    %138 = vmatpush1.msra.mxu0 %v105
    %139 = vmatprep.subr.mxu0 0.0
    %140 = vmatpush2.msra.mxu0 0.0
    %141 = vmatprep.subr.mxu0 0.0
    %142 = vmatpush2.msra.mxu0 0.0
    %143 = vmatprep.subr.mxu0 0.0
    %144 = vmatpush2.msra.mxu0 0.0
    %145 = vmatprep.subr.mxu0 0.0
    %146 = vmatpush2.msra.mxu0 0.0
    %147 = vmatprep.subr.mxu0 0.0
    %148 = vmatpush2.msra.mxu0 0.0
    %149 = vmatprep.subr.mxu0 0.0
    %150 = vmatpush2.msra.mxu0 0.0
    %151 = vmatprep.subr.mxu0 0.0
    %152 = vmatpush2.msra.mxu0 0.0
    %153 = vmatprep.subr.mxu0 0.0
    %154 = vmatpush2.msra.mxu0 0.0
    %155 = vmatprep.subr.mxu0 0.0
    %156 = vmatpush2.msra.mxu0 0.0
    %157 = vmatprep.subr.mxu0 0.0
    %158 = vmatpush2.msra.mxu0 0.0
    %159 = vmatprep.subr.mxu0 0.0
    %160 = vmatpush2.msra.mxu0 0.0
    %161 = vmatprep.subr.mxu0 0.0
    %162 = vmatpush2.msra.mxu0 0.0
    %163 = vmatprep.subr.mxu0 0.0
    %164 = vmatpush2.msra.mxu0 0.0
    %165 = vmatprep.subr.mxu0 0.0
    %166 = vmatpush2.msra.mxu0 0.0
    %167 = vmatprep.subr.mxu0 0.0
    %168 = vmatpush2.msra.mxu0 0.0
    %169 = vmatprep.subr.mxu0 0.0
    %170 = vmatpush2.msra.mxu0 0.0
    %171 = vmatprep.mubr.f32.mxu0 0.0
    %172 = vmatmul.mubr.f32.gmra.mxu0 %v98
    %v173 = vpop.f32.mrf.mxu0
    %v174 = vadd.f32 %v94, %v173
    %v175 = vpop.f32.mrf.mxu0
    %176 = vmatprep.mubr.f32.mxu0 0.0
    %177 = vmatmul.mubr.f32.gmra.mxu0 %v101
    %v178 = vpop.f32.mrf.mxu0
    %v179 = vadd.f32 %v94, %v178
    %v180 = vpop.f32.mrf.mxu0
    %181 = vdwg.mxu0
    %vm182 = vcmask 261120
    %v184 = vsel %vm182, 0.0, 0
    %186 = vmatprep.subr.mxu0 0.0
    %187 = vmatpush1.msra.mxu0 0.0
    %188 = vmatprep.subr.mxu0 0.0
    %189 = vmatpush1.msra.mxu0 0.0
    %190 = vmatprep.subr.mxu0 0.0
    %191 = vmatpush1.msra.mxu0 0.0
    %192 = vmatprep.subr.mxu0 0.0
    %193 = vmatpush1.msra.mxu0 0.0
    %194 = vmatprep.subr.mxu0 0.0
    %195 = vmatpush1.msra.mxu0 0.0
    %196 = vmatprep.subr.mxu0 0.0
    %197 = vmatpush1.msra.mxu0 0.0
    %198 = vmatprep.subr.mxu0 0.0
    %199 = vmatpush1.msra.mxu0 0.0
    %200 = vmatprep.subr.mxu0 0.0
    %201 = vmatpush1.msra.mxu0 0.0
    %202 = vmatprep.subr.mxu0 0.0
    %203 = vmatpush1.msra.mxu0 0.0
    %204 = vmatprep.subr.mxu0 0.0
    %205 = vmatpush1.msra.mxu0 0.0
    %206 = vmatprep.subr.mxu0 0.0
    %207 = vmatpush1.msra.mxu0 0.0
    %208 = vmatprep.subr.mxu0 0.0
    %209 = vmatpush1.msra.mxu0 0.0
    %210 = vmatprep.subr.mxu0 0.0
    %211 = vmatpush1.msra.mxu0 %v83
    %212 = vmatprep.subr.mxu0 0.0
    %213 = vmatpush1.msra.mxu0 %v82
    %214 = vmatprep.subr.mxu0 0.0
    %215 = vmatpush1.msra.mxu0 %v81
    %216 = vmatprep.subr.mxu0 0.0
    %217 = vmatpush1.msra.mxu0 %v80
    %218 = vmatprep.subr.mxu0 0.0
    %219 = vmatpush2.msra.mxu0 0.0
    %220 = vmatprep.subr.mxu0 0.0
    %221 = vmatpush2.msra.mxu0 0.0
    %222 = vmatprep.subr.mxu0 0.0
    %223 = vmatpush2.msra.mxu0 0.0
    %224 = vmatprep.subr.mxu0 0.0
    %225 = vmatpush2.msra.mxu0 0.0
    %226 = vmatprep.subr.mxu0 0.0
    %227 = vmatpush2.msra.mxu0 0.0
    %228 = vmatprep.subr.mxu0 0.0
    %229 = vmatpush2.msra.mxu0 0.0
    %230 = vmatprep.subr.mxu0 0.0
    %231 = vmatpush2.msra.mxu0 0.0
    %232 = vmatprep.subr.mxu0 0.0
    %233 = vmatpush2.msra.mxu0 0.0
    %234 = vmatprep.subr.mxu0 0.0
    %235 = vmatpush2.msra.mxu0 0.0
    %236 = vmatprep.subr.mxu0 0.0
    %237 = vmatpush2.msra.mxu0 0.0
    %238 = vmatprep.subr.mxu0 0.0
    %239 = vmatpush2.msra.mxu0 0.0
    %240 = vmatprep.subr.mxu0 0.0
    %241 = vmatpush2.msra.mxu0 0.0
    %242 = vmatprep.subr.mxu0 0.0
    %243 = vmatpush2.msra.mxu0 0.0
    %244 = vmatprep.subr.mxu0 0.0
    %245 = vmatpush2.msra.mxu0 0.0
    %246 = vmatprep.subr.mxu0 0.0
    %247 = vmatpush2.msra.mxu0 0.0
    %248 = vmatprep.subr.mxu0 0.0
    %249 = vmatpush2.msra.mxu0 0.0
    %250 = vmatprep.mubr.f32.mxu0 0.0
    %251 = vmatmul.mubr.f32.gmra.mxu0 %v184
    %v252 = vpop.f32.mrf.mxu0
    %v253 = vadd.f32 0.0, %v252
    %v254 = vpop.f32.mrf.mxu0
    %255 = vdwg.mxu0
    %v257 = vrot.slane %v253, 1
    %v260 = vadd.f32 %v174, %v253
    %v261 = vadd.f32 %v179, %v257
    %v262 = vtanh.pop %v260
    %v263 = vtanh.pop %v261
    %v264 = vmul.f32 %v262, 0.5
    %v265 = vmul.f32 %v263, 0.5
    %v266 = vadd.f32 %v264, 0.5
    %v267 = vadd.f32 %v265, 0.5
    %v268 = vmul.f32 %v266, 0.0
    %v269 = vmul.f32 %v267, 0.0
    %272 = vrot.lane.b32.xlu0 %v262, 64
    %v273 = vpop.permute.xlu0 %272
    %274 = vrot.lane.b32.xlu0 %v263, 64
    %v275 = vpop.permute.xlu0 %274
    %v278 = vmul.f32 %v266, %v273
    %v279 = vmul.f32 %v267, %v275
    %282 = vrot.lane.b32.xlu0 %v278, 32
    %v283 = vpop.permute.xlu0 %282
    %284 = vrot.lane.b32.xlu0 %v279, 32
    %v285 = vpop.permute.xlu0 %284
    %v288 = vadd.f32 %v268, %v283
    %v289 = vadd.f32 %v269, %v285
    %v290 = vtanh.pop %v288
    %v291 = vtanh.pop %v289
    %294 = vrot.lane.b32.xlu0 %v290, 64
    %v295 = vpop.permute.xlu0 %294
    %296 = vrot.lane.b32.xlu0 %v291, 64
    %v297 = vpop.permute.xlu0 %296
    %v300 = vmul.f32 %v266, %v295
    %v301 = vmul.f32 %v267, %v297
    %302 = vmatprep.subr.mxu0 0.0
    %303 = vmatpush1.msra.mxu0 0.0
    %304 = vmatprep.subr.mxu0 0.0
    %305 = vmatpush1.msra.mxu0 0.0
    %306 = vmatprep.subr.mxu0 0.0
    %307 = vmatpush1.msra.mxu0 0.0
    %308 = vmatprep.subr.mxu0 0.0
    %309 = vmatpush1.msra.mxu0 0.0
    %310 = vmatprep.subr.mxu0 0.0
    %311 = vmatpush1.msra.mxu0 0.0
    %312 = vmatprep.subr.mxu0 0.0
    %313 = vmatpush1.msra.mxu0 0.0
    %314 = vmatprep.subr.mxu0 0.0
    %315 = vmatpush1.msra.mxu0 0.0
    %316 = vmatprep.subr.mxu0 0.0
    %317 = vmatpush1.msra.mxu0 0.0
    %318 = vmatprep.subr.mxu0 0.0
    %319 = vmatpush1.msra.mxu0 0.0
    %320 = vmatprep.subr.mxu0 0.0
    %321 = vmatpush1.msra.mxu0 0.0
    %322 = vmatprep.subr.mxu0 0.0
    %323 = vmatpush1.msra.mxu0 0.0
    %324 = vmatprep.subr.mxu0 0.0
    %325 = vmatpush1.msra.mxu0 0.0
    %326 = vmatprep.subr.mxu0 0.0
    %327 = vmatpush1.msra.mxu0 %v87
    %328 = vmatprep.subr.mxu0 0.0
    %329 = vmatpush1.msra.mxu0 %v86
    %330 = vmatprep.subr.mxu0 0.0
    %331 = vmatpush1.msra.mxu0 %v85
    %332 = vmatprep.subr.mxu0 0.0
    %333 = vmatpush1.msra.mxu0 %v84
    %334 = vmatprep.subr.mxu0 0.0
    %335 = vmatpush2.msra.mxu0 0.0
    %336 = vmatprep.subr.mxu0 0.0
    %337 = vmatpush2.msra.mxu0 0.0
    %338 = vmatprep.subr.mxu0 0.0
    %339 = vmatpush2.msra.mxu0 0.0
    %340 = vmatprep.subr.mxu0 0.0
    %341 = vmatpush2.msra.mxu0 0.0
    %342 = vmatprep.subr.mxu0 0.0
    %343 = vmatpush2.msra.mxu0 0.0
    %344 = vmatprep.subr.mxu0 0.0
    %345 = vmatpush2.msra.mxu0 0.0
    %346 = vmatprep.subr.mxu0 0.0
    %347 = vmatpush2.msra.mxu0 0.0
    %348 = vmatprep.subr.mxu0 0.0
    %349 = vmatpush2.msra.mxu0 0.0
    %350 = vmatprep.subr.mxu0 0.0
    %351 = vmatpush2.msra.mxu0 0.0
    %352 = vmatprep.subr.mxu0 0.0
    %353 = vmatpush2.msra.mxu0 0.0
    %354 = vmatprep.subr.mxu0 0.0
    %355 = vmatpush2.msra.mxu0 0.0
    %356 = vmatprep.subr.mxu0 0.0
    %357 = vmatpush2.msra.mxu0 0.0
    %358 = vmatprep.subr.mxu0 0.0
    %359 = vmatpush2.msra.mxu0 0.0
    %360 = vmatprep.subr.mxu0 0.0
    %361 = vmatpush2.msra.mxu0 0.0
    %362 = vmatprep.subr.mxu0 0.0
    %363 = vmatpush2.msra.mxu0 0.0
    %364 = vmatprep.subr.mxu0 0.0
    %365 = vmatpush2.msra.mxu0 0.0
    %366 = vmatprep.mubr.f32.mxu0 0.0
    %367 = vmatmul.mubr.f32.gmra.mxu0 %v184
    %v368 = vpop.f32.mrf.mxu0
    %v369 = vadd.f32 0.0, %v368
    %v370 = vpop.f32.mrf.mxu0
    %371 = vdwg.mxu0
    %v374 = vrot.slane %v301, 7
    %vm375 = vcmask 1041409
    %v376 = vsel %vm375, %v374, %v300
    %377 = vrot.lane.b32.xlu0 %v376, 32
    %v378 = vpop.permute.xlu0 %377
    %v379 = vsel %vm182, %v378, 0
    %381 = vmatprep.subr.mxu0 0.0
    %382 = vmatpush1.msra.mxu0 0.0
    %383 = vmatprep.subr.mxu0 0.0
    %384 = vmatpush1.msra.mxu0 0.0
    %385 = vmatprep.subr.mxu0 0.0
    %386 = vmatpush1.msra.mxu0 0.0
    %387 = vmatprep.subr.mxu0 0.0
    %388 = vmatpush1.msra.mxu0 0.0
    %389 = vmatprep.subr.mxu0 0.0
    %390 = vmatpush1.msra.mxu0 0.0
    %391 = vmatprep.subr.mxu0 0.0
    %392 = vmatpush1.msra.mxu0 0.0
    %393 = vmatprep.subr.mxu0 0.0
    %394 = vmatpush1.msra.mxu0 0.0
    %395 = vmatprep.subr.mxu0 0.0
    %396 = vmatpush1.msra.mxu0 0.0
    %397 = vmatprep.subr.mxu0 0.0
    %398 = vmatpush1.msra.mxu0 0.0
    %399 = vmatprep.subr.mxu0 0.0
    %400 = vmatpush1.msra.mxu0 0.0
    %401 = vmatprep.subr.mxu0 0.0
    %402 = vmatpush1.msra.mxu0 0.0
    %403 = vmatprep.subr.mxu0 0.0
    %404 = vmatpush1.msra.mxu0 0.0
    %405 = vmatprep.subr.mxu0 0.0
    %406 = vmatpush1.msra.mxu0 %v79
    %407 = vmatprep.subr.mxu0 0.0
    %408 = vmatpush1.msra.mxu0 %v78
    %409 = vmatprep.subr.mxu0 0.0
    %410 = vmatpush1.msra.mxu0 %v77
    %411 = vmatprep.subr.mxu0 0.0
    %412 = vmatpush1.msra.mxu0 %v76
    %413 = vmatprep.subr.mxu0 0.0
    %414 = vmatpush2.msra.mxu0 0.0
    %415 = vmatprep.subr.mxu0 0.0
    %416 = vmatpush2.msra.mxu0 0.0
    %417 = vmatprep.subr.mxu0 0.0
    %418 = vmatpush2.msra.mxu0 0.0
    %419 = vmatprep.subr.mxu0 0.0
    %420 = vmatpush2.msra.mxu0 0.0
    %421 = vmatprep.subr.mxu0 0.0
    %422 = vmatpush2.msra.mxu0 0.0
    %423 = vmatprep.subr.mxu0 0.0
    %424 = vmatpush2.msra.mxu0 0.0
    %425 = vmatprep.subr.mxu0 0.0
    %426 = vmatpush2.msra.mxu0 0.0
    %427 = vmatprep.subr.mxu0 0.0
    %428 = vmatpush2.msra.mxu0 0.0
    %429 = vmatprep.subr.mxu0 0.0
    %430 = vmatpush2.msra.mxu0 0.0
    %431 = vmatprep.subr.mxu0 0.0
    %432 = vmatpush2.msra.mxu0 0.0
    %433 = vmatprep.subr.mxu0 0.0
    %434 = vmatpush2.msra.mxu0 0.0
    %435 = vmatprep.subr.mxu0 0.0
    %436 = vmatpush2.msra.mxu0 0.0
    %437 = vmatprep.subr.mxu0 0.0
    %438 = vmatpush2.msra.mxu0 0.0
    %439 = vmatprep.subr.mxu0 0.0
    %440 = vmatpush2.msra.mxu0 0.0
    %441 = vmatprep.subr.mxu0 0.0
    %442 = vmatpush2.msra.mxu0 0.0
    %443 = vmatprep.subr.mxu0 0.0
    %444 = vmatpush2.msra.mxu0 0.0
    %445 = vmatprep.mubr.f32.mxu0 0.0
    %446 = vmatmul.mubr.f32.gmra.mxu0 %v379
    %v447 = vpop.f32.mrf.mxu0
    %v448 = vadd.f32 %v369, %v447
    %v449 = vpop.f32.mrf.mxu0
    %450 = vdwg.mxu0
    %v452 = vlaneseq
    %v453 = vshrl.u32 %v452, 7
    %v454 = vsub.s32 0, %v453
    %v455 = vrot.slane %v89, %v454
    %v457 = vadd.f32 %v448, %v455
    %v458 = vtanh.pop %v457
    %v459 = vmul.f32 %v458, 0.5
    %v460 = vadd.f32 %v459, 0.5
    %v461 = vmul.f32 %v460, 0.0
    %463 = vrot.lane.b32.xlu0 %v458, 64
    %v464 = vpop.permute.xlu0 %463
    %v466 = vmul.f32 %v460, %v464
    %468 = vrot.lane.b32.xlu0 %v466, 32
    %v469 = vpop.permute.xlu0 %468
    %v471 = vadd.f32 %v461, %v469
    %v472 = vtanh.pop %v471
    %474 = vrot.lane.b32.xlu0 %v472, 64
    %v475 = vpop.permute.xlu0 %474
    %v477 = vmul.f32 %v460, %v475
    %478 = vmatprep.subr.mxu0 0.0
    %479 = vmatpush1.msra.mxu0 0.0
    %480 = vmatprep.subr.mxu0 0.0
    %481 = vmatpush1.msra.mxu0 0.0
    %482 = vmatprep.subr.mxu0 0.0
    %483 = vmatpush1.msra.mxu0 0.0
    %484 = vmatprep.subr.mxu0 0.0
    %485 = vmatpush1.msra.mxu0 0.0
    %486 = vmatprep.subr.mxu0 0.0
    %487 = vmatpush1.msra.mxu0 0.0
    %488 = vmatprep.subr.mxu0 0.0
    %489 = vmatpush1.msra.mxu0 0.0
    %490 = vmatprep.subr.mxu0 0.0
    %491 = vmatpush1.msra.mxu0 0.0
    %492 = vmatprep.subr.mxu0 0.0
    %493 = vmatpush1.msra.mxu0 0.0
    %494 = vmatprep.subr.mxu0 0.0
    %495 = vmatpush1.msra.mxu0 0.0
    %496 = vmatprep.subr.mxu0 0.0
    %497 = vmatpush1.msra.mxu0 0.0
    %498 = vmatprep.subr.mxu0 0.0
    %499 = vmatpush1.msra.mxu0 0.0
    %500 = vmatprep.subr.mxu0 0.0
    %501 = vmatpush1.msra.mxu0 0.0
    %502 = vmatprep.subr.mxu0 0.0
    %503 = vmatpush1.msra.mxu0 %v83
    %504 = vmatprep.subr.mxu0 0.0
    %505 = vmatpush1.msra.mxu0 %v82
    %506 = vmatprep.subr.mxu0 0.0
    %507 = vmatpush1.msra.mxu0 %v81
    %508 = vmatprep.subr.mxu0 0.0
    %509 = vmatpush1.msra.mxu0 %v80
    %510 = vmatprep.subr.mxu0 0.0
    %511 = vmatpush2.msra.mxu0 0.0
    %512 = vmatprep.subr.mxu0 0.0
    %513 = vmatpush2.msra.mxu0 0.0
    %514 = vmatprep.subr.mxu0 0.0
    %515 = vmatpush2.msra.mxu0 0.0
    %516 = vmatprep.subr.mxu0 0.0
    %517 = vmatpush2.msra.mxu0 0.0
    %518 = vmatprep.subr.mxu0 0.0
    %519 = vmatpush2.msra.mxu0 0.0
    %520 = vmatprep.subr.mxu0 0.0
    %521 = vmatpush2.msra.mxu0 0.0
    %522 = vmatprep.subr.mxu0 0.0
    %523 = vmatpush2.msra.mxu0 0.0
    %524 = vmatprep.subr.mxu0 0.0
    %525 = vmatpush2.msra.mxu0 0.0
    %526 = vmatprep.subr.mxu0 0.0
    %527 = vmatpush2.msra.mxu0 0.0
    %528 = vmatprep.subr.mxu0 0.0
    %529 = vmatpush2.msra.mxu0 0.0
    %530 = vmatprep.subr.mxu0 0.0
    %531 = vmatpush2.msra.mxu0 0.0
    %532 = vmatprep.subr.mxu0 0.0
    %533 = vmatpush2.msra.mxu0 0.0
    %534 = vmatprep.subr.mxu0 0.0
    %535 = vmatpush2.msra.mxu0 0.0
    %536 = vmatprep.subr.mxu0 0.0
    %537 = vmatpush2.msra.mxu0 0.0
    %538 = vmatprep.subr.mxu0 0.0
    %539 = vmatpush2.msra.mxu0 0.0
    %540 = vmatprep.subr.mxu0 0.0
    %541 = vmatpush2.msra.mxu0 0.0
    %542 = vmatprep.mubr.f32.mxu0 0.0
    %543 = vmatmul.mubr.f32.gmra.mxu0 %v379
    %v544 = vpop.f32.mrf.mxu0
    %v545 = vadd.f32 0.0, %v544
    %v546 = vpop.f32.mrf.mxu0
    %547 = vdwg.mxu0
    %v549 = vrot.slane %v545, 7
    %v552 = vadd.f32 %v174, %v549
    %v553 = vadd.f32 %v179, %v545
    %v554 = vtanh.pop %v552
    %v555 = vtanh.pop %v553
    %v556 = vmul.f32 %v554, 0.5
    %v557 = vmul.f32 %v555, 0.5
    %v558 = vadd.f32 %v556, 0.5
    %v559 = vadd.f32 %v557, 0.5
    %v562 = vrot.slane %v288, 7
    %v563 = vrot.slane %v289, 7
    %v566 = vmul.f32 %v558, %v562
    %v567 = vmul.f32 %v559, %v563
    %570 = vrot.lane.b32.xlu0 %v554, 64
    %v571 = vpop.permute.xlu0 %570
    %572 = vrot.lane.b32.xlu0 %v555, 64
    %v573 = vpop.permute.xlu0 %572
    %v576 = vmul.f32 %v558, %v571
    %v577 = vmul.f32 %v559, %v573
    %580 = vrot.lane.b32.xlu0 %v576, 32
    %v581 = vpop.permute.xlu0 %580
    %582 = vrot.lane.b32.xlu0 %v577, 32
    %v583 = vpop.permute.xlu0 %582
    %v586 = vadd.f32 %v566, %v581
    %v587 = vadd.f32 %v567, %v583
    %v588 = vtanh.pop %v586
    %v589 = vtanh.pop %v587
    %592 = vrot.lane.b32.xlu0 %v588, 64
    %v593 = vpop.permute.xlu0 %592
    %594 = vrot.lane.b32.xlu0 %v589, 64
    %v595 = vpop.permute.xlu0 %594
    %v598 = vmul.f32 %v558, %v593
    %v599 = vmul.f32 %v559, %v595
    %601 = vrot.lane.b32.xlu0 %v477, 32
    %v602 = vpop.permute.xlu0 %601
    %v603 = vsel %vm182, %v602, 0
    %605 = vmatprep.subr.mxu0 0.0
    %606 = vmatpush1.msra.mxu0 0.0
    %607 = vmatprep.subr.mxu0 0.0
    %608 = vmatpush1.msra.mxu0 0.0
    %609 = vmatprep.subr.mxu0 0.0
    %610 = vmatpush1.msra.mxu0 0.0
    %611 = vmatprep.subr.mxu0 0.0
    %612 = vmatpush1.msra.mxu0 0.0
    %613 = vmatprep.subr.mxu0 0.0
    %614 = vmatpush1.msra.mxu0 0.0
    %615 = vmatprep.subr.mxu0 0.0
    %616 = vmatpush1.msra.mxu0 0.0
    %617 = vmatprep.subr.mxu0 0.0
    %618 = vmatpush1.msra.mxu0 0.0
    %619 = vmatprep.subr.mxu0 0.0
    %620 = vmatpush1.msra.mxu0 0.0
    %621 = vmatprep.subr.mxu0 0.0
    %622 = vmatpush1.msra.mxu0 0.0
    %623 = vmatprep.subr.mxu0 0.0
    %624 = vmatpush1.msra.mxu0 0.0
    %625 = vmatprep.subr.mxu0 0.0
    %626 = vmatpush1.msra.mxu0 0.0
    %627 = vmatprep.subr.mxu0 0.0
    %628 = vmatpush1.msra.mxu0 0.0
    %629 = vmatprep.subr.mxu0 0.0
    %630 = vmatpush1.msra.mxu0 %v87
    %631 = vmatprep.subr.mxu0 0.0
    %632 = vmatpush1.msra.mxu0 %v86
    %633 = vmatprep.subr.mxu0 0.0
    %634 = vmatpush1.msra.mxu0 %v85
    %635 = vmatprep.subr.mxu0 0.0
    %636 = vmatpush1.msra.mxu0 %v84
    %637 = vmatprep.subr.mxu0 0.0
    %638 = vmatpush2.msra.mxu0 0.0
    %639 = vmatprep.subr.mxu0 0.0
    %640 = vmatpush2.msra.mxu0 0.0
    %641 = vmatprep.subr.mxu0 0.0
    %642 = vmatpush2.msra.mxu0 0.0
    %643 = vmatprep.subr.mxu0 0.0
    %644 = vmatpush2.msra.mxu0 0.0
    %645 = vmatprep.subr.mxu0 0.0
    %646 = vmatpush2.msra.mxu0 0.0
    %647 = vmatprep.subr.mxu0 0.0
    %648 = vmatpush2.msra.mxu0 0.0
    %649 = vmatprep.subr.mxu0 0.0
    %650 = vmatpush2.msra.mxu0 0.0
    %651 = vmatprep.subr.mxu0 0.0
    %652 = vmatpush2.msra.mxu0 0.0
    %653 = vmatprep.subr.mxu0 0.0
    %654 = vmatpush2.msra.mxu0 0.0
    %655 = vmatprep.subr.mxu0 0.0
    %656 = vmatpush2.msra.mxu0 0.0
    %657 = vmatprep.subr.mxu0 0.0
    %658 = vmatpush2.msra.mxu0 0.0
    %659 = vmatprep.subr.mxu0 0.0
    %660 = vmatpush2.msra.mxu0 0.0
    %661 = vmatprep.subr.mxu0 0.0
    %662 = vmatpush2.msra.mxu0 0.0
    %663 = vmatprep.subr.mxu0 0.0
    %664 = vmatpush2.msra.mxu0 0.0
    %665 = vmatprep.subr.mxu0 0.0
    %666 = vmatpush2.msra.mxu0 0.0
    %667 = vmatprep.subr.mxu0 0.0
    %668 = vmatpush2.msra.mxu0 0.0
    %669 = vmatprep.mubr.f32.mxu0 0.0
    %670 = vmatmul.mubr.f32.gmra.mxu0 %v603
    %v671 = vpop.f32.mrf.mxu0
    %v672 = vadd.f32 0.0, %v671
    %v673 = vpop.f32.mrf.mxu0
    %674 = vdwg.mxu0
    %v677 = vrot.slane %v598, 1
    %v678 = vsel %vm375, %v599, %v677
    %679 = vrot.lane.b32.xlu0 %v678, 32
    %v680 = vpop.permute.xlu0 %679
    %v681 = vsel %vm182, %v680, 0
    %683 = vmatprep.subr.mxu0 0.0
    %684 = vmatpush1.msra.mxu0 0.0
    %685 = vmatprep.subr.mxu0 0.0
    %686 = vmatpush1.msra.mxu0 0.0
    %687 = vmatprep.subr.mxu0 0.0
    %688 = vmatpush1.msra.mxu0 0.0
    %689 = vmatprep.subr.mxu0 0.0
    %690 = vmatpush1.msra.mxu0 0.0
    %691 = vmatprep.subr.mxu0 0.0
    %692 = vmatpush1.msra.mxu0 0.0
    %693 = vmatprep.subr.mxu0 0.0
    %694 = vmatpush1.msra.mxu0 0.0
    %695 = vmatprep.subr.mxu0 0.0
    %696 = vmatpush1.msra.mxu0 0.0
    %697 = vmatprep.subr.mxu0 0.0
    %698 = vmatpush1.msra.mxu0 0.0
    %699 = vmatprep.subr.mxu0 0.0
    %700 = vmatpush1.msra.mxu0 0.0
    %701 = vmatprep.subr.mxu0 0.0
    %702 = vmatpush1.msra.mxu0 0.0
    %703 = vmatprep.subr.mxu0 0.0
    %704 = vmatpush1.msra.mxu0 0.0
    %705 = vmatprep.subr.mxu0 0.0
    %706 = vmatpush1.msra.mxu0 0.0
    %707 = vmatprep.subr.mxu0 0.0
    %708 = vmatpush1.msra.mxu0 %v79
    %709 = vmatprep.subr.mxu0 0.0
    %710 = vmatpush1.msra.mxu0 %v78
    %711 = vmatprep.subr.mxu0 0.0
    %712 = vmatpush1.msra.mxu0 %v77
    %713 = vmatprep.subr.mxu0 0.0
    %714 = vmatpush1.msra.mxu0 %v76
    %715 = vmatprep.subr.mxu0 0.0
    %716 = vmatpush2.msra.mxu0 0.0
    %717 = vmatprep.subr.mxu0 0.0
    %718 = vmatpush2.msra.mxu0 0.0
    %719 = vmatprep.subr.mxu0 0.0
    %720 = vmatpush2.msra.mxu0 0.0
    %721 = vmatprep.subr.mxu0 0.0
    %722 = vmatpush2.msra.mxu0 0.0
    %723 = vmatprep.subr.mxu0 0.0
    %724 = vmatpush2.msra.mxu0 0.0
    %725 = vmatprep.subr.mxu0 0.0
    %726 = vmatpush2.msra.mxu0 0.0
    %727 = vmatprep.subr.mxu0 0.0
    %728 = vmatpush2.msra.mxu0 0.0
    %729 = vmatprep.subr.mxu0 0.0
    %730 = vmatpush2.msra.mxu0 0.0
    %731 = vmatprep.subr.mxu0 0.0
    %732 = vmatpush2.msra.mxu0 0.0
    %733 = vmatprep.subr.mxu0 0.0
    %734 = vmatpush2.msra.mxu0 0.0
    %735 = vmatprep.subr.mxu0 0.0
    %736 = vmatpush2.msra.mxu0 0.0
    %737 = vmatprep.subr.mxu0 0.0
    %738 = vmatpush2.msra.mxu0 0.0
    %739 = vmatprep.subr.mxu0 0.0
    %740 = vmatpush2.msra.mxu0 0.0
    %741 = vmatprep.subr.mxu0 0.0
    %742 = vmatpush2.msra.mxu0 0.0
    %743 = vmatprep.subr.mxu0 0.0
    %744 = vmatpush2.msra.mxu0 0.0
    %745 = vmatprep.subr.mxu0 0.0
    %746 = vmatpush2.msra.mxu0 0.0
    %747 = vmatprep.mubr.f32.mxu0 0.0
    %748 = vmatmul.mubr.f32.gmra.mxu0 %v681
    %v749 = vpop.f32.mrf.mxu0
    %v750 = vadd.f32 %v672, %v749
    %v751 = vpop.f32.mrf.mxu0
    %752 = vdwg.mxu0
    %v753 = vadd.f32 %v750, %v455
    %v754 = vtanh.pop %v753
    %v755 = vmul.f32 %v754, 0.5
    %v756 = vadd.f32 %v755, 0.5
    %v757 = vmul.f32 %v756, %v471
    %759 = vrot.lane.b32.xlu0 %v754, 64
    %v760 = vpop.permute.xlu0 %759
    %v762 = vmul.f32 %v756, %v760
    %764 = vrot.lane.b32.xlu0 %v762, 32
    %v765 = vpop.permute.xlu0 %764
    %v767 = vadd.f32 %v757, %v765
    %v768 = vtanh.pop %v767
    %770 = vrot.lane.b32.xlu0 %v768, 64
    %v771 = vpop.permute.xlu0 %770
    %v773 = vmul.f32 %v756, %v771
    %774 = vmatprep.subr.mxu0 0.0
    %775 = vmatpush1.msra.mxu0 0.0
    %776 = vmatprep.subr.mxu0 0.0
    %777 = vmatpush1.msra.mxu0 0.0
    %778 = vmatprep.subr.mxu0 0.0
    %779 = vmatpush1.msra.mxu0 0.0
    %780 = vmatprep.subr.mxu0 0.0
    %781 = vmatpush1.msra.mxu0 0.0
    %782 = vmatprep.subr.mxu0 0.0
    %783 = vmatpush1.msra.mxu0 0.0
    %784 = vmatprep.subr.mxu0 0.0
    %785 = vmatpush1.msra.mxu0 0.0
    %786 = vmatprep.subr.mxu0 0.0
    %787 = vmatpush1.msra.mxu0 0.0
    %788 = vmatprep.subr.mxu0 0.0
    %789 = vmatpush1.msra.mxu0 0.0
    %790 = vmatprep.subr.mxu0 0.0
    %791 = vmatpush1.msra.mxu0 0.0
    %792 = vmatprep.subr.mxu0 0.0
    %793 = vmatpush1.msra.mxu0 0.0
    %794 = vmatprep.subr.mxu0 0.0
    %795 = vmatpush1.msra.mxu0 0.0
    %796 = vmatprep.subr.mxu0 0.0
    %797 = vmatpush1.msra.mxu0 0.0
    %798 = vmatprep.subr.mxu0 0.0
    %799 = vmatpush1.msra.mxu0 %v83
    %800 = vmatprep.subr.mxu0 0.0
    %801 = vmatpush1.msra.mxu0 %v82
    %802 = vmatprep.subr.mxu0 0.0
    %803 = vmatpush1.msra.mxu0 %v81
    %804 = vmatprep.subr.mxu0 0.0
    %805 = vmatpush1.msra.mxu0 %v80
    %806 = vmatprep.subr.mxu0 0.0
    %807 = vmatpush2.msra.mxu0 0.0
    %808 = vmatprep.subr.mxu0 0.0
    %809 = vmatpush2.msra.mxu0 0.0
    %810 = vmatprep.subr.mxu0 0.0
    %811 = vmatpush2.msra.mxu0 0.0
    %812 = vmatprep.subr.mxu0 0.0
    %813 = vmatpush2.msra.mxu0 0.0
    %814 = vmatprep.subr.mxu0 0.0
    %815 = vmatpush2.msra.mxu0 0.0
    %816 = vmatprep.subr.mxu0 0.0
    %817 = vmatpush2.msra.mxu0 0.0
    %818 = vmatprep.subr.mxu0 0.0
    %819 = vmatpush2.msra.mxu0 0.0
    %820 = vmatprep.subr.mxu0 0.0
    %821 = vmatpush2.msra.mxu0 0.0
    %822 = vmatprep.subr.mxu0 0.0
    %823 = vmatpush2.msra.mxu0 0.0
    %824 = vmatprep.subr.mxu0 0.0
    %825 = vmatpush2.msra.mxu0 0.0
    %826 = vmatprep.subr.mxu0 0.0
    %827 = vmatpush2.msra.mxu0 0.0
    %828 = vmatprep.subr.mxu0 0.0
    %829 = vmatpush2.msra.mxu0 0.0
    %830 = vmatprep.subr.mxu0 0.0
    %831 = vmatpush2.msra.mxu0 0.0
    %832 = vmatprep.subr.mxu0 0.0
    %833 = vmatpush2.msra.mxu0 0.0
    %834 = vmatprep.subr.mxu0 0.0
    %835 = vmatpush2.msra.mxu0 0.0
    %836 = vmatprep.subr.mxu0 0.0
    %837 = vmatpush2.msra.mxu0 0.0
    %838 = vmatprep.mubr.f32.mxu0 0.0
    %839 = vmatmul.mubr.f32.gmra.mxu0 %v681
    %v840 = vpop.f32.mrf.mxu0
    %v841 = vadd.f32 0.0, %v840
    %v842 = vpop.f32.mrf.mxu0
    %843 = vdwg.mxu0
    %v845 = vrot.slane %v841, 6
    %v846 = vrot.slane %v841, 7
    %v849 = vadd.f32 %v174, %v845
    %v850 = vadd.f32 %v179, %v846
    %v851 = vtanh.pop %v849
    %v852 = vtanh.pop %v850
    %v853 = vmul.f32 %v851, 0.5
    %v854 = vmul.f32 %v852, 0.5
    %v855 = vadd.f32 %v853, 0.5
    %v856 = vadd.f32 %v854, 0.5
    %v859 = vrot.slane %v586, 7
    %v860 = vrot.slane %v587, 7
    %v863 = vmul.f32 %v855, %v859
    %v864 = vmul.f32 %v856, %v860
    %867 = vrot.lane.b32.xlu0 %v851, 64
    %v868 = vpop.permute.xlu0 %867
    %869 = vrot.lane.b32.xlu0 %v852, 64
    %v870 = vpop.permute.xlu0 %869
    %v873 = vmul.f32 %v855, %v868
    %v874 = vmul.f32 %v856, %v870
    %877 = vrot.lane.b32.xlu0 %v873, 32
    %v878 = vpop.permute.xlu0 %877
    %879 = vrot.lane.b32.xlu0 %v874, 32
    %v880 = vpop.permute.xlu0 %879
    %v883 = vadd.f32 %v863, %v878
    %v884 = vadd.f32 %v864, %v880
    %v885 = vtanh.pop %v883
    %v886 = vtanh.pop %v884
    %889 = vrot.lane.b32.xlu0 %v885, 64
    %v890 = vpop.permute.xlu0 %889
    %891 = vrot.lane.b32.xlu0 %v886, 64
    %v892 = vpop.permute.xlu0 %891
    %v895 = vmul.f32 %v855, %v890
    %v896 = vmul.f32 %v856, %v892
    %898 = vrot.lane.b32.xlu0 %v773, 32
    %v899 = vpop.permute.xlu0 %898
    %v900 = vsel %vm182, %v899, 0
    %902 = vmatprep.subr.mxu0 0.0
    %903 = vmatpush1.msra.mxu0 0.0
    %904 = vmatprep.subr.mxu0 0.0
    %905 = vmatpush1.msra.mxu0 0.0
    %906 = vmatprep.subr.mxu0 0.0
    %907 = vmatpush1.msra.mxu0 0.0
    %908 = vmatprep.subr.mxu0 0.0
    %909 = vmatpush1.msra.mxu0 0.0
    %910 = vmatprep.subr.mxu0 0.0
    %911 = vmatpush1.msra.mxu0 0.0
    %912 = vmatprep.subr.mxu0 0.0
    %913 = vmatpush1.msra.mxu0 0.0
    %914 = vmatprep.subr.mxu0 0.0
    %915 = vmatpush1.msra.mxu0 0.0
    %916 = vmatprep.subr.mxu0 0.0
    %917 = vmatpush1.msra.mxu0 0.0
    %918 = vmatprep.subr.mxu0 0.0
    %919 = vmatpush1.msra.mxu0 0.0
    %920 = vmatprep.subr.mxu0 0.0
    %921 = vmatpush1.msra.mxu0 0.0
    %922 = vmatprep.subr.mxu0 0.0
    %923 = vmatpush1.msra.mxu0 0.0
    %924 = vmatprep.subr.mxu0 0.0
    %925 = vmatpush1.msra.mxu0 0.0
    %926 = vmatprep.subr.mxu0 0.0
    %927 = vmatpush1.msra.mxu0 %v87
    %928 = vmatprep.subr.mxu0 0.0
    %929 = vmatpush1.msra.mxu0 %v86
    %930 = vmatprep.subr.mxu0 0.0
    %931 = vmatpush1.msra.mxu0 %v85
    %932 = vmatprep.subr.mxu0 0.0
    %933 = vmatpush1.msra.mxu0 %v84
    %934 = vmatprep.subr.mxu0 0.0
    %935 = vmatpush2.msra.mxu0 0.0
    %936 = vmatprep.subr.mxu0 0.0
    %937 = vmatpush2.msra.mxu0 0.0
    %938 = vmatprep.subr.mxu0 0.0
    %939 = vmatpush2.msra.mxu0 0.0
    %940 = vmatprep.subr.mxu0 0.0
    %941 = vmatpush2.msra.mxu0 0.0
    %942 = vmatprep.subr.mxu0 0.0
    %943 = vmatpush2.msra.mxu0 0.0
    %944 = vmatprep.subr.mxu0 0.0
    %945 = vmatpush2.msra.mxu0 0.0
    %946 = vmatprep.subr.mxu0 0.0
    %947 = vmatpush2.msra.mxu0 0.0
    %948 = vmatprep.subr.mxu0 0.0
    %949 = vmatpush2.msra.mxu0 0.0
    %950 = vmatprep.subr.mxu0 0.0
    %951 = vmatpush2.msra.mxu0 0.0
    %952 = vmatprep.subr.mxu0 0.0
    %953 = vmatpush2.msra.mxu0 0.0
    %954 = vmatprep.subr.mxu0 0.0
    %955 = vmatpush2.msra.mxu0 0.0
    %956 = vmatprep.subr.mxu0 0.0
    %957 = vmatpush2.msra.mxu0 0.0
    %958 = vmatprep.subr.mxu0 0.0
    %959 = vmatpush2.msra.mxu0 0.0
    %960 = vmatprep.subr.mxu0 0.0
    %961 = vmatpush2.msra.mxu0 0.0
    %962 = vmatprep.subr.mxu0 0.0
    %963 = vmatpush2.msra.mxu0 0.0
    %964 = vmatprep.subr.mxu0 0.0
    %965 = vmatpush2.msra.mxu0 0.0
    %966 = vmatprep.mubr.f32.mxu0 0.0
    %967 = vmatmul.mubr.f32.gmra.mxu0 %v900
    %v968 = vpop.f32.mrf.mxu0
    %v969 = vadd.f32 0.0, %v968
    %v970 = vpop.f32.mrf.mxu0
    %971 = vdwg.mxu0
    %v974 = vrot.slane %v895, 2
    %v975 = vrot.slane %v896, 1
    %v976 = vsel %vm375, %v975, %v974
    %977 = vrot.lane.b32.xlu0 %v976, 32
    %v978 = vpop.permute.xlu0 %977
    %v979 = vsel %vm182, %v978, 0
    %981 = vmatprep.subr.mxu0 0.0
    %982 = vmatpush1.msra.mxu0 0.0
    %983 = vmatprep.subr.mxu0 0.0
    %984 = vmatpush1.msra.mxu0 0.0
    %985 = vmatprep.subr.mxu0 0.0
    %986 = vmatpush1.msra.mxu0 0.0
    %987 = vmatprep.subr.mxu0 0.0
    %988 = vmatpush1.msra.mxu0 0.0
    %989 = vmatprep.subr.mxu0 0.0
    %990 = vmatpush1.msra.mxu0 0.0
    %991 = vmatprep.subr.mxu0 0.0
    %992 = vmatpush1.msra.mxu0 0.0
    %993 = vmatprep.subr.mxu0 0.0
    %994 = vmatpush1.msra.mxu0 0.0
    %995 = vmatprep.subr.mxu0 0.0
    %996 = vmatpush1.msra.mxu0 0.0
    %997 = vmatprep.subr.mxu0 0.0
    %998 = vmatpush1.msra.mxu0 0.0
    %999 = vmatprep.subr.mxu0 0.0
    %1000 = vmatpush1.msra.mxu0 0.0
    %1001 = vmatprep.subr.mxu0 0.0
    %1002 = vmatpush1.msra.mxu0 0.0
    %1003 = vmatprep.subr.mxu0 0.0
    %1004 = vmatpush1.msra.mxu0 0.0
    %1005 = vmatprep.subr.mxu0 0.0
    %1006 = vmatpush1.msra.mxu0 %v79
    %1007 = vmatprep.subr.mxu0 0.0
    %1008 = vmatpush1.msra.mxu0 %v78
    %1009 = vmatprep.subr.mxu0 0.0
    %1010 = vmatpush1.msra.mxu0 %v77
    %1011 = vmatprep.subr.mxu0 0.0
    %1012 = vmatpush1.msra.mxu0 %v76
    %1013 = vmatprep.subr.mxu0 0.0
    %1014 = vmatpush2.msra.mxu0 0.0
    %1015 = vmatprep.subr.mxu0 0.0
    %1016 = vmatpush2.msra.mxu0 0.0
    %1017 = vmatprep.subr.mxu0 0.0
    %1018 = vmatpush2.msra.mxu0 0.0
    %1019 = vmatprep.subr.mxu0 0.0
    %1020 = vmatpush2.msra.mxu0 0.0
    %1021 = vmatprep.subr.mxu0 0.0
    %1022 = vmatpush2.msra.mxu0 0.0
    %1023 = vmatprep.subr.mxu0 0.0
    %1024 = vmatpush2.msra.mxu0 0.0
    %1025 = vmatprep.subr.mxu0 0.0
    %1026 = vmatpush2.msra.mxu0 0.0
    %1027 = vmatprep.subr.mxu0 0.0
    %1028 = vmatpush2.msra.mxu0 0.0
    %1029 = vmatprep.subr.mxu0 0.0
    %1030 = vmatpush2.msra.mxu0 0.0
    %1031 = vmatprep.subr.mxu0 0.0
    %1032 = vmatpush2.msra.mxu0 0.0
    %1033 = vmatprep.subr.mxu0 0.0
    %1034 = vmatpush2.msra.mxu0 0.0
    %1035 = vmatprep.subr.mxu0 0.0
    %1036 = vmatpush2.msra.mxu0 0.0
    %1037 = vmatprep.subr.mxu0 0.0
    %1038 = vmatpush2.msra.mxu0 0.0
    %1039 = vmatprep.subr.mxu0 0.0
    %1040 = vmatpush2.msra.mxu0 0.0
    %1041 = vmatprep.subr.mxu0 0.0
    %1042 = vmatpush2.msra.mxu0 0.0
    %1043 = vmatprep.subr.mxu0 0.0
    %1044 = vmatpush2.msra.mxu0 0.0
    %1045 = vmatprep.mubr.f32.mxu0 0.0
    %1046 = vmatmul.mubr.f32.gmra.mxu0 %v979
    %v1047 = vpop.f32.mrf.mxu0
    %v1048 = vadd.f32 %v969, %v1047
    %v1049 = vpop.f32.mrf.mxu0
    %1050 = vdwg.mxu0
    %v1051 = vadd.f32 %v1048, %v455
    %v1052 = vtanh.pop %v1051
    %v1053 = vmul.f32 %v1052, 0.5
    %v1054 = vadd.f32 %v1053, 0.5
    %v1055 = vmul.f32 %v1054, %v767
    %1057 = vrot.lane.b32.xlu0 %v1052, 64
    %v1058 = vpop.permute.xlu0 %1057
    %v1060 = vmul.f32 %v1054, %v1058
    %1062 = vrot.lane.b32.xlu0 %v1060, 32
    %v1063 = vpop.permute.xlu0 %1062
    %v1065 = vadd.f32 %v1055, %v1063
    %v1066 = vtanh.pop %v1065
    %1068 = vrot.lane.b32.xlu0 %v1066, 64
    %v1069 = vpop.permute.xlu0 %1068
    %v1071 = vmul.f32 %v1054, %v1069
    %1072 = vmatprep.subr.mxu0 0.0
    %1073 = vmatpush1.msra.mxu0 0.0
    %1074 = vmatprep.subr.mxu0 0.0
    %1075 = vmatpush1.msra.mxu0 0.0
    %1076 = vmatprep.subr.mxu0 0.0
    %1077 = vmatpush1.msra.mxu0 0.0
    %1078 = vmatprep.subr.mxu0 0.0
    %1079 = vmatpush1.msra.mxu0 0.0
    %1080 = vmatprep.subr.mxu0 0.0
    %1081 = vmatpush1.msra.mxu0 0.0
    %1082 = vmatprep.subr.mxu0 0.0
    %1083 = vmatpush1.msra.mxu0 0.0
    %1084 = vmatprep.subr.mxu0 0.0
    %1085 = vmatpush1.msra.mxu0 0.0
    %1086 = vmatprep.subr.mxu0 0.0
    %1087 = vmatpush1.msra.mxu0 0.0
    %1088 = vmatprep.subr.mxu0 0.0
    %1089 = vmatpush1.msra.mxu0 0.0
    %1090 = vmatprep.subr.mxu0 0.0
    %1091 = vmatpush1.msra.mxu0 0.0
    %1092 = vmatprep.subr.mxu0 0.0
    %1093 = vmatpush1.msra.mxu0 0.0
    %1094 = vmatprep.subr.mxu0 0.0
    %1095 = vmatpush1.msra.mxu0 0.0
    %1096 = vmatprep.subr.mxu0 0.0
    %1097 = vmatpush1.msra.mxu0 %v83
    %1098 = vmatprep.subr.mxu0 0.0
    %1099 = vmatpush1.msra.mxu0 %v82
    %1100 = vmatprep.subr.mxu0 0.0
    %1101 = vmatpush1.msra.mxu0 %v81
    %1102 = vmatprep.subr.mxu0 0.0
    %1103 = vmatpush1.msra.mxu0 %v80
    %1104 = vmatprep.subr.mxu0 0.0
    %1105 = vmatpush2.msra.mxu0 0.0
    %1106 = vmatprep.subr.mxu0 0.0
    %1107 = vmatpush2.msra.mxu0 0.0
    %1108 = vmatprep.subr.mxu0 0.0
    %1109 = vmatpush2.msra.mxu0 0.0
    %1110 = vmatprep.subr.mxu0 0.0
    %1111 = vmatpush2.msra.mxu0 0.0
    %1112 = vmatprep.subr.mxu0 0.0
    %1113 = vmatpush2.msra.mxu0 0.0
    %1114 = vmatprep.subr.mxu0 0.0
    %1115 = vmatpush2.msra.mxu0 0.0
    %1116 = vmatprep.subr.mxu0 0.0
    %1117 = vmatpush2.msra.mxu0 0.0
    %1118 = vmatprep.subr.mxu0 0.0
    %1119 = vmatpush2.msra.mxu0 0.0
    %1120 = vmatprep.subr.mxu0 0.0
    %1121 = vmatpush2.msra.mxu0 0.0
    %1122 = vmatprep.subr.mxu0 0.0
    %1123 = vmatpush2.msra.mxu0 0.0
    %1124 = vmatprep.subr.mxu0 0.0
    %1125 = vmatpush2.msra.mxu0 0.0
    %1126 = vmatprep.subr.mxu0 0.0
    %1127 = vmatpush2.msra.mxu0 0.0
    %1128 = vmatprep.subr.mxu0 0.0
    %1129 = vmatpush2.msra.mxu0 0.0
    %1130 = vmatprep.subr.mxu0 0.0
    %1131 = vmatpush2.msra.mxu0 0.0
    %1132 = vmatprep.subr.mxu0 0.0
    %1133 = vmatpush2.msra.mxu0 0.0
    %1134 = vmatprep.subr.mxu0 0.0
    %1135 = vmatpush2.msra.mxu0 0.0
    %1136 = vmatprep.mubr.f32.mxu0 0.0
    %1137 = vmatmul.mubr.f32.gmra.mxu0 %v979
    %v1138 = vpop.f32.mrf.mxu0
    %v1139 = vadd.f32 0.0, %v1138
    %v1140 = vpop.f32.mrf.mxu0
    %1141 = vdwg.mxu0
    %v1143 = vrot.slane %v1139, 5
    %v1144 = vrot.slane %v1139, 6
    %v1147 = vadd.f32 %v174, %v1143
    %v1148 = vadd.f32 %v179, %v1144
    %v1149 = vtanh.pop %v1147
    %v1150 = vtanh.pop %v1148
    %v1151 = vmul.f32 %v1149, 0.5
    %v1152 = vmul.f32 %v1150, 0.5
    %v1153 = vadd.f32 %v1151, 0.5
    %v1154 = vadd.f32 %v1152, 0.5
    %v1157 = vrot.slane %v883, 7
    %v1158 = vrot.slane %v884, 7
    %v1161 = vmul.f32 %v1153, %v1157
    %v1162 = vmul.f32 %v1154, %v1158
    %1165 = vrot.lane.b32.xlu0 %v1149, 64
    %v1166 = vpop.permute.xlu0 %1165
    %1167 = vrot.lane.b32.xlu0 %v1150, 64
    %v1168 = vpop.permute.xlu0 %1167
    %v1171 = vmul.f32 %v1153, %v1166
    %v1172 = vmul.f32 %v1154, %v1168
    %1175 = vrot.lane.b32.xlu0 %v1171, 32
    %v1176 = vpop.permute.xlu0 %1175
    %1177 = vrot.lane.b32.xlu0 %v1172, 32
    %v1178 = vpop.permute.xlu0 %1177
    %v1181 = vadd.f32 %v1161, %v1176
    %v1182 = vadd.f32 %v1162, %v1178
    %v1183 = vtanh.pop %v1181
    %v1184 = vtanh.pop %v1182
    %1187 = vrot.lane.b32.xlu0 %v1183, 64
    %v1188 = vpop.permute.xlu0 %1187
    %1189 = vrot.lane.b32.xlu0 %v1184, 64
    %v1190 = vpop.permute.xlu0 %1189
    %v1193 = vmul.f32 %v1153, %v1188
    %v1194 = vmul.f32 %v1154, %v1190
    %1196 = vrot.lane.b32.xlu0 %v1071, 32
    %v1197 = vpop.permute.xlu0 %1196
    %v1198 = vsel %vm182, %v1197, 0
    %1200 = vmatprep.subr.mxu0 0.0
    %1201 = vmatpush1.msra.mxu0 0.0
    %1202 = vmatprep.subr.mxu0 0.0
    %1203 = vmatpush1.msra.mxu0 0.0
    %1204 = vmatprep.subr.mxu0 0.0
    %1205 = vmatpush1.msra.mxu0 0.0
    %1206 = vmatprep.subr.mxu0 0.0
    %1207 = vmatpush1.msra.mxu0 0.0
    %1208 = vmatprep.subr.mxu0 0.0
    %1209 = vmatpush1.msra.mxu0 0.0
    %1210 = vmatprep.subr.mxu0 0.0
    %1211 = vmatpush1.msra.mxu0 0.0
    %1212 = vmatprep.subr.mxu0 0.0
    %1213 = vmatpush1.msra.mxu0 0.0
    %1214 = vmatprep.subr.mxu0 0.0
    %1215 = vmatpush1.msra.mxu0 0.0
    %1216 = vmatprep.subr.mxu0 0.0
    %1217 = vmatpush1.msra.mxu0 0.0
    %1218 = vmatprep.subr.mxu0 0.0
    %1219 = vmatpush1.msra.mxu0 0.0
    %1220 = vmatprep.subr.mxu0 0.0
    %1221 = vmatpush1.msra.mxu0 0.0
    %1222 = vmatprep.subr.mxu0 0.0
    %1223 = vmatpush1.msra.mxu0 0.0
    %1224 = vmatprep.subr.mxu0 0.0
    %1225 = vmatpush1.msra.mxu0 %v87
    %1226 = vmatprep.subr.mxu0 0.0
    %1227 = vmatpush1.msra.mxu0 %v86
    %1228 = vmatprep.subr.mxu0 0.0
    %1229 = vmatpush1.msra.mxu0 %v85
    %1230 = vmatprep.subr.mxu0 0.0
    %1231 = vmatpush1.msra.mxu0 %v84
    %1232 = vmatprep.subr.mxu0 0.0
    %1233 = vmatpush2.msra.mxu0 0.0
    %1234 = vmatprep.subr.mxu0 0.0
    %1235 = vmatpush2.msra.mxu0 0.0
    %1236 = vmatprep.subr.mxu0 0.0
    %1237 = vmatpush2.msra.mxu0 0.0
    %1238 = vmatprep.subr.mxu0 0.0
    %1239 = vmatpush2.msra.mxu0 0.0
    %1240 = vmatprep.subr.mxu0 0.0
    %1241 = vmatpush2.msra.mxu0 0.0
    %1242 = vmatprep.subr.mxu0 0.0
    %1243 = vmatpush2.msra.mxu0 0.0
    %1244 = vmatprep.subr.mxu0 0.0
    %1245 = vmatpush2.msra.mxu0 0.0
    %1246 = vmatprep.subr.mxu0 0.0
    %1247 = vmatpush2.msra.mxu0 0.0
    %1248 = vmatprep.subr.mxu0 0.0
    %1249 = vmatpush2.msra.mxu0 0.0
    %1250 = vmatprep.subr.mxu0 0.0
    %1251 = vmatpush2.msra.mxu0 0.0
    %1252 = vmatprep.subr.mxu0 0.0
    %1253 = vmatpush2.msra.mxu0 0.0
    %1254 = vmatprep.subr.mxu0 0.0
    %1255 = vmatpush2.msra.mxu0 0.0
    %1256 = vmatprep.subr.mxu0 0.0
    %1257 = vmatpush2.msra.mxu0 0.0
    %1258 = vmatprep.subr.mxu0 0.0
    %1259 = vmatpush2.msra.mxu0 0.0
    %1260 = vmatprep.subr.mxu0 0.0
    %1261 = vmatpush2.msra.mxu0 0.0
    %1262 = vmatprep.subr.mxu0 0.0
    %1263 = vmatpush2.msra.mxu0 0.0
    %1264 = vmatprep.mubr.f32.mxu0 0.0
    %1265 = vmatmul.mubr.f32.gmra.mxu0 %v1198
    %v1266 = vpop.f32.mrf.mxu0
    %v1267 = vadd.f32 0.0, %v1266
    %v1268 = vpop.f32.mrf.mxu0
    %1269 = vdwg.mxu0
    %v1272 = vrot.slane %v1193, 3
    %v1273 = vrot.slane %v1194, 2
    %v1274 = vsel %vm375, %v1273, %v1272
    %1275 = vrot.lane.b32.xlu0 %v1274, 32
    %v1276 = vpop.permute.xlu0 %1275
    %v1277 = vsel %vm182, %v1276, 0
    %1279 = vmatprep.subr.mxu0 0.0
    %1280 = vmatpush1.msra.mxu0 0.0
    %1281 = vmatprep.subr.mxu0 0.0
    %1282 = vmatpush1.msra.mxu0 0.0
    %1283 = vmatprep.subr.mxu0 0.0
    %1284 = vmatpush1.msra.mxu0 0.0
    %1285 = vmatprep.subr.mxu0 0.0
    %1286 = vmatpush1.msra.mxu0 0.0
    %1287 = vmatprep.subr.mxu0 0.0
    %1288 = vmatpush1.msra.mxu0 0.0
    %1289 = vmatprep.subr.mxu0 0.0
    %1290 = vmatpush1.msra.mxu0 0.0
    %1291 = vmatprep.subr.mxu0 0.0
    %1292 = vmatpush1.msra.mxu0 0.0
    %1293 = vmatprep.subr.mxu0 0.0
    %1294 = vmatpush1.msra.mxu0 0.0
    %1295 = vmatprep.subr.mxu0 0.0
    %1296 = vmatpush1.msra.mxu0 0.0
    %1297 = vmatprep.subr.mxu0 0.0
    %1298 = vmatpush1.msra.mxu0 0.0
    %1299 = vmatprep.subr.mxu0 0.0
    %1300 = vmatpush1.msra.mxu0 0.0
    %1301 = vmatprep.subr.mxu0 0.0
    %1302 = vmatpush1.msra.mxu0 0.0
    %1303 = vmatprep.subr.mxu0 0.0
    %1304 = vmatpush1.msra.mxu0 %v79
    %1305 = vmatprep.subr.mxu0 0.0
    %1306 = vmatpush1.msra.mxu0 %v78
    %1307 = vmatprep.subr.mxu0 0.0
    %1308 = vmatpush1.msra.mxu0 %v77
    %1309 = vmatprep.subr.mxu0 0.0
    %1310 = vmatpush1.msra.mxu0 %v76
    %1311 = vmatprep.subr.mxu0 0.0
    %1312 = vmatpush2.msra.mxu0 0.0
    %1313 = vmatprep.subr.mxu0 0.0
    %1314 = vmatpush2.msra.mxu0 0.0
    %1315 = vmatprep.subr.mxu0 0.0
    %1316 = vmatpush2.msra.mxu0 0.0
    %1317 = vmatprep.subr.mxu0 0.0
    %1318 = vmatpush2.msra.mxu0 0.0
    %1319 = vmatprep.subr.mxu0 0.0
    %1320 = vmatpush2.msra.mxu0 0.0
    %1321 = vmatprep.subr.mxu0 0.0
    %1322 = vmatpush2.msra.mxu0 0.0
    %1323 = vmatprep.subr.mxu0 0.0
    %1324 = vmatpush2.msra.mxu0 0.0
    %1325 = vmatprep.subr.mxu0 0.0
    %1326 = vmatpush2.msra.mxu0 0.0
    %1327 = vmatprep.subr.mxu0 0.0
    %1328 = vmatpush2.msra.mxu0 0.0
    %1329 = vmatprep.subr.mxu0 0.0
    %1330 = vmatpush2.msra.mxu0 0.0
    %1331 = vmatprep.subr.mxu0 0.0
    %1332 = vmatpush2.msra.mxu0 0.0
    %1333 = vmatprep.subr.mxu0 0.0
    %1334 = vmatpush2.msra.mxu0 0.0
    %1335 = vmatprep.subr.mxu0 0.0
    %1336 = vmatpush2.msra.mxu0 0.0
    %1337 = vmatprep.subr.mxu0 0.0
    %1338 = vmatpush2.msra.mxu0 0.0
    %1339 = vmatprep.subr.mxu0 0.0
    %1340 = vmatpush2.msra.mxu0 0.0
    %1341 = vmatprep.subr.mxu0 0.0
    %1342 = vmatpush2.msra.mxu0 0.0
    %1343 = vmatprep.mubr.f32.mxu0 0.0
    %1344 = vmatmul.mubr.f32.gmra.mxu0 %v1277
    %v1345 = vpop.f32.mrf.mxu0
    %v1346 = vadd.f32 %v1267, %v1345
    %v1347 = vpop.f32.mrf.mxu0
    %1348 = vdwg.mxu0
    %v1349 = vadd.f32 %v1346, %v455
    %v1350 = vtanh.pop %v1349
    %v1351 = vmul.f32 %v1350, 0.5
    %v1352 = vadd.f32 %v1351, 0.5
    %v1353 = vmul.f32 %v1352, %v1065
    %1355 = vrot.lane.b32.xlu0 %v1350, 64
    %v1356 = vpop.permute.xlu0 %1355
    %v1358 = vmul.f32 %v1352, %v1356
    %1360 = vrot.lane.b32.xlu0 %v1358, 32
    %v1361 = vpop.permute.xlu0 %1360
    %v1363 = vadd.f32 %v1353, %v1361
    %v1364 = vtanh.pop %v1363
    %1366 = vrot.lane.b32.xlu0 %v1364, 64
    %v1367 = vpop.permute.xlu0 %1366
    %v1369 = vmul.f32 %v1352, %v1367
    %1370 = vmatprep.subr.mxu0 0.0
    %1371 = vmatpush1.msra.mxu0 0.0
    %1372 = vmatprep.subr.mxu0 0.0
    %1373 = vmatpush1.msra.mxu0 0.0
    %1374 = vmatprep.subr.mxu0 0.0
    %1375 = vmatpush1.msra.mxu0 0.0
    %1376 = vmatprep.subr.mxu0 0.0
    %1377 = vmatpush1.msra.mxu0 0.0
    %1378 = vmatprep.subr.mxu0 0.0
    %1379 = vmatpush1.msra.mxu0 0.0
    %1380 = vmatprep.subr.mxu0 0.0
    %1381 = vmatpush1.msra.mxu0 0.0
    %1382 = vmatprep.subr.mxu0 0.0
    %1383 = vmatpush1.msra.mxu0 0.0
    %1384 = vmatprep.subr.mxu0 0.0
    %1385 = vmatpush1.msra.mxu0 0.0
    %1386 = vmatprep.subr.mxu0 0.0
    %1387 = vmatpush1.msra.mxu0 0.0
    %1388 = vmatprep.subr.mxu0 0.0
    %1389 = vmatpush1.msra.mxu0 0.0
    %1390 = vmatprep.subr.mxu0 0.0
    %1391 = vmatpush1.msra.mxu0 0.0
    %1392 = vmatprep.subr.mxu0 0.0
    %1393 = vmatpush1.msra.mxu0 0.0
    %1394 = vmatprep.subr.mxu0 0.0
    %1395 = vmatpush1.msra.mxu0 %v83
    %1396 = vmatprep.subr.mxu0 0.0
    %1397 = vmatpush1.msra.mxu0 %v82
    %1398 = vmatprep.subr.mxu0 0.0
    %1399 = vmatpush1.msra.mxu0 %v81
    %1400 = vmatprep.subr.mxu0 0.0
    %1401 = vmatpush1.msra.mxu0 %v80
    %1402 = vmatprep.subr.mxu0 0.0
    %1403 = vmatpush2.msra.mxu0 0.0
    %1404 = vmatprep.subr.mxu0 0.0
    %1405 = vmatpush2.msra.mxu0 0.0
    %1406 = vmatprep.subr.mxu0 0.0
    %1407 = vmatpush2.msra.mxu0 0.0
    %1408 = vmatprep.subr.mxu0 0.0
    %1409 = vmatpush2.msra.mxu0 0.0
    %1410 = vmatprep.subr.mxu0 0.0
    %1411 = vmatpush2.msra.mxu0 0.0
    %1412 = vmatprep.subr.mxu0 0.0
    %1413 = vmatpush2.msra.mxu0 0.0
    %1414 = vmatprep.subr.mxu0 0.0
    %1415 = vmatpush2.msra.mxu0 0.0
    %1416 = vmatprep.subr.mxu0 0.0
    %1417 = vmatpush2.msra.mxu0 0.0
    %1418 = vmatprep.subr.mxu0 0.0
    %1419 = vmatpush2.msra.mxu0 0.0
    %1420 = vmatprep.subr.mxu0 0.0
    %1421 = vmatpush2.msra.mxu0 0.0
    %1422 = vmatprep.subr.mxu0 0.0
    %1423 = vmatpush2.msra.mxu0 0.0
    %1424 = vmatprep.subr.mxu0 0.0
    %1425 = vmatpush2.msra.mxu0 0.0
    %1426 = vmatprep.subr.mxu0 0.0
    %1427 = vmatpush2.msra.mxu0 0.0
    %1428 = vmatprep.subr.mxu0 0.0
    %1429 = vmatpush2.msra.mxu0 0.0
    %1430 = vmatprep.subr.mxu0 0.0
    %1431 = vmatpush2.msra.mxu0 0.0
    %1432 = vmatprep.subr.mxu0 0.0
    %1433 = vmatpush2.msra.mxu0 0.0
    %1434 = vmatprep.mubr.f32.mxu0 0.0
    %1435 = vmatmul.mubr.f32.gmra.mxu0 %v1277
    %v1436 = vpop.f32.mrf.mxu0
    %v1437 = vadd.f32 0.0, %v1436
    %v1438 = vpop.f32.mrf.mxu0
    %1439 = vdwg.mxu0
    %v1441 = vrot.slane %v1437, 4
    %v1442 = vrot.slane %v1437, 5
    %v1445 = vadd.f32 %v174, %v1441
    %v1446 = vadd.f32 %v179, %v1442
    %v1447 = vtanh.pop %v1445
    %v1448 = vtanh.pop %v1446
    %v1449 = vmul.f32 %v1447, 0.5
    %v1450 = vmul.f32 %v1448, 0.5
    %v1451 = vadd.f32 %v1449, 0.5
    %v1452 = vadd.f32 %v1450, 0.5
    %v1455 = vrot.slane %v1181, 7
    %v1456 = vrot.slane %v1182, 7
    %v1459 = vmul.f32 %v1451, %v1455
    %v1460 = vmul.f32 %v1452, %v1456
    %1463 = vrot.lane.b32.xlu0 %v1447, 64
    %v1464 = vpop.permute.xlu0 %1463
    %1465 = vrot.lane.b32.xlu0 %v1448, 64
    %v1466 = vpop.permute.xlu0 %1465
    %v1469 = vmul.f32 %v1451, %v1464
    %v1470 = vmul.f32 %v1452, %v1466
    %1473 = vrot.lane.b32.xlu0 %v1469, 32
    %v1474 = vpop.permute.xlu0 %1473
    %1475 = vrot.lane.b32.xlu0 %v1470, 32
    %v1476 = vpop.permute.xlu0 %1475
    %v1479 = vadd.f32 %v1459, %v1474
    %v1480 = vadd.f32 %v1460, %v1476
    %v1481 = vtanh.pop %v1479
    %v1482 = vtanh.pop %v1480
    %1485 = vrot.lane.b32.xlu0 %v1481, 64
    %v1486 = vpop.permute.xlu0 %1485
    %1487 = vrot.lane.b32.xlu0 %v1482, 64
    %v1488 = vpop.permute.xlu0 %1487
    %v1491 = vmul.f32 %v1451, %v1486
    %v1492 = vmul.f32 %v1452, %v1488
    %1494 = vrot.lane.b32.xlu0 %v1369, 32
    %v1495 = vpop.permute.xlu0 %1494
    %v1496 = vsel %vm182, %v1495, 0
    %1498 = vmatprep.subr.mxu0 0.0
    %1499 = vmatpush1.msra.mxu0 0.0
    %1500 = vmatprep.subr.mxu0 0.0
    %1501 = vmatpush1.msra.mxu0 0.0
    %1502 = vmatprep.subr.mxu0 0.0
    %1503 = vmatpush1.msra.mxu0 0.0
    %1504 = vmatprep.subr.mxu0 0.0
    %1505 = vmatpush1.msra.mxu0 0.0
    %1506 = vmatprep.subr.mxu0 0.0
    %1507 = vmatpush1.msra.mxu0 0.0
    %1508 = vmatprep.subr.mxu0 0.0
    %1509 = vmatpush1.msra.mxu0 0.0
    %1510 = vmatprep.subr.mxu0 0.0
    %1511 = vmatpush1.msra.mxu0 0.0
    %1512 = vmatprep.subr.mxu0 0.0
    %1513 = vmatpush1.msra.mxu0 0.0
    %1514 = vmatprep.subr.mxu0 0.0
    %1515 = vmatpush1.msra.mxu0 0.0
    %1516 = vmatprep.subr.mxu0 0.0
    %1517 = vmatpush1.msra.mxu0 0.0
    %1518 = vmatprep.subr.mxu0 0.0
    %1519 = vmatpush1.msra.mxu0 0.0
    %1520 = vmatprep.subr.mxu0 0.0
    %1521 = vmatpush1.msra.mxu0 0.0
    %1522 = vmatprep.subr.mxu0 0.0
    %1523 = vmatpush1.msra.mxu0 %v87
    %1524 = vmatprep.subr.mxu0 0.0
    %1525 = vmatpush1.msra.mxu0 %v86
    %1526 = vmatprep.subr.mxu0 0.0
    %1527 = vmatpush1.msra.mxu0 %v85
    %1528 = vmatprep.subr.mxu0 0.0
    %1529 = vmatpush1.msra.mxu0 %v84
    %1530 = vmatprep.subr.mxu0 0.0
    %1531 = vmatpush2.msra.mxu0 0.0
    %1532 = vmatprep.subr.mxu0 0.0
    %1533 = vmatpush2.msra.mxu0 0.0
    %1534 = vmatprep.subr.mxu0 0.0
    %1535 = vmatpush2.msra.mxu0 0.0
    %1536 = vmatprep.subr.mxu0 0.0
    %1537 = vmatpush2.msra.mxu0 0.0
    %1538 = vmatprep.subr.mxu0 0.0
    %1539 = vmatpush2.msra.mxu0 0.0
    %1540 = vmatprep.subr.mxu0 0.0
    %1541 = vmatpush2.msra.mxu0 0.0
    %1542 = vmatprep.subr.mxu0 0.0
    %1543 = vmatpush2.msra.mxu0 0.0
    %1544 = vmatprep.subr.mxu0 0.0
    %1545 = vmatpush2.msra.mxu0 0.0
    %1546 = vmatprep.subr.mxu0 0.0
    %1547 = vmatpush2.msra.mxu0 0.0
    %1548 = vmatprep.subr.mxu0 0.0
    %1549 = vmatpush2.msra.mxu0 0.0
    %1550 = vmatprep.subr.mxu0 0.0
    %1551 = vmatpush2.msra.mxu0 0.0
    %1552 = vmatprep.subr.mxu0 0.0
    %1553 = vmatpush2.msra.mxu0 0.0
    %1554 = vmatprep.subr.mxu0 0.0
    %1555 = vmatpush2.msra.mxu0 0.0
    %1556 = vmatprep.subr.mxu0 0.0
    %1557 = vmatpush2.msra.mxu0 0.0
    %1558 = vmatprep.subr.mxu0 0.0
    %1559 = vmatpush2.msra.mxu0 0.0
    %1560 = vmatprep.subr.mxu0 0.0
    %1561 = vmatpush2.msra.mxu0 0.0
    %1562 = vmatprep.mubr.f32.mxu0 0.0
    %1563 = vmatmul.mubr.f32.gmra.mxu0 %v1496
    %v1564 = vpop.f32.mrf.mxu0
    %v1565 = vadd.f32 0.0, %v1564
    %v1566 = vpop.f32.mrf.mxu0
    %1567 = vdwg.mxu0
    %v1570 = vrot.slane %v1491, 4
    %v1571 = vrot.slane %v1492, 3
    %v1572 = vsel %vm375, %v1571, %v1570
    %1573 = vrot.lane.b32.xlu0 %v1572, 32
    %v1574 = vpop.permute.xlu0 %1573
    %v1575 = vsel %vm182, %v1574, 0
    %1577 = vmatprep.subr.mxu0 0.0
    %1578 = vmatpush1.msra.mxu0 0.0
    %1579 = vmatprep.subr.mxu0 0.0
    %1580 = vmatpush1.msra.mxu0 0.0
    %1581 = vmatprep.subr.mxu0 0.0
    %1582 = vmatpush1.msra.mxu0 0.0
    %1583 = vmatprep.subr.mxu0 0.0
    %1584 = vmatpush1.msra.mxu0 0.0
    %1585 = vmatprep.subr.mxu0 0.0
    %1586 = vmatpush1.msra.mxu0 0.0
    %1587 = vmatprep.subr.mxu0 0.0
    %1588 = vmatpush1.msra.mxu0 0.0
    %1589 = vmatprep.subr.mxu0 0.0
    %1590 = vmatpush1.msra.mxu0 0.0
    %1591 = vmatprep.subr.mxu0 0.0
    %1592 = vmatpush1.msra.mxu0 0.0
    %1593 = vmatprep.subr.mxu0 0.0
    %1594 = vmatpush1.msra.mxu0 0.0
    %1595 = vmatprep.subr.mxu0 0.0
    %1596 = vmatpush1.msra.mxu0 0.0
    %1597 = vmatprep.subr.mxu0 0.0
    %1598 = vmatpush1.msra.mxu0 0.0
    %1599 = vmatprep.subr.mxu0 0.0
    %1600 = vmatpush1.msra.mxu0 0.0
    %1601 = vmatprep.subr.mxu0 0.0
    %1602 = vmatpush1.msra.mxu0 %v79
    %1603 = vmatprep.subr.mxu0 0.0
    %1604 = vmatpush1.msra.mxu0 %v78
    %1605 = vmatprep.subr.mxu0 0.0
    %1606 = vmatpush1.msra.mxu0 %v77
    %1607 = vmatprep.subr.mxu0 0.0
    %1608 = vmatpush1.msra.mxu0 %v76
    %1609 = vmatprep.subr.mxu0 0.0
    %1610 = vmatpush2.msra.mxu0 0.0
    %1611 = vmatprep.subr.mxu0 0.0
    %1612 = vmatpush2.msra.mxu0 0.0
    %1613 = vmatprep.subr.mxu0 0.0
    %1614 = vmatpush2.msra.mxu0 0.0
    %1615 = vmatprep.subr.mxu0 0.0
    %1616 = vmatpush2.msra.mxu0 0.0
    %1617 = vmatprep.subr.mxu0 0.0
    %1618 = vmatpush2.msra.mxu0 0.0
    %1619 = vmatprep.subr.mxu0 0.0
    %1620 = vmatpush2.msra.mxu0 0.0
    %1621 = vmatprep.subr.mxu0 0.0
    %1622 = vmatpush2.msra.mxu0 0.0
    %1623 = vmatprep.subr.mxu0 0.0
    %1624 = vmatpush2.msra.mxu0 0.0
    %1625 = vmatprep.subr.mxu0 0.0
    %1626 = vmatpush2.msra.mxu0 0.0
    %1627 = vmatprep.subr.mxu0 0.0
    %1628 = vmatpush2.msra.mxu0 0.0
    %1629 = vmatprep.subr.mxu0 0.0
    %1630 = vmatpush2.msra.mxu0 0.0
    %1631 = vmatprep.subr.mxu0 0.0
    %1632 = vmatpush2.msra.mxu0 0.0
    %1633 = vmatprep.subr.mxu0 0.0
    %1634 = vmatpush2.msra.mxu0 0.0
    %1635 = vmatprep.subr.mxu0 0.0
    %1636 = vmatpush2.msra.mxu0 0.0
    %1637 = vmatprep.subr.mxu0 0.0
    %1638 = vmatpush2.msra.mxu0 0.0
    %1639 = vmatprep.subr.mxu0 0.0
    %1640 = vmatpush2.msra.mxu0 0.0
    %1641 = vmatprep.mubr.f32.mxu0 0.0
    %1642 = vmatmul.mubr.f32.gmra.mxu0 %v1575
    %v1643 = vpop.f32.mrf.mxu0
    %v1644 = vadd.f32 %v1565, %v1643
    %v1645 = vpop.f32.mrf.mxu0
    %1646 = vdwg.mxu0
    %v1647 = vadd.f32 %v1644, %v455
    %v1648 = vtanh.pop %v1647
    %v1649 = vmul.f32 %v1648, 0.5
    %v1650 = vadd.f32 %v1649, 0.5
    %v1651 = vmul.f32 %v1650, %v1363
    %1653 = vrot.lane.b32.xlu0 %v1648, 64
    %v1654 = vpop.permute.xlu0 %1653
    %v1656 = vmul.f32 %v1650, %v1654
    %1658 = vrot.lane.b32.xlu0 %v1656, 32
    %v1659 = vpop.permute.xlu0 %1658
    %v1661 = vadd.f32 %v1651, %v1659
    %v1662 = vtanh.pop %v1661
    %1664 = vrot.lane.b32.xlu0 %v1662, 64
    %v1665 = vpop.permute.xlu0 %1664
    %v1667 = vmul.f32 %v1650, %v1665
    %1668 = vmatprep.subr.mxu0 0.0
    %1669 = vmatpush1.msra.mxu0 0.0
    %1670 = vmatprep.subr.mxu0 0.0
    %1671 = vmatpush1.msra.mxu0 0.0
    %1672 = vmatprep.subr.mxu0 0.0
    %1673 = vmatpush1.msra.mxu0 0.0
    %1674 = vmatprep.subr.mxu0 0.0
    %1675 = vmatpush1.msra.mxu0 0.0
    %1676 = vmatprep.subr.mxu0 0.0
    %1677 = vmatpush1.msra.mxu0 0.0
    %1678 = vmatprep.subr.mxu0 0.0
    %1679 = vmatpush1.msra.mxu0 0.0
    %1680 = vmatprep.subr.mxu0 0.0
    %1681 = vmatpush1.msra.mxu0 0.0
    %1682 = vmatprep.subr.mxu0 0.0
    %1683 = vmatpush1.msra.mxu0 0.0
    %1684 = vmatprep.subr.mxu0 0.0
    %1685 = vmatpush1.msra.mxu0 0.0
    %1686 = vmatprep.subr.mxu0 0.0
    %1687 = vmatpush1.msra.mxu0 0.0
    %1688 = vmatprep.subr.mxu0 0.0
    %1689 = vmatpush1.msra.mxu0 0.0
    %1690 = vmatprep.subr.mxu0 0.0
    %1691 = vmatpush1.msra.mxu0 0.0
    %1692 = vmatprep.subr.mxu0 0.0
    %1693 = vmatpush1.msra.mxu0 %v83
    %1694 = vmatprep.subr.mxu0 0.0
    %1695 = vmatpush1.msra.mxu0 %v82
    %1696 = vmatprep.subr.mxu0 0.0
    %1697 = vmatpush1.msra.mxu0 %v81
    %1698 = vmatprep.subr.mxu0 0.0
    %1699 = vmatpush1.msra.mxu0 %v80
    %1700 = vmatprep.subr.mxu0 0.0
    %1701 = vmatpush2.msra.mxu0 0.0
    %1702 = vmatprep.subr.mxu0 0.0
    %1703 = vmatpush2.msra.mxu0 0.0
    %1704 = vmatprep.subr.mxu0 0.0
    %1705 = vmatpush2.msra.mxu0 0.0
    %1706 = vmatprep.subr.mxu0 0.0
    %1707 = vmatpush2.msra.mxu0 0.0
    %1708 = vmatprep.subr.mxu0 0.0
    %1709 = vmatpush2.msra.mxu0 0.0
    %1710 = vmatprep.subr.mxu0 0.0
    %1711 = vmatpush2.msra.mxu0 0.0
    %1712 = vmatprep.subr.mxu0 0.0
    %1713 = vmatpush2.msra.mxu0 0.0
    %1714 = vmatprep.subr.mxu0 0.0
    %1715 = vmatpush2.msra.mxu0 0.0
    %1716 = vmatprep.subr.mxu0 0.0
    %1717 = vmatpush2.msra.mxu0 0.0
    %1718 = vmatprep.subr.mxu0 0.0
    %1719 = vmatpush2.msra.mxu0 0.0
    %1720 = vmatprep.subr.mxu0 0.0
    %1721 = vmatpush2.msra.mxu0 0.0
    %1722 = vmatprep.subr.mxu0 0.0
    %1723 = vmatpush2.msra.mxu0 0.0
    %1724 = vmatprep.subr.mxu0 0.0
    %1725 = vmatpush2.msra.mxu0 0.0
    %1726 = vmatprep.subr.mxu0 0.0
    %1727 = vmatpush2.msra.mxu0 0.0
    %1728 = vmatprep.subr.mxu0 0.0
    %1729 = vmatpush2.msra.mxu0 0.0
    %1730 = vmatprep.subr.mxu0 0.0
    %1731 = vmatpush2.msra.mxu0 0.0
    %1732 = vmatprep.mubr.f32.mxu0 0.0
    %1733 = vmatmul.mubr.f32.gmra.mxu0 %v1575
    %v1734 = vpop.f32.mrf.mxu0
    %v1735 = vadd.f32 0.0, %v1734
    %v1736 = vpop.f32.mrf.mxu0
    %1737 = vdwg.mxu0
    %v1739 = vrot.slane %v1735, 3
    %v1740 = vrot.slane %v1735, 4
    %v1743 = vadd.f32 %v174, %v1739
    %v1744 = vadd.f32 %v179, %v1740
    %v1745 = vtanh.pop %v1743
    %v1746 = vtanh.pop %v1744
    %v1747 = vmul.f32 %v1745, 0.5
    %v1748 = vmul.f32 %v1746, 0.5
    %v1749 = vadd.f32 %v1747, 0.5
    %v1750 = vadd.f32 %v1748, 0.5
    %v1753 = vrot.slane %v1479, 7
    %v1754 = vrot.slane %v1480, 7
    %v1757 = vmul.f32 %v1749, %v1753
    %v1758 = vmul.f32 %v1750, %v1754
    %1761 = vrot.lane.b32.xlu0 %v1745, 64
    %v1762 = vpop.permute.xlu0 %1761
    %1763 = vrot.lane.b32.xlu0 %v1746, 64
    %v1764 = vpop.permute.xlu0 %1763
    %v1767 = vmul.f32 %v1749, %v1762
    %v1768 = vmul.f32 %v1750, %v1764
    %1771 = vrot.lane.b32.xlu0 %v1767, 32
    %v1772 = vpop.permute.xlu0 %1771
    %1773 = vrot.lane.b32.xlu0 %v1768, 32
    %v1774 = vpop.permute.xlu0 %1773
    %v1777 = vadd.f32 %v1757, %v1772
    %v1778 = vadd.f32 %v1758, %v1774
    %v1779 = vtanh.pop %v1777
    %v1780 = vtanh.pop %v1778
    %1783 = vrot.lane.b32.xlu0 %v1779, 64
    %v1784 = vpop.permute.xlu0 %1783
    %1785 = vrot.lane.b32.xlu0 %v1780, 64
    %v1786 = vpop.permute.xlu0 %1785
    %v1789 = vmul.f32 %v1749, %v1784
    %v1790 = vmul.f32 %v1750, %v1786
    %1792 = vrot.lane.b32.xlu0 %v1667, 32
    %v1793 = vpop.permute.xlu0 %1792
    %v1794 = vsel %vm182, %v1793, 0
    %1796 = vmatprep.subr.mxu0 0.0
    %1797 = vmatpush1.msra.mxu0 0.0
    %1798 = vmatprep.subr.mxu0 0.0
    %1799 = vmatpush1.msra.mxu0 0.0
    %1800 = vmatprep.subr.mxu0 0.0
    %1801 = vmatpush1.msra.mxu0 0.0
    %1802 = vmatprep.subr.mxu0 0.0
    %1803 = vmatpush1.msra.mxu0 0.0
    %1804 = vmatprep.subr.mxu0 0.0
    %1805 = vmatpush1.msra.mxu0 0.0
    %1806 = vmatprep.subr.mxu0 0.0
    %1807 = vmatpush1.msra.mxu0 0.0
    %1808 = vmatprep.subr.mxu0 0.0
    %1809 = vmatpush1.msra.mxu0 0.0
    %1810 = vmatprep.subr.mxu0 0.0
    %1811 = vmatpush1.msra.mxu0 0.0
    %1812 = vmatprep.subr.mxu0 0.0
    %1813 = vmatpush1.msra.mxu0 0.0
    %1814 = vmatprep.subr.mxu0 0.0
    %1815 = vmatpush1.msra.mxu0 0.0
    %1816 = vmatprep.subr.mxu0 0.0
    %1817 = vmatpush1.msra.mxu0 0.0
    %1818 = vmatprep.subr.mxu0 0.0
    %1819 = vmatpush1.msra.mxu0 0.0
    %1820 = vmatprep.subr.mxu0 0.0
    %1821 = vmatpush1.msra.mxu0 %v87
    %1822 = vmatprep.subr.mxu0 0.0
    %1823 = vmatpush1.msra.mxu0 %v86
    %1824 = vmatprep.subr.mxu0 0.0
    %1825 = vmatpush1.msra.mxu0 %v85
    %1826 = vmatprep.subr.mxu0 0.0
    %1827 = vmatpush1.msra.mxu0 %v84
    %1828 = vmatprep.subr.mxu0 0.0
    %1829 = vmatpush2.msra.mxu0 0.0
    %1830 = vmatprep.subr.mxu0 0.0
    %1831 = vmatpush2.msra.mxu0 0.0
    %1832 = vmatprep.subr.mxu0 0.0
    %1833 = vmatpush2.msra.mxu0 0.0
    %1834 = vmatprep.subr.mxu0 0.0
    %1835 = vmatpush2.msra.mxu0 0.0
    %1836 = vmatprep.subr.mxu0 0.0
    %1837 = vmatpush2.msra.mxu0 0.0
    %1838 = vmatprep.subr.mxu0 0.0
    %1839 = vmatpush2.msra.mxu0 0.0
    %1840 = vmatprep.subr.mxu0 0.0
    %1841 = vmatpush2.msra.mxu0 0.0
    %1842 = vmatprep.subr.mxu0 0.0
    %1843 = vmatpush2.msra.mxu0 0.0
    %1844 = vmatprep.subr.mxu0 0.0
    %1845 = vmatpush2.msra.mxu0 0.0
    %1846 = vmatprep.subr.mxu0 0.0
    %1847 = vmatpush2.msra.mxu0 0.0
    %1848 = vmatprep.subr.mxu0 0.0
    %1849 = vmatpush2.msra.mxu0 0.0
    %1850 = vmatprep.subr.mxu0 0.0
    %1851 = vmatpush2.msra.mxu0 0.0
    %1852 = vmatprep.subr.mxu0 0.0
    %1853 = vmatpush2.msra.mxu0 0.0
    %1854 = vmatprep.subr.mxu0 0.0
    %1855 = vmatpush2.msra.mxu0 0.0
    %1856 = vmatprep.subr.mxu0 0.0
    %1857 = vmatpush2.msra.mxu0 0.0
    %1858 = vmatprep.subr.mxu0 0.0
    %1859 = vmatpush2.msra.mxu0 0.0
    %1860 = vmatprep.mubr.f32.mxu0 0.0
    %1861 = vmatmul.mubr.f32.gmra.mxu0 %v1794
    %v1862 = vpop.f32.mrf.mxu0
    %v1863 = vadd.f32 0.0, %v1862
    %v1864 = vpop.f32.mrf.mxu0
    %1865 = vdwg.mxu0
    %v1868 = vrot.slane %v1789, 5
    %v1869 = vrot.slane %v1790, 4
    %v1870 = vsel %vm375, %v1869, %v1868
    %1871 = vrot.lane.b32.xlu0 %v1870, 32
    %v1872 = vpop.permute.xlu0 %1871
    %v1873 = vsel %vm182, %v1872, 0
    %1875 = vmatprep.subr.mxu0 0.0
    %1876 = vmatpush1.msra.mxu0 0.0
    %1877 = vmatprep.subr.mxu0 0.0
    %1878 = vmatpush1.msra.mxu0 0.0
    %1879 = vmatprep.subr.mxu0 0.0
    %1880 = vmatpush1.msra.mxu0 0.0
    %1881 = vmatprep.subr.mxu0 0.0
    %1882 = vmatpush1.msra.mxu0 0.0
    %1883 = vmatprep.subr.mxu0 0.0
    %1884 = vmatpush1.msra.mxu0 0.0
    %1885 = vmatprep.subr.mxu0 0.0
    %1886 = vmatpush1.msra.mxu0 0.0
    %1887 = vmatprep.subr.mxu0 0.0
    %1888 = vmatpush1.msra.mxu0 0.0
    %1889 = vmatprep.subr.mxu0 0.0
    %1890 = vmatpush1.msra.mxu0 0.0
    %1891 = vmatprep.subr.mxu0 0.0
    %1892 = vmatpush1.msra.mxu0 0.0
    %1893 = vmatprep.subr.mxu0 0.0
    %1894 = vmatpush1.msra.mxu0 0.0
    %1895 = vmatprep.subr.mxu0 0.0
    %1896 = vmatpush1.msra.mxu0 0.0
    %1897 = vmatprep.subr.mxu0 0.0
    %1898 = vmatpush1.msra.mxu0 0.0
    %1899 = vmatprep.subr.mxu0 0.0
    %1900 = vmatpush1.msra.mxu0 %v79
    %1901 = vmatprep.subr.mxu0 0.0
    %1902 = vmatpush1.msra.mxu0 %v78
    %1903 = vmatprep.subr.mxu0 0.0
    %1904 = vmatpush1.msra.mxu0 %v77
    %1905 = vmatprep.subr.mxu0 0.0
    %1906 = vmatpush1.msra.mxu0 %v76
    %1907 = vmatprep.subr.mxu0 0.0
    %1908 = vmatpush2.msra.mxu0 0.0
    %1909 = vmatprep.subr.mxu0 0.0
    %1910 = vmatpush2.msra.mxu0 0.0
    %1911 = vmatprep.subr.mxu0 0.0
    %1912 = vmatpush2.msra.mxu0 0.0
    %1913 = vmatprep.subr.mxu0 0.0
    %1914 = vmatpush2.msra.mxu0 0.0
    %1915 = vmatprep.subr.mxu0 0.0
    %1916 = vmatpush2.msra.mxu0 0.0
    %1917 = vmatprep.subr.mxu0 0.0
    %1918 = vmatpush2.msra.mxu0 0.0
    %1919 = vmatprep.subr.mxu0 0.0
    %1920 = vmatpush2.msra.mxu0 0.0
    %1921 = vmatprep.subr.mxu0 0.0
    %1922 = vmatpush2.msra.mxu0 0.0
    %1923 = vmatprep.subr.mxu0 0.0
    %1924 = vmatpush2.msra.mxu0 0.0
    %1925 = vmatprep.subr.mxu0 0.0
    %1926 = vmatpush2.msra.mxu0 0.0
    %1927 = vmatprep.subr.mxu0 0.0
    %1928 = vmatpush2.msra.mxu0 0.0
    %1929 = vmatprep.subr.mxu0 0.0
    %1930 = vmatpush2.msra.mxu0 0.0
    %1931 = vmatprep.subr.mxu0 0.0
    %1932 = vmatpush2.msra.mxu0 0.0
    %1933 = vmatprep.subr.mxu0 0.0
    %1934 = vmatpush2.msra.mxu0 0.0
    %1935 = vmatprep.subr.mxu0 0.0
    %1936 = vmatpush2.msra.mxu0 0.0
    %1937 = vmatprep.subr.mxu0 0.0
    %1938 = vmatpush2.msra.mxu0 0.0
    %1939 = vmatprep.mubr.f32.mxu0 0.0
    %1940 = vmatmul.mubr.f32.gmra.mxu0 %v1873
    %v1941 = vpop.f32.mrf.mxu0
    %v1942 = vadd.f32 %v1863, %v1941
    %v1943 = vpop.f32.mrf.mxu0
    %1944 = vdwg.mxu0
    %v1945 = vadd.f32 %v1942, %v455
    %v1946 = vtanh.pop %v1945
    %v1947 = vmul.f32 %v1946, 0.5
    %v1948 = vadd.f32 %v1947, 0.5
    %v1949 = vmul.f32 %v1948, %v1661
    %1951 = vrot.lane.b32.xlu0 %v1946, 64
    %v1952 = vpop.permute.xlu0 %1951
    %v1954 = vmul.f32 %v1948, %v1952
    %1956 = vrot.lane.b32.xlu0 %v1954, 32
    %v1957 = vpop.permute.xlu0 %1956
    %v1959 = vadd.f32 %v1949, %v1957
    %v1960 = vtanh.pop %v1959
    %1962 = vrot.lane.b32.xlu0 %v1960, 64
    %v1963 = vpop.permute.xlu0 %1962
    %v1965 = vmul.f32 %v1948, %v1963
    %1966 = vmatprep.subr.mxu0 0.0
    %1967 = vmatpush1.msra.mxu0 0.0
    %1968 = vmatprep.subr.mxu0 0.0
    %1969 = vmatpush1.msra.mxu0 0.0
    %1970 = vmatprep.subr.mxu0 0.0
    %1971 = vmatpush1.msra.mxu0 0.0
    %1972 = vmatprep.subr.mxu0 0.0
    %1973 = vmatpush1.msra.mxu0 0.0
    %1974 = vmatprep.subr.mxu0 0.0
    %1975 = vmatpush1.msra.mxu0 0.0
    %1976 = vmatprep.subr.mxu0 0.0
    %1977 = vmatpush1.msra.mxu0 0.0
    %1978 = vmatprep.subr.mxu0 0.0
    %1979 = vmatpush1.msra.mxu0 0.0
    %1980 = vmatprep.subr.mxu0 0.0
    %1981 = vmatpush1.msra.mxu0 0.0
    %1982 = vmatprep.subr.mxu0 0.0
    %1983 = vmatpush1.msra.mxu0 0.0
    %1984 = vmatprep.subr.mxu0 0.0
    %1985 = vmatpush1.msra.mxu0 0.0
    %1986 = vmatprep.subr.mxu0 0.0
    %1987 = vmatpush1.msra.mxu0 0.0
    %1988 = vmatprep.subr.mxu0 0.0
    %1989 = vmatpush1.msra.mxu0 0.0
    %1990 = vmatprep.subr.mxu0 0.0
    %1991 = vmatpush1.msra.mxu0 %v83
    %1992 = vmatprep.subr.mxu0 0.0
    %1993 = vmatpush1.msra.mxu0 %v82
    %1994 = vmatprep.subr.mxu0 0.0
    %1995 = vmatpush1.msra.mxu0 %v81
    %1996 = vmatprep.subr.mxu0 0.0
    %1997 = vmatpush1.msra.mxu0 %v80
    %1998 = vmatprep.subr.mxu0 0.0
    %1999 = vmatpush2.msra.mxu0 0.0
    %2000 = vmatprep.subr.mxu0 0.0
    %2001 = vmatpush2.msra.mxu0 0.0
    %2002 = vmatprep.subr.mxu0 0.0
    %2003 = vmatpush2.msra.mxu0 0.0
    %2004 = vmatprep.subr.mxu0 0.0
    %2005 = vmatpush2.msra.mxu0 0.0
    %2006 = vmatprep.subr.mxu0 0.0
    %2007 = vmatpush2.msra.mxu0 0.0
    %2008 = vmatprep.subr.mxu0 0.0
    %2009 = vmatpush2.msra.mxu0 0.0
    %2010 = vmatprep.subr.mxu0 0.0
    %2011 = vmatpush2.msra.mxu0 0.0
    %2012 = vmatprep.subr.mxu0 0.0
    %2013 = vmatpush2.msra.mxu0 0.0
    %2014 = vmatprep.subr.mxu0 0.0
    %2015 = vmatpush2.msra.mxu0 0.0
    %2016 = vmatprep.subr.mxu0 0.0
    %2017 = vmatpush2.msra.mxu0 0.0
    %2018 = vmatprep.subr.mxu0 0.0
    %2019 = vmatpush2.msra.mxu0 0.0
    %2020 = vmatprep.subr.mxu0 0.0
    %2021 = vmatpush2.msra.mxu0 0.0
    %2022 = vmatprep.subr.mxu0 0.0
    %2023 = vmatpush2.msra.mxu0 0.0
    %2024 = vmatprep.subr.mxu0 0.0
    %2025 = vmatpush2.msra.mxu0 0.0
    %2026 = vmatprep.subr.mxu0 0.0
    %2027 = vmatpush2.msra.mxu0 0.0
    %2028 = vmatprep.subr.mxu0 0.0
    %2029 = vmatpush2.msra.mxu0 0.0
    %2030 = vmatprep.mubr.f32.mxu0 0.0
    %2031 = vmatmul.mubr.f32.gmra.mxu0 %v1873
    %v2032 = vpop.f32.mrf.mxu0
    %v2033 = vadd.f32 0.0, %v2032
    %v2034 = vpop.f32.mrf.mxu0
    %2035 = vdwg.mxu0
    %v2037 = vrot.slane %v2033, 2
    %v2038 = vrot.slane %v2033, 3
    %v2041 = vadd.f32 %v174, %v2037
    %v2042 = vadd.f32 %v179, %v2038
    %v2043 = vtanh.pop %v2041
    %v2044 = vtanh.pop %v2042
    %v2045 = vmul.f32 %v2043, 0.5
    %v2046 = vmul.f32 %v2044, 0.5
    %v2047 = vadd.f32 %v2045, 0.5
    %v2048 = vadd.f32 %v2046, 0.5
    %v2051 = vrot.slane %v1777, 7
    %v2052 = vrot.slane %v1778, 7
    %v2055 = vmul.f32 %v2047, %v2051
    %v2056 = vmul.f32 %v2048, %v2052
    %2059 = vrot.lane.b32.xlu0 %v2043, 64
    %v2060 = vpop.permute.xlu0 %2059
    %2061 = vrot.lane.b32.xlu0 %v2044, 64
    %v2062 = vpop.permute.xlu0 %2061
    %v2065 = vmul.f32 %v2047, %v2060
    %v2066 = vmul.f32 %v2048, %v2062
    %2069 = vrot.lane.b32.xlu0 %v2065, 32
    %v2070 = vpop.permute.xlu0 %2069
    %2071 = vrot.lane.b32.xlu0 %v2066, 32
    %v2072 = vpop.permute.xlu0 %2071
    %v2075 = vadd.f32 %v2055, %v2070
    %v2076 = vadd.f32 %v2056, %v2072
    %v2077 = vtanh.pop %v2075
    %v2078 = vtanh.pop %v2076
    %2081 = vrot.lane.b32.xlu0 %v2077, 64
    %v2082 = vpop.permute.xlu0 %2081
    %2083 = vrot.lane.b32.xlu0 %v2078, 64
    %v2084 = vpop.permute.xlu0 %2083
    %v2087 = vmul.f32 %v2047, %v2082
    %v2088 = vmul.f32 %v2048, %v2084
    %2090 = vrot.lane.b32.xlu0 %v1965, 32
    %v2091 = vpop.permute.xlu0 %2090
    %v2092 = vsel %vm182, %v2091, 0
    %2094 = vmatprep.subr.mxu0 0.0
    %2095 = vmatpush1.msra.mxu0 0.0
    %2096 = vmatprep.subr.mxu0 0.0
    %2097 = vmatpush1.msra.mxu0 0.0
    %2098 = vmatprep.subr.mxu0 0.0
    %2099 = vmatpush1.msra.mxu0 0.0
    %2100 = vmatprep.subr.mxu0 0.0
    %2101 = vmatpush1.msra.mxu0 0.0
    %2102 = vmatprep.subr.mxu0 0.0
    %2103 = vmatpush1.msra.mxu0 0.0
    %2104 = vmatprep.subr.mxu0 0.0
    %2105 = vmatpush1.msra.mxu0 0.0
    %2106 = vmatprep.subr.mxu0 0.0
    %2107 = vmatpush1.msra.mxu0 0.0
    %2108 = vmatprep.subr.mxu0 0.0
    %2109 = vmatpush1.msra.mxu0 0.0
    %2110 = vmatprep.subr.mxu0 0.0
    %2111 = vmatpush1.msra.mxu0 0.0
    %2112 = vmatprep.subr.mxu0 0.0
    %2113 = vmatpush1.msra.mxu0 0.0
    %2114 = vmatprep.subr.mxu0 0.0
    %2115 = vmatpush1.msra.mxu0 0.0
    %2116 = vmatprep.subr.mxu0 0.0
    %2117 = vmatpush1.msra.mxu0 0.0
    %2118 = vmatprep.subr.mxu0 0.0
    %2119 = vmatpush1.msra.mxu0 %v87
    %2120 = vmatprep.subr.mxu0 0.0
    %2121 = vmatpush1.msra.mxu0 %v86
    %2122 = vmatprep.subr.mxu0 0.0
    %2123 = vmatpush1.msra.mxu0 %v85
    %2124 = vmatprep.subr.mxu0 0.0
    %2125 = vmatpush1.msra.mxu0 %v84
    %2126 = vmatprep.subr.mxu0 0.0
    %2127 = vmatpush2.msra.mxu0 0.0
    %2128 = vmatprep.subr.mxu0 0.0
    %2129 = vmatpush2.msra.mxu0 0.0
    %2130 = vmatprep.subr.mxu0 0.0
    %2131 = vmatpush2.msra.mxu0 0.0
    %2132 = vmatprep.subr.mxu0 0.0
    %2133 = vmatpush2.msra.mxu0 0.0
    %2134 = vmatprep.subr.mxu0 0.0
    %2135 = vmatpush2.msra.mxu0 0.0
    %2136 = vmatprep.subr.mxu0 0.0
    %2137 = vmatpush2.msra.mxu0 0.0
    %2138 = vmatprep.subr.mxu0 0.0
    %2139 = vmatpush2.msra.mxu0 0.0
    %2140 = vmatprep.subr.mxu0 0.0
    %2141 = vmatpush2.msra.mxu0 0.0
    %2142 = vmatprep.subr.mxu0 0.0
    %2143 = vmatpush2.msra.mxu0 0.0
    %2144 = vmatprep.subr.mxu0 0.0
    %2145 = vmatpush2.msra.mxu0 0.0
    %2146 = vmatprep.subr.mxu0 0.0
    %2147 = vmatpush2.msra.mxu0 0.0
    %2148 = vmatprep.subr.mxu0 0.0
    %2149 = vmatpush2.msra.mxu0 0.0
    %2150 = vmatprep.subr.mxu0 0.0
    %2151 = vmatpush2.msra.mxu0 0.0
    %2152 = vmatprep.subr.mxu0 0.0
    %2153 = vmatpush2.msra.mxu0 0.0
    %2154 = vmatprep.subr.mxu0 0.0
    %2155 = vmatpush2.msra.mxu0 0.0
    %2156 = vmatprep.subr.mxu0 0.0
    %2157 = vmatpush2.msra.mxu0 0.0
    %2158 = vmatprep.mubr.f32.mxu0 0.0
    %2159 = vmatmul.mubr.f32.gmra.mxu0 %v2092
    %v2160 = vpop.f32.mrf.mxu0
    %v2161 = vadd.f32 0.0, %v2160
    %v2162 = vpop.f32.mrf.mxu0
    %2163 = vdwg.mxu0
    %v2166 = vrot.slane %v2087, 6
    %v2167 = vrot.slane %v2088, 5
    %v2168 = vsel %vm375, %v2167, %v2166
    %2169 = vrot.lane.b32.xlu0 %v2168, 32
    %v2170 = vpop.permute.xlu0 %2169
    %v2171 = vsel %vm182, %v2170, 0
    %2173 = vmatprep.subr.mxu0 0.0
    %2174 = vmatpush1.msra.mxu0 0.0
    %2175 = vmatprep.subr.mxu0 0.0
    %2176 = vmatpush1.msra.mxu0 0.0
    %2177 = vmatprep.subr.mxu0 0.0
    %2178 = vmatpush1.msra.mxu0 0.0
    %2179 = vmatprep.subr.mxu0 0.0
    %2180 = vmatpush1.msra.mxu0 0.0
    %2181 = vmatprep.subr.mxu0 0.0
    %2182 = vmatpush1.msra.mxu0 0.0
    %2183 = vmatprep.subr.mxu0 0.0
    %2184 = vmatpush1.msra.mxu0 0.0
    %2185 = vmatprep.subr.mxu0 0.0
    %2186 = vmatpush1.msra.mxu0 0.0
    %2187 = vmatprep.subr.mxu0 0.0
    %2188 = vmatpush1.msra.mxu0 0.0
    %2189 = vmatprep.subr.mxu0 0.0
    %2190 = vmatpush1.msra.mxu0 0.0
    %2191 = vmatprep.subr.mxu0 0.0
    %2192 = vmatpush1.msra.mxu0 0.0
    %2193 = vmatprep.subr.mxu0 0.0
    %2194 = vmatpush1.msra.mxu0 0.0
    %2195 = vmatprep.subr.mxu0 0.0
    %2196 = vmatpush1.msra.mxu0 0.0
    %2197 = vmatprep.subr.mxu0 0.0
    %2198 = vmatpush1.msra.mxu0 %v79
    %2199 = vmatprep.subr.mxu0 0.0
    %2200 = vmatpush1.msra.mxu0 %v78
    %2201 = vmatprep.subr.mxu0 0.0
    %2202 = vmatpush1.msra.mxu0 %v77
    %2203 = vmatprep.subr.mxu0 0.0
    %2204 = vmatpush1.msra.mxu0 %v76
    %2205 = vmatprep.subr.mxu0 0.0
    %2206 = vmatpush2.msra.mxu0 0.0
    %2207 = vmatprep.subr.mxu0 0.0
    %2208 = vmatpush2.msra.mxu0 0.0
    %2209 = vmatprep.subr.mxu0 0.0
    %2210 = vmatpush2.msra.mxu0 0.0
    %2211 = vmatprep.subr.mxu0 0.0
    %2212 = vmatpush2.msra.mxu0 0.0
    %2213 = vmatprep.subr.mxu0 0.0
    %2214 = vmatpush2.msra.mxu0 0.0
    %2215 = vmatprep.subr.mxu0 0.0
    %2216 = vmatpush2.msra.mxu0 0.0
    %2217 = vmatprep.subr.mxu0 0.0
    %2218 = vmatpush2.msra.mxu0 0.0
    %2219 = vmatprep.subr.mxu0 0.0
    %2220 = vmatpush2.msra.mxu0 0.0
    %2221 = vmatprep.subr.mxu0 0.0
    %2222 = vmatpush2.msra.mxu0 0.0
    %2223 = vmatprep.subr.mxu0 0.0
    %2224 = vmatpush2.msra.mxu0 0.0
    %2225 = vmatprep.subr.mxu0 0.0
    %2226 = vmatpush2.msra.mxu0 0.0
    %2227 = vmatprep.subr.mxu0 0.0
    %2228 = vmatpush2.msra.mxu0 0.0
    %2229 = vmatprep.subr.mxu0 0.0
    %2230 = vmatpush2.msra.mxu0 0.0
    %2231 = vmatprep.subr.mxu0 0.0
    %2232 = vmatpush2.msra.mxu0 0.0
    %2233 = vmatprep.subr.mxu0 0.0
    %2234 = vmatpush2.msra.mxu0 0.0
    %2235 = vmatprep.subr.mxu0 0.0
    %2236 = vmatpush2.msra.mxu0 0.0
    %2237 = vmatprep.mubr.f32.mxu0 0.0
    %2238 = vmatmul.mubr.f32.gmra.mxu0 %v2171
    %v2239 = vpop.f32.mrf.mxu0
    %v2240 = vadd.f32 %v2161, %v2239
    %v2241 = vpop.f32.mrf.mxu0
    %2242 = vdwg.mxu0
    %v2243 = vadd.f32 %v2240, %v455
    %v2244 = vtanh.pop %v2243
    %v2245 = vmul.f32 %v2244, 0.5
    %v2246 = vadd.f32 %v2245, 0.5
    %v2247 = vmul.f32 %v2246, %v1959
    %2249 = vrot.lane.b32.xlu0 %v2244, 64
    %v2250 = vpop.permute.xlu0 %2249
    %v2252 = vmul.f32 %v2246, %v2250
    %2254 = vrot.lane.b32.xlu0 %v2252, 32
    %v2255 = vpop.permute.xlu0 %2254
    %v2257 = vadd.f32 %v2247, %v2255
    %v2258 = vtanh.pop %v2257
    %2260 = vrot.lane.b32.xlu0 %v2258, 64
    %v2261 = vpop.permute.xlu0 %2260
    %v2263 = vmul.f32 %v2246, %v2261
    %2264 = vmatprep.subr.mxu0 0.0
    %2265 = vmatpush1.msra.mxu0 0.0
    %2266 = vmatprep.subr.mxu0 0.0
    %2267 = vmatpush1.msra.mxu0 0.0
    %2268 = vmatprep.subr.mxu0 0.0
    %2269 = vmatpush1.msra.mxu0 0.0
    %2270 = vmatprep.subr.mxu0 0.0
    %2271 = vmatpush1.msra.mxu0 0.0
    %2272 = vmatprep.subr.mxu0 0.0
    %2273 = vmatpush1.msra.mxu0 0.0
    %2274 = vmatprep.subr.mxu0 0.0
    %2275 = vmatpush1.msra.mxu0 0.0
    %2276 = vmatprep.subr.mxu0 0.0
    %2277 = vmatpush1.msra.mxu0 0.0
    %2278 = vmatprep.subr.mxu0 0.0
    %2279 = vmatpush1.msra.mxu0 0.0
    %2280 = vmatprep.subr.mxu0 0.0
    %2281 = vmatpush1.msra.mxu0 0.0
    %2282 = vmatprep.subr.mxu0 0.0
    %2283 = vmatpush1.msra.mxu0 0.0
    %2284 = vmatprep.subr.mxu0 0.0
    %2285 = vmatpush1.msra.mxu0 0.0
    %2286 = vmatprep.subr.mxu0 0.0
    %2287 = vmatpush1.msra.mxu0 0.0
    %2288 = vmatprep.subr.mxu0 0.0
    %2289 = vmatpush1.msra.mxu0 %v83
    %2290 = vmatprep.subr.mxu0 0.0
    %2291 = vmatpush1.msra.mxu0 %v82
    %2292 = vmatprep.subr.mxu0 0.0
    %2293 = vmatpush1.msra.mxu0 %v81
    %2294 = vmatprep.subr.mxu0 0.0
    %2295 = vmatpush1.msra.mxu0 %v80
    %2296 = vmatprep.subr.mxu0 0.0
    %2297 = vmatpush2.msra.mxu0 0.0
    %2298 = vmatprep.subr.mxu0 0.0
    %2299 = vmatpush2.msra.mxu0 0.0
    %2300 = vmatprep.subr.mxu0 0.0
    %2301 = vmatpush2.msra.mxu0 0.0
    %2302 = vmatprep.subr.mxu0 0.0
    %2303 = vmatpush2.msra.mxu0 0.0
    %2304 = vmatprep.subr.mxu0 0.0
    %2305 = vmatpush2.msra.mxu0 0.0
    %2306 = vmatprep.subr.mxu0 0.0
    %2307 = vmatpush2.msra.mxu0 0.0
    %2308 = vmatprep.subr.mxu0 0.0
    %2309 = vmatpush2.msra.mxu0 0.0
    %2310 = vmatprep.subr.mxu0 0.0
    %2311 = vmatpush2.msra.mxu0 0.0
    %2312 = vmatprep.subr.mxu0 0.0
    %2313 = vmatpush2.msra.mxu0 0.0
    %2314 = vmatprep.subr.mxu0 0.0
    %2315 = vmatpush2.msra.mxu0 0.0
    %2316 = vmatprep.subr.mxu0 0.0
    %2317 = vmatpush2.msra.mxu0 0.0
    %2318 = vmatprep.subr.mxu0 0.0
    %2319 = vmatpush2.msra.mxu0 0.0
    %2320 = vmatprep.subr.mxu0 0.0
    %2321 = vmatpush2.msra.mxu0 0.0
    %2322 = vmatprep.subr.mxu0 0.0
    %2323 = vmatpush2.msra.mxu0 0.0
    %2324 = vmatprep.subr.mxu0 0.0
    %2325 = vmatpush2.msra.mxu0 0.0
    %2326 = vmatprep.subr.mxu0 0.0
    %2327 = vmatpush2.msra.mxu0 0.0
    %2328 = vmatprep.mubr.f32.mxu0 0.0
    %2329 = vmatmul.mubr.f32.gmra.mxu0 %v2171
    %v2330 = vpop.f32.mrf.mxu0
    %v2331 = vadd.f32 0.0, %v2330
    %v2332 = vpop.f32.mrf.mxu0
    %2333 = vdwg.mxu0
    %v2335 = vrot.slane %v2331, 1
    %v2336 = vrot.slane %v2331, 2
    %v2339 = vadd.f32 %v174, %v2335
    %v2340 = vadd.f32 %v179, %v2336
    %v2341 = vtanh.pop %v2339
    %v2342 = vtanh.pop %v2340
    %v2343 = vmul.f32 %v2341, 0.5
    %v2344 = vmul.f32 %v2342, 0.5
    %v2345 = vadd.f32 %v2343, 0.5
    %v2346 = vadd.f32 %v2344, 0.5
    %v2349 = vrot.slane %v2075, 7
    %v2350 = vrot.slane %v2076, 7
    %v2353 = vmul.f32 %v2345, %v2349
    %v2354 = vmul.f32 %v2346, %v2350
    %2357 = vrot.lane.b32.xlu0 %v2341, 64
    %v2358 = vpop.permute.xlu0 %2357
    %2359 = vrot.lane.b32.xlu0 %v2342, 64
    %v2360 = vpop.permute.xlu0 %2359
    %v2363 = vmul.f32 %v2345, %v2358
    %v2364 = vmul.f32 %v2346, %v2360
    %2367 = vrot.lane.b32.xlu0 %v2363, 32
    %v2368 = vpop.permute.xlu0 %2367
    %2369 = vrot.lane.b32.xlu0 %v2364, 32
    %v2370 = vpop.permute.xlu0 %2369
    %v2373 = vadd.f32 %v2353, %v2368
    %v2374 = vadd.f32 %v2354, %v2370
    %v2375 = vtanh.pop %v2373
    %v2376 = vtanh.pop %v2374
    %2379 = vrot.lane.b32.xlu0 %v2375, 64
    %v2380 = vpop.permute.xlu0 %2379
    %2381 = vrot.lane.b32.xlu0 %v2376, 64
    %v2382 = vpop.permute.xlu0 %2381
    %v2385 = vmul.f32 %v2345, %v2380
    %v2386 = vmul.f32 %v2346, %v2382
    %2388 = vrot.lane.b32.xlu0 %v2263, 32
    %v2389 = vpop.permute.xlu0 %2388
    %v2390 = vsel %vm182, %v2389, 0
    %2392 = vmatprep.subr.mxu0 0.0
    %2393 = vmatpush1.msra.mxu0 0.0
    %2394 = vmatprep.subr.mxu0 0.0
    %2395 = vmatpush1.msra.mxu0 0.0
    %2396 = vmatprep.subr.mxu0 0.0
    %2397 = vmatpush1.msra.mxu0 0.0
    %2398 = vmatprep.subr.mxu0 0.0
    %2399 = vmatpush1.msra.mxu0 0.0
    %2400 = vmatprep.subr.mxu0 0.0
    %2401 = vmatpush1.msra.mxu0 0.0
    %2402 = vmatprep.subr.mxu0 0.0
    %2403 = vmatpush1.msra.mxu0 0.0
    %2404 = vmatprep.subr.mxu0 0.0
    %2405 = vmatpush1.msra.mxu0 0.0
    %2406 = vmatprep.subr.mxu0 0.0
    %2407 = vmatpush1.msra.mxu0 0.0
    %2408 = vmatprep.subr.mxu0 0.0
    %2409 = vmatpush1.msra.mxu0 0.0
    %2410 = vmatprep.subr.mxu0 0.0
    %2411 = vmatpush1.msra.mxu0 0.0
    %2412 = vmatprep.subr.mxu0 0.0
    %2413 = vmatpush1.msra.mxu0 0.0
    %2414 = vmatprep.subr.mxu0 0.0
    %2415 = vmatpush1.msra.mxu0 0.0
    %2416 = vmatprep.subr.mxu0 0.0
    %2417 = vmatpush1.msra.mxu0 %v87
    %2418 = vmatprep.subr.mxu0 0.0
    %2419 = vmatpush1.msra.mxu0 %v86
    %2420 = vmatprep.subr.mxu0 0.0
    %2421 = vmatpush1.msra.mxu0 %v85
    %2422 = vmatprep.subr.mxu0 0.0
    %2423 = vmatpush1.msra.mxu0 %v84
    %2424 = vmatprep.subr.mxu0 0.0
    %2425 = vmatpush2.msra.mxu0 0.0
    %2426 = vmatprep.subr.mxu0 0.0
    %2427 = vmatpush2.msra.mxu0 0.0
    %2428 = vmatprep.subr.mxu0 0.0
    %2429 = vmatpush2.msra.mxu0 0.0
    %2430 = vmatprep.subr.mxu0 0.0
    %2431 = vmatpush2.msra.mxu0 0.0
    %2432 = vmatprep.subr.mxu0 0.0
    %2433 = vmatpush2.msra.mxu0 0.0
    %2434 = vmatprep.subr.mxu0 0.0
    %2435 = vmatpush2.msra.mxu0 0.0
    %2436 = vmatprep.subr.mxu0 0.0
    %2437 = vmatpush2.msra.mxu0 0.0
    %2438 = vmatprep.subr.mxu0 0.0
    %2439 = vmatpush2.msra.mxu0 0.0
    %2440 = vmatprep.subr.mxu0 0.0
    %2441 = vmatpush2.msra.mxu0 0.0
    %2442 = vmatprep.subr.mxu0 0.0
    %2443 = vmatpush2.msra.mxu0 0.0
    %2444 = vmatprep.subr.mxu0 0.0
    %2445 = vmatpush2.msra.mxu0 0.0
    %2446 = vmatprep.subr.mxu0 0.0
    %2447 = vmatpush2.msra.mxu0 0.0
    %2448 = vmatprep.subr.mxu0 0.0
    %2449 = vmatpush2.msra.mxu0 0.0
    %2450 = vmatprep.subr.mxu0 0.0
    %2451 = vmatpush2.msra.mxu0 0.0
    %2452 = vmatprep.subr.mxu0 0.0
    %2453 = vmatpush2.msra.mxu0 0.0
    %2454 = vmatprep.subr.mxu0 0.0
    %2455 = vmatpush2.msra.mxu0 0.0
    %2456 = vmatprep.mubr.f32.mxu0 0.0
    %2457 = vmatmul.mubr.f32.gmra.mxu0 %v2390
    %v2458 = vpop.f32.mrf.mxu0
    %v2459 = vadd.f32 0.0, %v2458
    %v2460 = vpop.f32.mrf.mxu0
    %2461 = vdwg.mxu0
    %v2464 = vrot.slane %v2385, 7
    %v2465 = vrot.slane %v2386, 6
    %v2466 = vsel %vm375, %v2465, %v2464
    %2467 = vrot.lane.b32.xlu0 %v2466, 32
    %v2468 = vpop.permute.xlu0 %2467
    %v2469 = vsel %vm182, %v2468, 0
    %2471 = vmatprep.subr.mxu0 0.0
    %2472 = vmatpush1.msra.mxu0 0.0
    %2473 = vmatprep.subr.mxu0 0.0
    %2474 = vmatpush1.msra.mxu0 0.0
    %2475 = vmatprep.subr.mxu0 0.0
    %2476 = vmatpush1.msra.mxu0 0.0
    %2477 = vmatprep.subr.mxu0 0.0
    %2478 = vmatpush1.msra.mxu0 0.0
    %2479 = vmatprep.subr.mxu0 0.0
    %2480 = vmatpush1.msra.mxu0 0.0
    %2481 = vmatprep.subr.mxu0 0.0
    %2482 = vmatpush1.msra.mxu0 0.0
    %2483 = vmatprep.subr.mxu0 0.0
    %2484 = vmatpush1.msra.mxu0 0.0
    %2485 = vmatprep.subr.mxu0 0.0
    %2486 = vmatpush1.msra.mxu0 0.0
    %2487 = vmatprep.subr.mxu0 0.0
    %2488 = vmatpush1.msra.mxu0 0.0
    %2489 = vmatprep.subr.mxu0 0.0
    %2490 = vmatpush1.msra.mxu0 0.0
    %2491 = vmatprep.subr.mxu0 0.0
    %2492 = vmatpush1.msra.mxu0 0.0
    %2493 = vmatprep.subr.mxu0 0.0
    %2494 = vmatpush1.msra.mxu0 0.0
    %2495 = vmatprep.subr.mxu0 0.0
    %2496 = vmatpush1.msra.mxu0 %v79
    %2497 = vmatprep.subr.mxu0 0.0
    %2498 = vmatpush1.msra.mxu0 %v78
    %2499 = vmatprep.subr.mxu0 0.0
    %2500 = vmatpush1.msra.mxu0 %v77
    %2501 = vmatprep.subr.mxu0 0.0
    %2502 = vmatpush1.msra.mxu0 %v76
    %2503 = vmatprep.subr.mxu0 0.0
    %2504 = vmatpush2.msra.mxu0 0.0
    %2505 = vmatprep.subr.mxu0 0.0
    %2506 = vmatpush2.msra.mxu0 0.0
    %2507 = vmatprep.subr.mxu0 0.0
    %2508 = vmatpush2.msra.mxu0 0.0
    %2509 = vmatprep.subr.mxu0 0.0
    %2510 = vmatpush2.msra.mxu0 0.0
    %2511 = vmatprep.subr.mxu0 0.0
    %2512 = vmatpush2.msra.mxu0 0.0
    %2513 = vmatprep.subr.mxu0 0.0
    %2514 = vmatpush2.msra.mxu0 0.0
    %2515 = vmatprep.subr.mxu0 0.0
    %2516 = vmatpush2.msra.mxu0 0.0
    %2517 = vmatprep.subr.mxu0 0.0
    %2518 = vmatpush2.msra.mxu0 0.0
    %2519 = vmatprep.subr.mxu0 0.0
    %2520 = vmatpush2.msra.mxu0 0.0
    %2521 = vmatprep.subr.mxu0 0.0
    %2522 = vmatpush2.msra.mxu0 0.0
    %2523 = vmatprep.subr.mxu0 0.0
    %2524 = vmatpush2.msra.mxu0 0.0
    %2525 = vmatprep.subr.mxu0 0.0
    %2526 = vmatpush2.msra.mxu0 0.0
    %2527 = vmatprep.subr.mxu0 0.0
    %2528 = vmatpush2.msra.mxu0 0.0
    %2529 = vmatprep.subr.mxu0 0.0
    %2530 = vmatpush2.msra.mxu0 0.0
    %2531 = vmatprep.subr.mxu0 0.0
    %2532 = vmatpush2.msra.mxu0 0.0
    %2533 = vmatprep.subr.mxu0 0.0
    %2534 = vmatpush2.msra.mxu0 0.0
    %2535 = vmatprep.mubr.f32.mxu0 0.0
    %2536 = vmatmul.mubr.f32.gmra.mxu0 %v2469
    %v2537 = vpop.f32.mrf.mxu0
    %v2538 = vadd.f32 %v2459, %v2537
    %v2539 = vpop.f32.mrf.mxu0
    %2540 = vdwg.mxu0
    %v2541 = vadd.f32 %v2538, %v455
    %v2542 = vtanh.pop %v2541
    %v2543 = vmul.f32 %v2542, 0.5
    %v2544 = vadd.f32 %v2543, 0.5
    %v2545 = vmul.f32 %v2544, %v2257
    %2547 = vrot.lane.b32.xlu0 %v2542, 64
    %v2548 = vpop.permute.xlu0 %2547
    %v2550 = vmul.f32 %v2544, %v2548
    %2552 = vrot.lane.b32.xlu0 %v2550, 32
    %v2553 = vpop.permute.xlu0 %2552
    %v2555 = vadd.f32 %v2545, %v2553
    %v2556 = vtanh.pop %v2555
    %2558 = vrot.lane.b32.xlu0 %v2556, 64
    %v2559 = vpop.permute.xlu0 %2558
    %v2561 = vmul.f32 %v2544, %v2559
    %v2562 = vmax.f32 %v2561, 0.0
    %v2563 = vld [vmem:[%s7] sm:$0x1]
    %v2564 = vld [vmem:[#allocation2] sm:$0x1]
    %v2566 = vlaneseq
    %v2567 = vshrl.u32 %v2566, 7
    %v2568 = vsub.s32 0, %v2567
    %v2569 = vrot.slane %v2563, %v2568
    %2570 = vrot.lane.b32.xlu0 %v2569, 96
    %v2571 = vpop.permute.xlu0 %2570
    %v2573 = vmul.f32 %v2562, %v2571
    %2575 = vrot.lane.b32.xlu0 %v2573, 32
    %v2576 = vpop.permute.xlu0 %2575
    %vm2578 = vcmask 254976
    %v2579 = vsel %vm2578, %v2576, 0.0
    %2580 = vadd.xlane.f32.xlu0 %v2579
    %v2581 = vpop.xlane.xlu0 %2580
    %v2583 = vlaneseq
    %v2584 = vshrl.u32 %v2583, 7
    %v2585 = vsub.s32 0, %v2584
    %v2586 = vrot.slane %v2564, %v2585
    %v2588 = vadd.f32 %v2581, %v2586
    %vm2589 = vcmask 1024
    %2590 = vst.msk [vmem:[%s9] sm:$0x3] %vm2589, %v2588
    // Predicated region
    $region50: #{tpu_custom_call.1} parent=1 // pred_check
      _
    $region51: #{tpu_custom_call.1} parent=1 // pred_check_branch
      %2592 = sbr.rel (0) target = $region53
    $region52: #{tpu_custom_call.1} parent=1 // pred_region
      _
    $region53: #{tpu_custom_call.1} parent=1 // pred_fallthru
      _
    // Predicated region
    $region54: #{tpu_custom_call.1} parent=1 // pred_check
      _
    $region55: #{tpu_custom_call.1} parent=1 // pred_check_branch
      %2594 = sbr.rel (0) target = $region57
    $region56: #{tpu_custom_call.1} parent=1 // pred_region
      _
    $region57: #{tpu_custom_call.1} parent=1 // pred_fallthru
      _
    %2595 = vsyncpa [#allocation4], 1
    %2596 = vsyncpa [#allocation6], 1

</llo_original>
